<compile_context>
chip_gen: v7x
topology: tpu7x:2x2x1
jax: 0.10.0
libtpu: 0.0.40
codegen_flags: <defaults>
</compile_context>

<pallas_src>
import jax
import jax.numpy as jnp
from jax import lax
from jax.experimental import pallas as pl
from jax.experimental.pallas import tpu as pltpu

# ---- small synthetic CLIP text-model config ---------------------------------
VOCAB = 64        # vocab size (synthetic)
MAX_LEN = 8       # stand-in for max_length=77
D = 128           # hidden size (lane-dense)
H = 4             # attention heads
HD = D // H       # head dim
FF = 4 * D        # MLP intermediate size
LAYERS = 2        # transformer layers
B = 2             # batch
EPS = 1e-5
W_DTYPE = jnp.bfloat16   # matmul-weight dtype (f32 accumulation on the MXU)

# rows of the packed per-layer small-parameter slab (LAYERS, 16, D)
(_ROW_LN1_G, _ROW_LN1_B, _ROW_LN2_G, _ROW_LN2_B, _ROW_BO, _ROW_B2,
 _ROW_BQ, _ROW_BK, _ROW_BV, _ROW_LNF_G, _ROW_LNF_B) = range(11)
_PVEC_ROWS = 16


# ---- in-kernel helpers (all f32 elementwise) ---------------------------------
def _layer_norm(x, gamma, beta):
    mu = jnp.mean(x, axis=-1, keepdims=True)
    var = jnp.mean((x - mu) ** 2, axis=-1, keepdims=True)
    return (x - mu) * lax.rsqrt(var + EPS) * gamma + beta


def _quick_gelu(x):
    # CLIP uses quick_gelu: x * sigmoid(1.702 * x)
    return x * jax.nn.sigmoid(1.702 * x)


# ---- fused Pallas kernel: all transformer layers + final LN ------------------
# grid = (LAYERS,).  The output block (B, S, D) is resident in VMEM across the
# (only) layer axis and acts as the running activation.
def clip_stack_kernel(x_ref, bias_ref, pvec_ref, b1_ref,
                      wqkv_ref, wo_ref, w1_ref, w2_ref, o_ref):
    layer = pl.program_id(0)
    n_layers = pl.num_programs(0)

    @pl.when(layer == 0)
    def _():
        o_ref[...] = x_ref[...]                      # init resident activation

    xb = o_ref[...]                                  # (B, S, D) f32
    b, s, d = xb.shape
    x = xb.reshape(b * s, d)                         # (B*S, D): MXU M = B*S

    pv = pvec_ref[0]                                 # (16, D) packed small params
    ln1_g = pv[_ROW_LN1_G:_ROW_LN1_G + 1, :]
    ln1_b = pv[_ROW_LN1_B:_ROW_LN1_B + 1, :]
    ln2_g = pv[_ROW_LN2_G:_ROW_LN2_G + 1, :]
    ln2_b = pv[_ROW_LN2_B:_ROW_LN2_B + 1, :]
    bo = pv[_ROW_BO:_ROW_BO + 1, :]
    b2 = pv[_ROW_B2:_ROW_B2 + 1, :]
    bq = pv[_ROW_BQ:_ROW_BQ + 1, :]
    bk = pv[_ROW_BK:_ROW_BK + 1, :]
    bv = pv[_ROW_BV:_ROW_BV + 1, :]

    # --- self-attention block (pre-LN); q scale already folded into wqkv ---
    h = _layer_norm(x, ln1_g, ln1_b)
    qkv = jnp.dot(h.astype(wqkv_ref.dtype), wqkv_ref[0],
                  preferred_element_type=jnp.float32)            # (B*S, 3D)
    q = qkv[:, 0:D] + bq
    k = qkv[:, D:2 * D] + bk
    v = qkv[:, 2 * D:3 * D] + bv

    bias = bias_ref[...][None, :, :]                 # (1, S, S) causal bias

    heads = []
    for hh in range(H):
        sl = slice(hh * HD, (hh + 1) * HD)
        qh = q[:, sl].reshape(b, s, HD)              # (B, S, HD)
        kh = k[:, sl].reshape(b, s, HD)
        vh = v[:, sl].reshape(b, s, HD)
        # contract last dims: K-transpose folded into the MXU operand
        sc = jnp.einsum('bqd,bkd->bqk', qh, kh,
                        preferred_element_type=jnp.float32) + bias
        m = jnp.max(sc, axis=-1, keepdims=True)
        e = jnp.exp(sc - m)
        p = e * pl.reciprocal(jnp.sum(e, axis=-1, keepdims=True), approx=True)
        oh = jnp.einsum('bqk,bkd->bqd', p, vh,
                        preferred_element_type=jnp.float32)      # (B, S, HD)
        heads.append(oh.reshape(b * s, HD))
    attn = jnp.concatenate(heads, axis=-1)           # (B*S, D)
    attn = jnp.dot(attn.astype(wo_ref.dtype), wo_ref[0],
                   preferred_element_type=jnp.float32) + bo
    x = x + attn

    # --- MLP block (pre-LN) ---
    h2 = _layer_norm(x, ln2_g, ln2_b)
    ff = jnp.dot(h2.astype(w1_ref.dtype), w1_ref[0],
                 preferred_element_type=jnp.float32) + b1_ref[0]
    ff = _quick_gelu(ff)
    ff = jnp.dot(ff.astype(w2_ref.dtype), w2_ref[0],
                 preferred_element_type=jnp.float32) + b2
    x = x + ff

    # --- single store per grid step; final LN fused into the last layer ------
    @pl.when(layer < n_layers - 1)
    def _():
        o_ref[...] = x.reshape(b, s, d)

    @pl.when(layer == n_layers - 1)
    def _():
        lnf_g = pv[_ROW_LNF_G:_ROW_LNF_G + 1, :]
        lnf_b = pv[_ROW_LNF_B:_ROW_LNF_B + 1, :]
        o_ref[...] = _layer_norm(x, lnf_g, lnf_b).reshape(b, s, d)


def run_clip_stack(x, causal_bias, params):
    b, s, d = x.shape
    n_layers = params["wqkv"].shape[0]
    ff = params["w1"].shape[-1]
    in_specs = [
        pl.BlockSpec((b, s, d), lambda li: (0, 0, 0)),             # embeddings
        pl.BlockSpec((s, s), lambda li: (0, 0)),                   # causal bias
        pl.BlockSpec((1, _PVEC_ROWS, d), lambda li: (li, 0, 0)),   # packed 1-D params
        pl.BlockSpec((1, 1, ff), lambda li: (li, 0, 0)),           # b1
        pl.BlockSpec((1, d, 3 * d), lambda li: (li, 0, 0)),        # wqkv
        pl.BlockSpec((1, d, d), lambda li: (li, 0, 0)),            # wo
        pl.BlockSpec((1, d, ff), lambda li: (li, 0, 0)),           # w1
        pl.BlockSpec((1, ff, d), lambda li: (li, 0, 0)),           # w2
    ]
    out_spec = pl.BlockSpec((b, s, d), lambda li: (0, 0, 0))       # resident across li
    return pl.pallas_call(
        clip_stack_kernel,
        out_shape=jax.ShapeDtypeStruct((b, s, d), jnp.float32),
        grid=(n_layers,),
        in_specs=in_specs,
        out_specs=out_spec,
        compiler_params=pltpu.CompilerParams(
            dimension_semantics=("arbitrary",)),
    )(x, causal_bias, params["pvec"], params["b1"],
      params["wqkv"], params["wo"], params["w1"], params["w2"])


# ---- parameter construction (deterministic, synthetic) -----------------------
def init_params(key):
    keys = jax.random.split(key, 2 + LAYERS * 4)
    tok_emb = jax.random.normal(keys[0], (VOCAB, D), jnp.float32) * 0.02
    pos_emb = jax.random.normal(keys[1], (MAX_LEN, D), jnp.float32) * 0.01

    scale = HD ** -0.5
    wqkv, wo, w1, w2 = [], [], [], []
    for li in range(LAYERS):
        kq, ko, k1, k2 = keys[2 + 4 * li: 2 + 4 * li + 4]
        wq = jax.random.normal(kq, (D, 3 * D), jnp.float32) * 0.02
        # fold the 1/sqrt(head_dim) attention scale into the Q projection
        wq = wq.at[:, :D].multiply(scale)
        wqkv.append(wq)
        wo.append(jax.random.normal(ko, (D, D), jnp.float32) * 0.02)
        w1.append(jax.random.normal(k1, (D, FF), jnp.float32) * 0.02)
        w2.append(jax.random.normal(k2, (FF, D), jnp.float32) * 0.02)

    # packed small params (biases are zero; q-bias would also carry the folded
    # scale if nonzero):
    # rows [ln1_g, ln1_b, ln2_g, ln2_b, bo, b2, bq, bk, bv, lnf_g, lnf_b, pad..]
    pvec = jnp.zeros((LAYERS, _PVEC_ROWS, D), jnp.float32)
    pvec = pvec.at[:, _ROW_LN1_G, :].set(1.0)
    pvec = pvec.at[:, _ROW_LN2_G, :].set(1.0)
    pvec = pvec.at[:, _ROW_LNF_G, :].set(1.0)

    return {
        "tok_emb": tok_emb,
        "pos_emb": pos_emb,
        "pvec": pvec,
        "b1": jnp.zeros((LAYERS, 1, FF), jnp.float32),
        "wqkv": jnp.stack(wqkv).astype(W_DTYPE),
        "wo": jnp.stack(wo).astype(W_DTYPE),
        "w1": jnp.stack(w1).astype(W_DTYPE),
        "w2": jnp.stack(w2).astype(W_DTYPE),
    }


# ---- full forward (== transformer(input_ids=tokens).last_hidden_state) -------
@jax.jit
def frozen_clip_text_embedder(token_ids, params):
    b, s = token_ids.shape
    # embedding lookup + position embedding (tiny gather, kept as JAX glue)
    x = jnp.take(params["tok_emb"], token_ids, axis=0)      # (B, S, D)
    x = x + params["pos_emb"][:s][None, :, :]
    # loop-invariant causal bias, hoisted out of the kernel
    row = lax.broadcasted_iota(jnp.int32, (s, s), 0)
    col = lax.broadcasted_iota(jnp.int32, (s, s), 1)
    causal_bias = jnp.where(col <= row, 0.0, -1e9).astype(jnp.float32)
    z = run_clip_stack(x, causal_bias, params)               # fused stack + final LN
    return z                                                 # last_hidden_state (B, S, D)


if __name__ == "__main__":
    key = jax.random.PRNGKey(0)
    k_par, k_tok = jax.random.split(key)
    params = init_params(k_par)
    # stand-in for tokenizer output (padded/truncated token ids of length MAX_LEN)
    token_ids = jax.random.randint(k_tok, (B, MAX_LEN), 0, VOCAB, dtype=jnp.int32)

    z = frozen_clip_text_embedder(token_ids, params)
    z = jax.block_until_ready(z)

    assert z.shape == (B, MAX_LEN, D), z.shape
    assert z.dtype == jnp.float32
    assert bool(jnp.all(jnp.isfinite(z)))
    print("KERNEL_OK")
</pallas_src>

<mosaic_0001>
module attributes {stable_mosaic.version = 11 : i64} {
  func.func @clip_stack_kernel(%arg0: i32, %arg1: memref<2x8x128xf32, #tpu.memory_space<vmem>>, %arg2: memref<8x8xf32, #tpu.memory_space<vmem>>, %arg3: memref<1x16x128xf32, #tpu.memory_space<vmem>>, %arg4: memref<1x1x512xf32, #tpu.memory_space<vmem>>, %arg5: memref<1x128x384xbf16, #tpu.memory_space<vmem>>, %arg6: memref<1x128x128xbf16, #tpu.memory_space<vmem>>, %arg7: memref<1x128x512xbf16, #tpu.memory_space<vmem>>, %arg8: memref<1x512x128xbf16, #tpu.memory_space<vmem>>, %arg9: memref<2x8x128xf32, #tpu.memory_space<vmem>>) attributes {dimension_semantics = [#tpu.dimension_semantics<arbitrary>], iteration_bounds = array<i64: 2>, scalar_prefetch = 0 : i64, scratch_operands = 0 : i64, tpu.core_type = #tpu.core_type<tc>, window_params = [{pipeline_mode = #tpu.pipeline_mode<synchronous>, transform_indices = @transform_0, window_bounds = array<i64: 2, 8, 128>}, {pipeline_mode = #tpu.pipeline_mode<synchronous>, transform_indices = @transform_1, window_bounds = array<i64: 8, 8>}, {transform_indices = @transform_2, window_bounds = array<i64: 1, 16, 128>}, {transform_indices = @transform_3, window_bounds = array<i64: 1, 1, 512>}, {transform_indices = @transform_4, window_bounds = array<i64: 1, 128, 384>}, {transform_indices = @transform_5, window_bounds = array<i64: 1, 128, 128>}, {transform_indices = @transform_6, window_bounds = array<i64: 1, 128, 512>}, {transform_indices = @transform_7, window_bounds = array<i64: 1, 512, 128>}, {pipeline_mode = #tpu.pipeline_mode<synchronous>, transform_indices = @transform_8, window_bounds = array<i64: 2, 8, 128>}]} {
    %c0_i32 = arith.constant 0 : i32
    %0 = arith.cmpi eq, %arg0, %c0_i32 : i32
    %1 = arith.extui %0 : i1 to i32
    %c0_i32_0 = arith.constant 0 : i32
    %2 = arith.cmpi ne, %1, %c0_i32_0 : i32
    scf.if %2 {
      %c0_57 = arith.constant 0 : index
      %c0_58 = arith.constant 0 : index
      %c0_59 = arith.constant 0 : index
      %196 = vector.load %arg1[%c0_57, %c0_58, %c0_59] : memref<2x8x128xf32, #tpu.memory_space<vmem>>, vector<2x8x128xf32>
      %c0_60 = arith.constant 0 : index
      %c0_61 = arith.constant 0 : index
      %c0_62 = arith.constant 0 : index
      %197 = vector.load %arg9[%c0_60, %c0_61, %c0_62] : memref<2x8x128xf32, #tpu.memory_space<vmem>>, vector<2x8x128xf32>
      tpu.vector_store %arg9[%c0_60, %c0_61, %c0_62], %196 {strides = array<i32>} : memref<2x8x128xf32, #tpu.memory_space<vmem>>, vector<2x8x128xf32>,
    } else {
    }
    %c0 = arith.constant 0 : index
    %c0_1 = arith.constant 0 : index
    %c0_2 = arith.constant 0 : index
    %3 = vector.load %arg9[%c0, %c0_1, %c0_2] : memref<2x8x128xf32, #tpu.memory_space<vmem>>, vector<2x8x128xf32>
    %4 = vector.shape_cast %3 : vector<2x8x128xf32> to vector<16x128xf32>
    %c0_3 = arith.constant 0 : index
    %c0_4 = arith.constant 0 : index
    %c0_5 = arith.constant 0 : index
    %5 = vector.load %arg3[%c0_3, %c0_4, %c0_5] : memref<1x16x128xf32, #tpu.memory_space<vmem>>, vector<1x16x128xf32>
    %6 = vector.shape_cast %5 : vector<1x16x128xf32> to vector<16x128xf32>
    %7 = vector.extract_strided_slice %6 {offsets = [0, 0], sizes = [1, 128], strides = [1, 1]} : vector<16x128xf32> to vector<1x128xf32>
    %8 = vector.extract_strided_slice %6 {offsets = [1, 0], sizes = [1, 128], strides = [1, 1]} : vector<16x128xf32> to vector<1x128xf32>
    %9 = vector.extract_strided_slice %6 {offsets = [2, 0], sizes = [1, 128], strides = [1, 1]} : vector<16x128xf32> to vector<1x128xf32>
    %10 = vector.extract_strided_slice %6 {offsets = [3, 0], sizes = [1, 128], strides = [1, 1]} : vector<16x128xf32> to vector<1x128xf32>
    %11 = vector.extract_strided_slice %6 {offsets = [4, 0], sizes = [1, 128], strides = [1, 1]} : vector<16x128xf32> to vector<1x128xf32>
    %12 = vector.extract_strided_slice %6 {offsets = [5, 0], sizes = [1, 128], strides = [1, 1]} : vector<16x128xf32> to vector<1x128xf32>
    %13 = vector.extract_strided_slice %6 {offsets = [6, 0], sizes = [1, 128], strides = [1, 1]} : vector<16x128xf32> to vector<1x128xf32>
    %14 = vector.extract_strided_slice %6 {offsets = [7, 0], sizes = [1, 128], strides = [1, 1]} : vector<16x128xf32> to vector<1x128xf32>
    %15 = vector.extract_strided_slice %6 {offsets = [8, 0], sizes = [1, 128], strides = [1, 1]} : vector<16x128xf32> to vector<1x128xf32>
    %cst = arith.constant dense<0.000000e+00> : vector<16xf32>
    %16 = vector.multi_reduction <add>, %4, %cst [1] : vector<16x128xf32> to vector<16xf32>
    %17 = vector.shape_cast %16 : vector<16xf32> to vector<16x1xf32>
    %cst_6 = arith.constant 1.280000e+02 : f32
    %18 = vector.broadcast %cst_6 : f32 to vector<16x1xf32>
    %19 = arith.divf %17, %18 : vector<16x1xf32>
    %20 = vector.broadcast %19 : vector<16x1xf32> to vector<16x128xf32>
    %21 = arith.subf %4, %20 : vector<16x128xf32>
    %22 = arith.mulf %21, %21 : vector<16x128xf32>
    %cst_7 = arith.constant dense<0.000000e+00> : vector<16xf32>
    %23 = vector.multi_reduction <add>, %22, %cst_7 [1] : vector<16x128xf32> to vector<16xf32>
    %24 = vector.shape_cast %23 : vector<16xf32> to vector<16x1xf32>
    %cst_8 = arith.constant 1.280000e+02 : f32
    %25 = vector.broadcast %cst_8 : f32 to vector<16x1xf32>
    %26 = arith.divf %24, %25 : vector<16x1xf32>
    %27 = vector.broadcast %19 : vector<16x1xf32> to vector<16x128xf32>
    %28 = arith.subf %4, %27 : vector<16x128xf32>
    %cst_9 = arith.constant 9.99999974E-6 : f32
    %29 = vector.broadcast %cst_9 : f32 to vector<16x1xf32>
    %30 = arith.addf %26, %29 : vector<16x1xf32>
    %31 = math.rsqrt %30 : vector<16x1xf32>
    %32 = vector.broadcast %31 : vector<16x1xf32> to vector<16x128xf32>
    %33 = arith.mulf %28, %32 : vector<16x128xf32>
    %34 = vector.broadcast %7 : vector<1x128xf32> to vector<16x128xf32>
    %35 = arith.mulf %33, %34 : vector<16x128xf32>
    %36 = vector.broadcast %8 : vector<1x128xf32> to vector<16x128xf32>
    %37 = arith.addf %35, %36 : vector<16x128xf32>
    %38 = arith.truncf %37 : vector<16x128xf32> to vector<16x128xbf16>
    %c0_10 = arith.constant 0 : index
    %c0_11 = arith.constant 0 : index
    %c0_12 = arith.constant 0 : index
    %39 = vector.load %arg5[%c0_10, %c0_11, %c0_12] : memref<1x128x384xbf16, #tpu.memory_space<vmem>>, vector<1x128x384xbf16>
    %40 = vector.shape_cast %39 : vector<1x128x384xbf16> to vector<128x384xbf16>
    %cst_13 = arith.constant dense<0.000000e+00> : vector<16x384xf32>
    %41 = tpu.matmul %38, %40, %cst_13 {dimension_numbers = #tpu.dot_dimension_numbers<[1], [0], [0], [1], [0, 0, 1, 1], [], []>} : vector<16x128xbf16>, vector<128x384xbf16>, vector<16x384xf32> -> vector<16x384xf32>
    %42 = vector.extract_strided_slice %41 {offsets = [0, 0], sizes = [16, 128], strides = [1, 1]} : vector<16x384xf32> to vector<16x128xf32>
    %43 = vector.broadcast %13 : vector<1x128xf32> to vector<16x128xf32>
    %44 = arith.addf %42, %43 : vector<16x128xf32>
    %45 = vector.extract_strided_slice %41 {offsets = [0, 128], sizes = [16, 128], strides = [1, 1]} : vector<16x384xf32> to vector<16x128xf32>
    %46 = vector.broadcast %14 : vector<1x128xf32> to vector<16x128xf32>
    %47 = arith.addf %45, %46 : vector<16x128xf32>
    %48 = vector.extract_strided_slice %41 {offsets = [0, 256], sizes = [16, 128], strides = [1, 1]} : vector<16x384xf32> to vector<16x128xf32>
    %49 = vector.broadcast %15 : vector<1x128xf32> to vector<16x128xf32>
    %50 = arith.addf %48, %49 : vector<16x128xf32>
    %c0_14 = arith.constant 0 : index
    %c0_15 = arith.constant 0 : index
    %51 = vector.load %arg2[%c0_14, %c0_15] : memref<8x8xf32, #tpu.memory_space<vmem>>, vector<8x8xf32>
    %52 = vector.shape_cast %51 : vector<8x8xf32> to vector<1x8x8xf32>
    %53 = vector.extract_strided_slice %44 {offsets = [0, 0], sizes = [16, 32], strides = [1, 1]} : vector<16x128xf32> to vector<16x32xf32>
    %54 = vector.shape_cast %53 : vector<16x32xf32> to vector<2x8x32xf32>
    %55 = vector.extract_strided_slice %47 {offsets = [0, 0], sizes = [16, 32], strides = [1, 1]} : vector<16x128xf32> to vector<16x32xf32>
    %56 = vector.shape_cast %55 : vector<16x32xf32> to vector<2x8x32xf32>
    %57 = vector.extract_strided_slice %50 {offsets = [0, 0], sizes = [16, 32], strides = [1, 1]} : vector<16x128xf32> to vector<16x32xf32>
    %58 = vector.shape_cast %57 : vector<16x32xf32> to vector<2x8x32xf32>
    "tpu.trace_start"() <{level = 10 : i32, message = "bqd,bkd->bqk"}> : () -> ()
    %cst_16 = arith.constant dense<0.000000e+00> : vector<2x8x8xf32>
    %59 = tpu.matmul %54, %56, %cst_16 {dimension_numbers = #tpu.dot_dimension_numbers<[2], [2], [1], [1], [0, 0, 0, 1, 1, 1], [0], [0]>} : vector<2x8x32xf32>, vector<2x8x32xf32>, vector<2x8x8xf32> -> vector<2x8x8xf32>
    "tpu.trace_stop"() : () -> ()
    %60 = vector.broadcast %52 : vector<1x8x8xf32> to vector<2x8x8xf32>
    %61 = arith.addf %59, %60 : vector<2x8x8xf32>
    %cst_17 = arith.constant dense<0xFF800000> : vector<2x8xf32>
    %62 = vector.multi_reduction <maximumf>, %61, %cst_17 [2] : vector<2x8x8xf32> to vector<2x8xf32>
    %63 = vector.shape_cast %62 : vector<2x8xf32> to vector<2x8x1xf32>
    %64 = vector.broadcast %63 : vector<2x8x1xf32> to vector<2x8x8xf32>
    %65 = arith.subf %61, %64 : vector<2x8x8xf32>
    %66 = math.exp %65 : vector<2x8x8xf32>
    %cst_18 = arith.constant dense<0.000000e+00> : vector<2x8xf32>
    %67 = vector.multi_reduction <add>, %66, %cst_18 [2] : vector<2x8x8xf32> to vector<2x8xf32>
    %68 = vector.shape_cast %67 : vector<2x8xf32> to vector<2x8x1xf32>
    %69 = tpu.reciprocal %68 {approx = true} : vector<2x8x1xf32> -> vector<2x8x1xf32>
    %70 = vector.broadcast %69 : vector<2x8x1xf32> to vector<2x8x8xf32>
    %71 = arith.mulf %66, %70 : vector<2x8x8xf32>
    "tpu.trace_start"() <{level = 10 : i32, message = "bqk,bkd->bqd"}> : () -> ()
    %cst_19 = arith.constant dense<0.000000e+00> : vector<2x8x32xf32>
    %72 = tpu.matmul %71, %58, %cst_19 {dimension_numbers = #tpu.dot_dimension_numbers<[2], [1], [1], [2], [0, 0, 0, 1, 1, 2], [0], [0]>} : vector<2x8x8xf32>, vector<2x8x32xf32>, vector<2x8x32xf32> -> vector<2x8x32xf32>
    "tpu.trace_stop"() : () -> ()
    %73 = vector.shape_cast %72 : vector<2x8x32xf32> to vector<16x32xf32>
    %74 = vector.extract_strided_slice %44 {offsets = [0, 32], sizes = [16, 32], strides = [1, 1]} : vector<16x128xf32> to vector<16x32xf32>
    %75 = vector.shape_cast %74 : vector<16x32xf32> to vector<2x8x32xf32>
    %76 = vector.extract_strided_slice %47 {offsets = [0, 32], sizes = [16, 32], strides = [1, 1]} : vector<16x128xf32> to vector<16x32xf32>
    %77 = vector.shape_cast %76 : vector<16x32xf32> to vector<2x8x32xf32>
    %78 = vector.extract_strided_slice %50 {offsets = [0, 32], sizes = [16, 32], strides = [1, 1]} : vector<16x128xf32> to vector<16x32xf32>
    %79 = vector.shape_cast %78 : vector<16x32xf32> to vector<2x8x32xf32>
    "tpu.trace_start"() <{level = 10 : i32, message = "bqd,bkd->bqk"}> : () -> ()
    %cst_20 = arith.constant dense<0.000000e+00> : vector<2x8x8xf32>
    %80 = tpu.matmul %75, %77, %cst_20 {dimension_numbers = #tpu.dot_dimension_numbers<[2], [2], [1], [1], [0, 0, 0, 1, 1, 1], [0], [0]>} : vector<2x8x32xf32>, vector<2x8x32xf32>, vector<2x8x8xf32> -> vector<2x8x8xf32>
    "tpu.trace_stop"() : () -> ()
    %81 = vector.broadcast %52 : vector<1x8x8xf32> to vector<2x8x8xf32>
    %82 = arith.addf %80, %81 : vector<2x8x8xf32>
    %cst_21 = arith.constant dense<0xFF800000> : vector<2x8xf32>
    %83 = vector.multi_reduction <maximumf>, %82, %cst_21 [2] : vector<2x8x8xf32> to vector<2x8xf32>
    %84 = vector.shape_cast %83 : vector<2x8xf32> to vector<2x8x1xf32>
    %85 = vector.broadcast %84 : vector<2x8x1xf32> to vector<2x8x8xf32>
    %86 = arith.subf %82, %85 : vector<2x8x8xf32>
    %87 = math.exp %86 : vector<2x8x8xf32>
    %cst_22 = arith.constant dense<0.000000e+00> : vector<2x8xf32>
    %88 = vector.multi_reduction <add>, %87, %cst_22 [2] : vector<2x8x8xf32> to vector<2x8xf32>
    %89 = vector.shape_cast %88 : vector<2x8xf32> to vector<2x8x1xf32>
    %90 = tpu.reciprocal %89 {approx = true} : vector<2x8x1xf32> -> vector<2x8x1xf32>
    %91 = vector.broadcast %90 : vector<2x8x1xf32> to vector<2x8x8xf32>
    %92 = arith.mulf %87, %91 : vector<2x8x8xf32>
    "tpu.trace_start"() <{level = 10 : i32, message = "bqk,bkd->bqd"}> : () -> ()
    %cst_23 = arith.constant dense<0.000000e+00> : vector<2x8x32xf32>
    %93 = tpu.matmul %92, %79, %cst_23 {dimension_numbers = #tpu.dot_dimension_numbers<[2], [1], [1], [2], [0, 0, 0, 1, 1, 2], [0], [0]>} : vector<2x8x8xf32>, vector<2x8x32xf32>, vector<2x8x32xf32> -> vector<2x8x32xf32>
    "tpu.trace_stop"() : () -> ()
    %94 = vector.shape_cast %93 : vector<2x8x32xf32> to vector<16x32xf32>
    %95 = vector.extract_strided_slice %44 {offsets = [0, 64], sizes = [16, 32], strides = [1, 1]} : vector<16x128xf32> to vector<16x32xf32>
    %96 = vector.shape_cast %95 : vector<16x32xf32> to vector<2x8x32xf32>
    %97 = vector.extract_strided_slice %47 {offsets = [0, 64], sizes = [16, 32], strides = [1, 1]} : vector<16x128xf32> to vector<16x32xf32>
    %98 = vector.shape_cast %97 : vector<16x32xf32> to vector<2x8x32xf32>
    %99 = vector.extract_strided_slice %50 {offsets = [0, 64], sizes = [16, 32], strides = [1, 1]} : vector<16x128xf32> to vector<16x32xf32>
    %100 = vector.shape_cast %99 : vector<16x32xf32> to vector<2x8x32xf32>
    "tpu.trace_start"() <{level = 10 : i32, message = "bqd,bkd->bqk"}> : () -> ()
    %cst_24 = arith.constant dense<0.000000e+00> : vector<2x8x8xf32>
    %101 = tpu.matmul %96, %98, %cst_24 {dimension_numbers = #tpu.dot_dimension_numbers<[2], [2], [1], [1], [0, 0, 0, 1, 1, 1], [0], [0]>} : vector<2x8x32xf32>, vector<2x8x32xf32>, vector<2x8x8xf32> -> vector<2x8x8xf32>
    "tpu.trace_stop"() : () -> ()
    %102 = vector.broadcast %52 : vector<1x8x8xf32> to vector<2x8x8xf32>
    %103 = arith.addf %101, %102 : vector<2x8x8xf32>
    %cst_25 = arith.constant dense<0xFF800000> : vector<2x8xf32>
    %104 = vector.multi_reduction <maximumf>, %103, %cst_25 [2] : vector<2x8x8xf32> to vector<2x8xf32>
    %105 = vector.shape_cast %104 : vector<2x8xf32> to vector<2x8x1xf32>
    %106 = vector.broadcast %105 : vector<2x8x1xf32> to vector<2x8x8xf32>
    %107 = arith.subf %103, %106 : vector<2x8x8xf32>
    %108 = math.exp %107 : vector<2x8x8xf32>
    %cst_26 = arith.constant dense<0.000000e+00> : vector<2x8xf32>
    %109 = vector.multi_reduction <add>, %108, %cst_26 [2] : vector<2x8x8xf32> to vector<2x8xf32>
    %110 = vector.shape_cast %109 : vector<2x8xf32> to vector<2x8x1xf32>
    %111 = tpu.reciprocal %110 {approx = true} : vector<2x8x1xf32> -> vector<2x8x1xf32>
    %112 = vector.broadcast %111 : vector<2x8x1xf32> to vector<2x8x8xf32>
    %113 = arith.mulf %108, %112 : vector<2x8x8xf32>
    "tpu.trace_start"() <{level = 10 : i32, message = "bqk,bkd->bqd"}> : () -> ()
    %cst_27 = arith.constant dense<0.000000e+00> : vector<2x8x32xf32>
    %114 = tpu.matmul %113, %100, %cst_27 {dimension_numbers = #tpu.dot_dimension_numbers<[2], [1], [1], [2], [0, 0, 0, 1, 1, 2], [0], [0]>} : vector<2x8x8xf32>, vector<2x8x32xf32>, vector<2x8x32xf32> -> vector<2x8x32xf32>
    "tpu.trace_stop"() : () -> ()
    %115 = vector.shape_cast %114 : vector<2x8x32xf32> to vector<16x32xf32>
    %116 = vector.extract_strided_slice %44 {offsets = [0, 96], sizes = [16, 32], strides = [1, 1]} : vector<16x128xf32> to vector<16x32xf32>
    %117 = vector.shape_cast %116 : vector<16x32xf32> to vector<2x8x32xf32>
    %118 = vector.extract_strided_slice %47 {offsets = [0, 96], sizes = [16, 32], strides = [1, 1]} : vector<16x128xf32> to vector<16x32xf32>
    %119 = vector.shape_cast %118 : vector<16x32xf32> to vector<2x8x32xf32>
    %120 = vector.extract_strided_slice %50 {offsets = [0, 96], sizes = [16, 32], strides = [1, 1]} : vector<16x128xf32> to vector<16x32xf32>
    %121 = vector.shape_cast %120 : vector<16x32xf32> to vector<2x8x32xf32>
    "tpu.trace_start"() <{level = 10 : i32, message = "bqd,bkd->bqk"}> : () -> ()
    %cst_28 = arith.constant dense<0.000000e+00> : vector<2x8x8xf32>
    %122 = tpu.matmul %117, %119, %cst_28 {dimension_numbers = #tpu.dot_dimension_numbers<[2], [2], [1], [1], [0, 0, 0, 1, 1, 1], [0], [0]>} : vector<2x8x32xf32>, vector<2x8x32xf32>, vector<2x8x8xf32> -> vector<2x8x8xf32>
    "tpu.trace_stop"() : () -> ()
    %123 = vector.broadcast %52 : vector<1x8x8xf32> to vector<2x8x8xf32>
    %124 = arith.addf %122, %123 : vector<2x8x8xf32>
    %cst_29 = arith.constant dense<0xFF800000> : vector<2x8xf32>
    %125 = vector.multi_reduction <maximumf>, %124, %cst_29 [2] : vector<2x8x8xf32> to vector<2x8xf32>
    %126 = vector.shape_cast %125 : vector<2x8xf32> to vector<2x8x1xf32>
    %127 = vector.broadcast %126 : vector<2x8x1xf32> to vector<2x8x8xf32>
    %128 = arith.subf %124, %127 : vector<2x8x8xf32>
    %129 = math.exp %128 : vector<2x8x8xf32>
    %cst_30 = arith.constant dense<0.000000e+00> : vector<2x8xf32>
    %130 = vector.multi_reduction <add>, %129, %cst_30 [2] : vector<2x8x8xf32> to vector<2x8xf32>
    %131 = vector.shape_cast %130 : vector<2x8xf32> to vector<2x8x1xf32>
    %132 = tpu.reciprocal %131 {approx = true} : vector<2x8x1xf32> -> vector<2x8x1xf32>
    %133 = vector.broadcast %132 : vector<2x8x1xf32> to vector<2x8x8xf32>
    %134 = arith.mulf %129, %133 : vector<2x8x8xf32>
    "tpu.trace_start"() <{level = 10 : i32, message = "bqk,bkd->bqd"}> : () -> ()
    %cst_31 = arith.constant dense<0.000000e+00> : vector<2x8x32xf32>
    %135 = tpu.matmul %134, %121, %cst_31 {dimension_numbers = #tpu.dot_dimension_numbers<[2], [1], [1], [2], [0, 0, 0, 1, 1, 2], [0], [0]>} : vector<2x8x8xf32>, vector<2x8x32xf32>, vector<2x8x32xf32> -> vector<2x8x32xf32>
    "tpu.trace_stop"() : () -> ()
    %136 = vector.shape_cast %135 : vector<2x8x32xf32> to vector<16x32xf32>
    %137 = tpu.concatenate %73, %94, %115, %136 in 1 : vector<16x32xf32>, vector<16x32xf32>, vector<16x32xf32>, vector<16x32xf32> -> vector<16x128xf32>
    %138 = arith.truncf %137 : vector<16x128xf32> to vector<16x128xbf16>
    %c0_32 = arith.constant 0 : index
    %c0_33 = arith.constant 0 : index
    %c0_34 = arith.constant 0 : index
    %139 = vector.load %arg6[%c0_32, %c0_33, %c0_34] : memref<1x128x128xbf16, #tpu.memory_space<vmem>>, vector<1x128x128xbf16>
    %140 = vector.shape_cast %139 : vector<1x128x128xbf16> to vector<128x128xbf16>
    %cst_35 = arith.constant dense<0.000000e+00> : vector<16x128xf32>
    %141 = tpu.matmul %138, %140, %cst_35 {dimension_numbers = #tpu.dot_dimension_numbers<[1], [0], [0], [1], [0, 0, 1, 1], [], []>} : vector<16x128xbf16>, vector<128x128xbf16>, vector<16x128xf32> -> vector<16x128xf32>
    %142 = vector.broadcast %11 : vector<1x128xf32> to vector<16x128xf32>
    %143 = arith.addf %141, %142 : vector<16x128xf32>
    %144 = arith.addf %4, %143 : vector<16x128xf32>
    %cst_36 = arith.constant dense<0.000000e+00> : vector<16xf32>
    %145 = vector.multi_reduction <add>, %144, %cst_36 [1] : vector<16x128xf32> to vector<16xf32>
    %146 = vector.shape_cast %145 : vector<16xf32> to vector<16x1xf32>
    %cst_37 = arith.constant 1.280000e+02 : f32
    %147 = vector.broadcast %cst_37 : f32 to vector<16x1xf32>
    %148 = arith.divf %146, %147 : vector<16x1xf32>
    %149 = vector.broadcast %148 : vector<16x1xf32> to vector<16x128xf32>
    %150 = arith.subf %144, %149 : vector<16x128xf32>
    %151 = arith.mulf %150, %150 : vector<16x128xf32>
    %cst_38 = arith.constant dense<0.000000e+00> : vector<16xf32>
    %152 = vector.multi_reduction <add>, %151, %cst_38 [1] : vector<16x128xf32> to vector<16xf32>
    %153 = vector.shape_cast %152 : vector<16xf32> to vector<16x1xf32>
    %cst_39 = arith.constant 1.280000e+02 : f32
    %154 = vector.broadcast %cst_39 : f32 to vector<16x1xf32>
    %155 = arith.divf %153, %154 : vector<16x1xf32>
    %156 = vector.broadcast %148 : vector<16x1xf32> to vector<16x128xf32>
    %157 = arith.subf %144, %156 : vector<16x128xf32>
    %cst_40 = arith.constant 9.99999974E-6 : f32
    %158 = vector.broadcast %cst_40 : f32 to vector<16x1xf32>
    %159 = arith.addf %155, %158 : vector<16x1xf32>
    %160 = math.rsqrt %159 : vector<16x1xf32>
    %161 = vector.broadcast %160 : vector<16x1xf32> to vector<16x128xf32>
    %162 = arith.mulf %157, %161 : vector<16x128xf32>
    %163 = vector.broadcast %9 : vector<1x128xf32> to vector<16x128xf32>
    %164 = arith.mulf %162, %163 : vector<16x128xf32>
    %165 = vector.broadcast %10 : vector<1x128xf32> to vector<16x128xf32>
    %166 = arith.addf %164, %165 : vector<16x128xf32>
    %167 = arith.truncf %166 : vector<16x128xf32> to vector<16x128xbf16>
    %c0_41 = arith.constant 0 : index
    %c0_42 = arith.constant 0 : index
    %c0_43 = arith.constant 0 : index
    %168 = vector.load %arg7[%c0_41, %c0_42, %c0_43] : memref<1x128x512xbf16, #tpu.memory_space<vmem>>, vector<1x128x512xbf16>
    %169 = vector.shape_cast %168 : vector<1x128x512xbf16> to vector<128x512xbf16>
    %cst_44 = arith.constant dense<0.000000e+00> : vector<16x512xf32>
    %170 = tpu.matmul %167, %169, %cst_44 {dimension_numbers = #tpu.dot_dimension_numbers<[1], [0], [0], [1], [0, 0, 1, 1], [], []>} : vector<16x128xbf16>, vector<128x512xbf16>, vector<16x512xf32> -> vector<16x512xf32>
    %c0_45 = arith.constant 0 : index
    %c0_46 = arith.constant 0 : index
    %c0_47 = arith.constant 0 : index
    %171 = vector.load %arg4[%c0_45, %c0_46, %c0_47] : memref<1x1x512xf32, #tpu.memory_space<vmem>>, vector<1x1x512xf32>
    %172 = vector.shape_cast %171 : vector<1x1x512xf32> to vector<1x512xf32>
    %173 = vector.broadcast %172 : vector<1x512xf32> to vector<16x512xf32>
    %174 = arith.addf %170, %173 : vector<16x512xf32>
    %cst_48 = arith.constant 1.702000e+00 : f32
    %175 = vector.broadcast %cst_48 : f32 to vector<16x512xf32>
    %176 = arith.mulf %175, %174 : vector<16x512xf32>
    %177 = arith.negf %176 : vector<16x512xf32>
    %178 = math.exp %177 : vector<16x512xf32>
    %cst_49 = arith.constant 1.000000e+00 : f32
    %179 = vector.broadcast %cst_49 : f32 to vector<16x512xf32>
    %180 = arith.addf %179, %178 : vector<16x512xf32>
    %181 = arith.divf %179, %180 : vector<16x512xf32>
    %182 = arith.mulf %174, %181 : vector<16x512xf32>
    %183 = arith.truncf %182 : vector<16x512xf32> to vector<16x512xbf16>
    %c0_50 = arith.constant 0 : index
    %c0_51 = arith.constant 0 : index
    %c0_52 = arith.constant 0 : index
    %184 = vector.load %arg8[%c0_50, %c0_51, %c0_52] : memref<1x512x128xbf16, #tpu.memory_space<vmem>>, vector<1x512x128xbf16>
    %185 = vector.shape_cast %184 : vector<1x512x128xbf16> to vector<512x128xbf16>
    %cst_53 = arith.constant dense<0.000000e+00> : vector<16x128xf32>
    %186 = tpu.matmul %183, %185, %cst_53 {dimension_numbers = #tpu.dot_dimension_numbers<[1], [0], [0], [1], [0, 0, 1, 1], [], []>} : vector<16x512xbf16>, vector<512x128xbf16>, vector<16x128xf32> -> vector<16x128xf32>
    %187 = vector.broadcast %12 : vector<1x128xf32> to vector<16x128xf32>
    %188 = arith.addf %186, %187 : vector<16x128xf32>
    %189 = arith.addf %144, %188 : vector<16x128xf32>
    %c1_i32 = arith.constant 1 : i32
    %190 = arith.cmpi slt, %arg0, %c1_i32 : i32
    %191 = arith.extui %190 : i1 to i32
    %c0_i32_54 = arith.constant 0 : i32
    %192 = arith.cmpi ne, %191, %c0_i32_54 : i32
    scf.if %192 {
      %196 = vector.shape_cast %189 : vector<16x128xf32> to vector<2x8x128xf32>
      %c0_57 = arith.constant 0 : index
      %c0_58 = arith.constant 0 : index
      %c0_59 = arith.constant 0 : index
      %197 = vector.load %arg9[%c0_57, %c0_58, %c0_59] : memref<2x8x128xf32, #tpu.memory_space<vmem>>, vector<2x8x128xf32>
      tpu.vector_store %arg9[%c0_57, %c0_58, %c0_59], %196 {strides = array<i32>} : memref<2x8x128xf32, #tpu.memory_space<vmem>>, vector<2x8x128xf32>,
    } else {
    }
    %c1_i32_55 = arith.constant 1 : i32
    %193 = arith.cmpi eq, %arg0, %c1_i32_55 : i32
    %194 = arith.extui %193 : i1 to i32
    %c0_i32_56 = arith.constant 0 : i32
    %195 = arith.cmpi ne, %194, %c0_i32_56 : i32
    scf.if %195 {
      %196 = vector.extract_strided_slice %6 {offsets = [9, 0], sizes = [1, 128], strides = [1, 1]} : vector<16x128xf32> to vector<1x128xf32>
      %197 = vector.extract_strided_slice %6 {offsets = [10, 0], sizes = [1, 128], strides = [1, 1]} : vector<16x128xf32> to vector<1x128xf32>
      %cst_57 = arith.constant dense<0.000000e+00> : vector<16xf32>
      %198 = vector.multi_reduction <add>, %189, %cst_57 [1] : vector<16x128xf32> to vector<16xf32>
      %199 = vector.shape_cast %198 : vector<16xf32> to vector<16x1xf32>
      %cst_58 = arith.constant 1.280000e+02 : f32
      %200 = vector.broadcast %cst_58 : f32 to vector<16x1xf32>
      %201 = arith.divf %199, %200 : vector<16x1xf32>
      %202 = vector.broadcast %201 : vector<16x1xf32> to vector<16x128xf32>
      %203 = arith.subf %189, %202 : vector<16x128xf32>
      %204 = arith.mulf %203, %203 : vector<16x128xf32>
      %cst_59 = arith.constant dense<0.000000e+00> : vector<16xf32>
      %205 = vector.multi_reduction <add>, %204, %cst_59 [1] : vector<16x128xf32> to vector<16xf32>
      %206 = vector.shape_cast %205 : vector<16xf32> to vector<16x1xf32>
      %cst_60 = arith.constant 1.280000e+02 : f32
      %207 = vector.broadcast %cst_60 : f32 to vector<16x1xf32>
      %208 = arith.divf %206, %207 : vector<16x1xf32>
      %209 = vector.broadcast %201 : vector<16x1xf32> to vector<16x128xf32>
      %210 = arith.subf %189, %209 : vector<16x128xf32>
      %cst_61 = arith.constant 9.99999974E-6 : f32
      %211 = vector.broadcast %cst_61 : f32 to vector<16x1xf32>
      %212 = arith.addf %208, %211 : vector<16x1xf32>
      %213 = math.rsqrt %212 : vector<16x1xf32>
      %214 = vector.broadcast %213 : vector<16x1xf32> to vector<16x128xf32>
      %215 = arith.mulf %210, %214 : vector<16x128xf32>
      %216 = vector.broadcast %196 : vector<1x128xf32> to vector<16x128xf32>
      %217 = arith.mulf %215, %216 : vector<16x128xf32>
      %218 = vector.broadcast %197 : vector<1x128xf32> to vector<16x128xf32>
      %219 = arith.addf %217, %218 : vector<16x128xf32>
      %220 = vector.shape_cast %219 : vector<16x128xf32> to vector<2x8x128xf32>
      %c0_62 = arith.constant 0 : index
      %c0_63 = arith.constant 0 : index
      %c0_64 = arith.constant 0 : index
      %221 = vector.load %arg9[%c0_62, %c0_63, %c0_64] : memref<2x8x128xf32, #tpu.memory_space<vmem>>, vector<2x8x128xf32>
      tpu.vector_store %arg9[%c0_62, %c0_63, %c0_64], %220 {strides = array<i32>} : memref<2x8x128xf32, #tpu.memory_space<vmem>>, vector<2x8x128xf32>,
    } else {
    }
    return
  }
  func.func @transform_0(%arg0: i32) -> (i32, i32, i32) {
    %c0_i32 = arith.constant 0 : i32
    %c0_i32_0 = arith.constant 0 : i32
    %c0_i32_1 = arith.constant 0 : i32
    %c0_i32_2 = arith.constant 0 : i32
    return %c0_i32, %c0_i32_0, %c0_i32_1 : i32, i32, i32
  }
  func.func @transform_1(%arg0: i32) -> (i32, i32) {
    %c0_i32 = arith.constant 0 : i32
    %c0_i32_0 = arith.constant 0 : i32
    %c0_i32_1 = arith.constant 0 : i32
    return %c0_i32, %c0_i32_0 : i32, i32
  }
  func.func @transform_2(%arg0: i32) -> (i32, i32, i32) {
    %c0_i32 = arith.constant 0 : i32
    %c0_i32_0 = arith.constant 0 : i32
    %c0_i32_1 = arith.constant 0 : i32
    return %arg0, %c0_i32, %c0_i32_0 : i32, i32, i32
  }
  func.func @transform_3(%arg0: i32) -> (i32, i32, i32) {
    %c0_i32 = arith.constant 0 : i32
    %c0_i32_0 = arith.constant 0 : i32
    %c0_i32_1 = arith.constant 0 : i32
    return %arg0, %c0_i32, %c0_i32_0 : i32, i32, i32
  }
  func.func @transform_4(%arg0: i32) -> (i32, i32, i32) {
    %c0_i32 = arith.constant 0 : i32
    %c0_i32_0 = arith.constant 0 : i32
    %c0_i32_1 = arith.constant 0 : i32
    return %arg0, %c0_i32, %c0_i32_0 : i32, i32, i32
  }
  func.func @transform_5(%arg0: i32) -> (i32, i32, i32) {
    %c0_i32 = arith.constant 0 : i32
    %c0_i32_0 = arith.constant 0 : i32
    %c0_i32_1 = arith.constant 0 : i32
    return %arg0, %c0_i32, %c0_i32_0 : i32, i32, i32
  }
  func.func @transform_6(%arg0: i32) -> (i32, i32, i32) {
    %c0_i32 = arith.constant 0 : i32
    %c0_i32_0 = arith.constant 0 : i32
    %c0_i32_1 = arith.constant 0 : i32
    return %arg0, %c0_i32, %c0_i32_0 : i32, i32, i32
  }
  func.func @transform_7(%arg0: i32) -> (i32, i32, i32) {
    %c0_i32 = arith.constant 0 : i32
    %c0_i32_0 = arith.constant 0 : i32
    %c0_i32_1 = arith.constant 0 : i32
    return %arg0, %c0_i32, %c0_i32_0 : i32, i32, i32
  }
  func.func @transform_8(%arg0: i32) -> (i32, i32, i32) {
    %c0_i32 = arith.constant 0 : i32
    %c0_i32_0 = arith.constant 0 : i32
    %c0_i32_1 = arith.constant 0 : i32
    %c0_i32_2 = arith.constant 0 : i32
    return %c0_i32, %c0_i32_0, %c0_i32_1 : i32, i32, i32
  }
}

</mosaic_0001>

<llo_original>
// kernel: frozen_clip_text_embedder.1
$region0: #{frozen_clip_text_embedder.1}
  #allocation0 [shape = 'u32[]', space=smem, size = 0x4, offset = 0x4, fixed_abs, tag = 'smem constant byte address 0x4 - core index']
  #allocation1 [shape = 'u32[144,128]{1,0:T(1,128)}', space=vmem, size = 0x12000, scoped, tag = 'internal scratch']
  %s0 = inlined_call_operand.vmem [shape: f32[2,8,128], index: 0, kind: input, shape index: {}]
  %s1 = inlined_call_operand.vmem [shape: f32[8,8], index: 1, kind: input, shape index: {}]
  %s2 = inlined_call_operand.vmem [shape: f32[2,16,128], index: 2, kind: input, shape index: {}]
  %s3 = inlined_call_operand.vmem [shape: f32[2,1,512], index: 3, kind: input, shape index: {}]
  %s4 = inlined_call_operand.hbm [shape: bf16[2,128,384], index: 4, kind: input, shape index: {}]
  %s5 = inlined_call_operand.vmem [shape: bf16[2,128,128], index: 5, kind: input, shape index: {}]
  %s6 = inlined_call_operand.hbm [shape: bf16[2,128,512], index: 6, kind: input, shape index: {}]
  %s7 = inlined_call_operand.hbm [shape: bf16[2,512,128], index: 7, kind: input, shape index: {}]
  %s8 = inlined_call_operand.hbm [shape: f32[2,8,128], index: 8, kind: output, shape index: {}]
  %s9 = sld [smem:[#allocation0]]
  $region89: #{frozen_clip_text_embedder.1} parent=0
    _
  %s11 = ssub.s32 1, %s9
  %s12 = scalar_select 0, %s11, %s9
  $region1: #{frozen_clip_text_embedder.1} parent=0
    #allocation2 [shape = 'u8[196608]{0}', space=vmem, size = 0x30000, scoped, tag = 'input window, operand 4']
    #allocation3 [shape = 's32[2]{0}', space=sflag, size = 0x8, scoped, tag = 'scoped memory for frozen_clip_text_embedder.1']
    #allocation4 [shape = 's32[2]{0}', space=sflag, size = 0x8, scoped, tag = 'scoped memory for frozen_clip_text_embedder.1']
    #allocation5 [shape = 'u8[262144]{0}', space=vmem, size = 0x40000, scoped, tag = 'input window, operand 6']
    #allocation6 [shape = 's32[2]{0}', space=sflag, size = 0x8, scoped, tag = 'scoped memory for frozen_clip_text_embedder.1']
    #allocation7 [shape = 'u8[262144]{0}', space=vmem, size = 0x40000, scoped, tag = 'input window, operand 7']
    #allocation8 [shape = 'u8[8192]{0}', space=vmem, size = 0x2000, scoped, tag = 'output window, operand 0, single buffered']
    %13 = vsyncpa [#allocation3], 0
    %s14 = scalar_lea.sflag [#allocation3], 1
    %15 = vsyncpa %s14, 0
    %16 = vsyncpa [#allocation6], 0
    %s17 = scalar_lea.sflag [#allocation6], 1
    %18 = vsyncpa %s17, 0
    %19 = vsyncpa [#allocation4], 0
    loop: start=0, step=1, limit=4
    $region2: #{frozen_clip_text_embedder.1} parent=1 // loop_pre_header
      _
    $region3: #{frozen_clip_text_embedder.1} parent=1 // loop_header
      %s21 = sphi 0, %s25
      %p22 = scmp.ge.s32.totalorder %s21, 4
      %s29 = sphi 0, %s29
      %s31 = sphi 0, %s29
      %s32 = sphi 0, %s31
      %s46 = sphi 0, %s32
      %s50 = sphi 0, %s50
      %s52 = sphi 0, %s50
      %s53 = sphi 0, %s52
      %s67 = sphi 0, %s53
      %s73 = sphi 0, %s75
      %s76 = sphi 0, %s73
      %s77 = sphi 0, %s76
      %s93 = sphi 0, %s77
      %s99 = sphi 0, %s101
      %s102 = sphi 0, %s99
      %s103 = sphi 0, %s102
      %s119 = sphi 0, %s103
      %s125 = sphi 0, %s127
      %s128 = sphi 0, %s125
      %s129 = sphi 0, %s128
      %s145 = sphi 0, %s129
      %s151 = sphi 0, %s153
      %s154 = sphi 0, %s151
      %s155 = sphi 0, %s154
      %s171 = sphi 0, %s155
      %s177 = sphi 0, %s179
      %s180 = sphi 0, %s177
      %s181 = sphi 0, %s180
      %s197 = sphi 0, %s181
      %s203 = sphi 0, %s205
      %s206 = sphi 0, %s203
      %s207 = sphi 0, %s206
      %s223 = sphi 0, %s207
      %s227 = sphi 0, %s227
      %s229 = sphi 0, %s227
      %s230 = sphi 0, %s229
      %s244 = sphi 0, %s230
    $region4: #{frozen_clip_text_embedder.1} parent=1 // loop_header_branch
      %24 = sbr.rel (%p22) target = $region8
    $region5: #{frozen_clip_text_embedder.1} parent=1 // loop_body
      %s26 = ssub.s32 %s21, 1
      %s27 = ssub.s32 %s21, 2
      %s28 = sadd.s32 %s21, 1
      %s30 = sadd.s32 %s29, 1
      %p33 = scmp.eq.s32.totalorder %s21, 1
      %p34 = scmp.ne.s32.totalorder %s29, %s31
      %p35 = scmp.eq.s32.totalorder %s21, 0
      %p36 = por %p34, %p35
      %p37 = scmp.ne.s32.totalorder %s29, %s31
      %p38 = scmp.eq.s32.totalorder %s26, 1
      %p39 = por %p37, %p38
      %p40 = scmp.ne.s32.totalorder %s31, %s32
      %p41 = scmp.eq.s32.totalorder %s26, 0
      %p42 = por %p40, %p41
      %p43 = scmp.ne.s32.totalorder %s31, %s32
      %p44 = scmp.eq.s32.totalorder %s27, 1
      %p45 = por %p43, %p44
      %p47 = scmp.ne.s32.totalorder %s32, %s46
      %p48 = scmp.eq.s32.totalorder %s27, 0
      %p49 = por %p47, %p48
      %s51 = sadd.s32 %s50, 1
      %p54 = scmp.eq.s32.totalorder %s21, 1
      %p55 = scmp.ne.s32.totalorder %s50, %s52
      %p56 = scmp.eq.s32.totalorder %s21, 0
      %p57 = por %p55, %p56
      %p58 = scmp.ne.s32.totalorder %s50, %s52
      %p59 = scmp.eq.s32.totalorder %s26, 1
      %p60 = por %p58, %p59
      %p61 = scmp.ne.s32.totalorder %s52, %s53
      %p62 = scmp.eq.s32.totalorder %s26, 0
      %p63 = por %p61, %p62
      %p64 = scmp.ne.s32.totalorder %s52, %s53
      %p65 = scmp.eq.s32.totalorder %s27, 1
      %p66 = por %p64, %p65
      %p68 = scmp.ne.s32.totalorder %s53, %s67
      %p69 = scmp.eq.s32.totalorder %s27, 0
      %p70 = por %p68, %p69
      %s71 = ssub.s32 %s21, %s28
      %p72 = scmp.eq.s32.totalorder %s71, 0
      %s74 = sadd.s32 %s73, 1
      %s75 = scalar_select %p72, %s73, %s74
      %p78 = pneg %p72
      %p79 = scmp.eq.s32.totalorder %s21, 1
      %p80 = por %p78, %p79
      %p81 = scmp.ne.s32.totalorder %s73, %s76
      %p82 = scmp.eq.s32.totalorder %s21, 0
      %p83 = por %p81, %p82
      %p84 = scmp.ne.s32.totalorder %s73, %s76
      %p85 = scmp.eq.s32.totalorder %s26, 1
      %p86 = por %p84, %p85
      %p87 = scmp.ne.s32.totalorder %s76, %s77
      %p88 = scmp.eq.s32.totalorder %s26, 0
      %p89 = por %p87, %p88
      %p90 = scmp.ne.s32.totalorder %s76, %s77
      %p91 = scmp.eq.s32.totalorder %s27, 1
      %p92 = por %p90, %p91
      %p94 = scmp.ne.s32.totalorder %s77, %s93
      %p95 = scmp.eq.s32.totalorder %s27, 0
      %p96 = por %p94, %p95
      %s97 = ssub.s32 %s21, %s28
      %p98 = scmp.eq.s32.totalorder %s97, 0
      %s100 = sadd.s32 %s99, 1
      %s101 = scalar_select %p98, %s99, %s100
      %p104 = pneg %p98
      %p105 = scmp.eq.s32.totalorder %s21, 1
      %p106 = por %p104, %p105
      %p107 = scmp.ne.s32.totalorder %s99, %s102
      %p108 = scmp.eq.s32.totalorder %s21, 0
      %p109 = por %p107, %p108
      %p110 = scmp.ne.s32.totalorder %s99, %s102
      %p111 = scmp.eq.s32.totalorder %s26, 1
      %p112 = por %p110, %p111
      %p113 = scmp.ne.s32.totalorder %s102, %s103
      %p114 = scmp.eq.s32.totalorder %s26, 0
      %p115 = por %p113, %p114
      %p116 = scmp.ne.s32.totalorder %s102, %s103
      %p117 = scmp.eq.s32.totalorder %s27, 1
      %p118 = por %p116, %p117
      %p120 = scmp.ne.s32.totalorder %s103, %s119
      %p121 = scmp.eq.s32.totalorder %s27, 0
      %p122 = por %p120, %p121
      %s123 = ssub.s32 %s21, %s28
      %p124 = scmp.eq.s32.totalorder %s123, 0
      %s126 = sadd.s32 %s125, 1
      %s127 = scalar_select %p124, %s125, %s126
      %p130 = pneg %p124
      %p131 = scmp.eq.s32.totalorder %s21, 1
      %p132 = por %p130, %p131
      %p133 = scmp.ne.s32.totalorder %s125, %s128
      %p134 = scmp.eq.s32.totalorder %s21, 0
      %p135 = por %p133, %p134
      %p136 = scmp.ne.s32.totalorder %s125, %s128
      %p137 = scmp.eq.s32.totalorder %s26, 1
      %p138 = por %p136, %p137
      %p139 = scmp.ne.s32.totalorder %s128, %s129
      %p140 = scmp.eq.s32.totalorder %s26, 0
      %p141 = por %p139, %p140
      %p142 = scmp.ne.s32.totalorder %s128, %s129
      %p143 = scmp.eq.s32.totalorder %s27, 1
      %p144 = por %p142, %p143
      %p146 = scmp.ne.s32.totalorder %s129, %s145
      %p147 = scmp.eq.s32.totalorder %s27, 0
      %p148 = por %p146, %p147
      %s149 = ssub.s32 %s21, %s28
      %p150 = scmp.eq.s32.totalorder %s149, 0
      %s152 = sadd.s32 %s151, 1
      %s153 = scalar_select %p150, %s151, %s152
      %p156 = pneg %p150
      %p157 = scmp.eq.s32.totalorder %s21, 1
      %p158 = por %p156, %p157
      %p159 = scmp.ne.s32.totalorder %s151, %s154
      %p160 = scmp.eq.s32.totalorder %s21, 0
      %p161 = por %p159, %p160
      %p162 = scmp.ne.s32.totalorder %s151, %s154
      %p163 = scmp.eq.s32.totalorder %s26, 1
      %p164 = por %p162, %p163
      %p165 = scmp.ne.s32.totalorder %s154, %s155
      %p166 = scmp.eq.s32.totalorder %s26, 0
      %p167 = por %p165, %p166
      %p168 = scmp.ne.s32.totalorder %s154, %s155
      %p169 = scmp.eq.s32.totalorder %s27, 1
      %p170 = por %p168, %p169
      %p172 = scmp.ne.s32.totalorder %s155, %s171
      %p173 = scmp.eq.s32.totalorder %s27, 0
      %p174 = por %p172, %p173
      %s175 = ssub.s32 %s21, %s28
      %p176 = scmp.eq.s32.totalorder %s175, 0
      %s178 = sadd.s32 %s177, 1
      %s179 = scalar_select %p176, %s177, %s178
      %p182 = pneg %p176
      %p183 = scmp.eq.s32.totalorder %s21, 1
      %p184 = por %p182, %p183
      %p185 = scmp.ne.s32.totalorder %s177, %s180
      %p186 = scmp.eq.s32.totalorder %s21, 0
      %p187 = por %p185, %p186
      %p188 = scmp.ne.s32.totalorder %s177, %s180
      %p189 = scmp.eq.s32.totalorder %s26, 1
      %p190 = por %p188, %p189
      %p191 = scmp.ne.s32.totalorder %s180, %s181
      %p192 = scmp.eq.s32.totalorder %s26, 0
      %p193 = por %p191, %p192
      %p194 = scmp.ne.s32.totalorder %s180, %s181
      %p195 = scmp.eq.s32.totalorder %s27, 1
      %p196 = por %p194, %p195
      %p198 = scmp.ne.s32.totalorder %s181, %s197
      %p199 = scmp.eq.s32.totalorder %s27, 0
      %p200 = por %p198, %p199
      %s201 = ssub.s32 %s21, %s28
      %p202 = scmp.eq.s32.totalorder %s201, 0
      %s204 = sadd.s32 %s203, 1
      %s205 = scalar_select %p202, %s203, %s204
      %p208 = pneg %p202
      %p209 = scmp.eq.s32.totalorder %s21, 1
      %p210 = por %p208, %p209
      %p211 = scmp.ne.s32.totalorder %s203, %s206
      %p212 = scmp.eq.s32.totalorder %s21, 0
      %p213 = por %p211, %p212
      %p214 = scmp.ne.s32.totalorder %s203, %s206
      %p215 = scmp.eq.s32.totalorder %s26, 1
      %p216 = por %p214, %p215
      %p217 = scmp.ne.s32.totalorder %s206, %s207
      %p218 = scmp.eq.s32.totalorder %s26, 0
      %p219 = por %p217, %p218
      %p220 = scmp.ne.s32.totalorder %s206, %s207
      %p221 = scmp.eq.s32.totalorder %s27, 1
      %p222 = por %p220, %p221
      %p224 = scmp.ne.s32.totalorder %s207, %s223
      %p225 = scmp.eq.s32.totalorder %s27, 0
      %p226 = por %p224, %p225
      %s228 = sadd.s32 %s227, 1
      %p231 = scmp.eq.s32.totalorder %s21, 1
      %p232 = scmp.ne.s32.totalorder %s227, %s229
      %p233 = scmp.eq.s32.totalorder %s21, 0
      %p234 = por %p232, %p233
      %p235 = scmp.ne.s32.totalorder %s227, %s229
      %p236 = scmp.eq.s32.totalorder %s26, 1
      %p237 = por %p235, %p236
      %p238 = scmp.ne.s32.totalorder %s229, %s230
      %p239 = scmp.eq.s32.totalorder %s26, 0
      %p240 = por %p238, %p239
      %p241 = scmp.ne.s32.totalorder %s229, %s230
      %p242 = scmp.eq.s32.totalorder %s27, 1
      %p243 = por %p241, %p242
      %p245 = scmp.ne.s32.totalorder %s230, %s244
      %p246 = scmp.eq.s32.totalorder %s27, 0
      %p247 = por %p245, %p246
      %p248 = scmp.le.s32.totalorder 1, %s21
      %p249 = scmp.lt.s32.totalorder %s21, 3
      %p250 = pnand %p248, %p249
      %p251 = pneg %p250
      // Predicated region
      $region9: #{frozen_clip_text_embedder.1} parent=5 // pred_check
        _
      $region10: #{frozen_clip_text_embedder.1} parent=5 // pred_check_branch
        %253 = sbr.rel (%p250) target = $region12
      $region11: #{frozen_clip_text_embedder.1} parent=5 // pred_region
        %s254 = ssub.s32 %s21, 1
        // Predicated region
        $region13: #{frozen_clip_text_embedder.1} parent=11 // pred_check
          %p255 = pneg %p42
        $region14: #{frozen_clip_text_embedder.1} parent=11 // pred_check_branch
          %257 = sbr.rel (%p255) target = $region16
        $region15: #{frozen_clip_text_embedder.1} parent=11 // pred_region
          _
        $region16: #{frozen_clip_text_embedder.1} parent=11 // pred_fallthru
          _
        // Predicated region
        $region17: #{frozen_clip_text_embedder.1} parent=11 // pred_check
          %p258 = pneg %p63
        $region18: #{frozen_clip_text_embedder.1} parent=11 // pred_check_branch
          %260 = sbr.rel (%p258) target = $region20
        $region19: #{frozen_clip_text_embedder.1} parent=11 // pred_region
          _
        $region20: #{frozen_clip_text_embedder.1} parent=11 // pred_fallthru
          _
      $region12: #{frozen_clip_text_embedder.1} parent=5 // pred_fallthru
        _
      %p261 = scmp.lt.s32.totalorder %s21, 2
      // Predicated region
      $region21: #{frozen_clip_text_embedder.1} parent=5 // pred_check
        %p262 = pneg %p261
      $region22: #{frozen_clip_text_embedder.1} parent=5 // pred_check_branch
        %264 = sbr.rel (%p262) target = $region24
      $region23: #{frozen_clip_text_embedder.1} parent=5 // pred_region
        // Predicated region
        $region25: #{frozen_clip_text_embedder.1} parent=23 // pred_check
          %p265 = pneg %p83
        $region26: #{frozen_clip_text_embedder.1} parent=23 // pred_check_branch
          %267 = sbr.rel (%p265) target = $region28
        $region27: #{frozen_clip_text_embedder.1} parent=23 // pred_region
          %p268 = scmp.lt.s32.totalorder %s21, 1
          %s269 = scalar_select %p268, %s21, 1
          %s270 = smul.addr %s269, 2
          %s271 = smul.addr %s270, 8
          %s272 = scalar_lea.vmem %s2, %s271
        $region28: #{frozen_clip_text_embedder.1} parent=23 // pred_fallthru
          _
        // Predicated region
        $region29: #{frozen_clip_text_embedder.1} parent=23 // pred_check
          %p273 = pneg %p109
        $region30: #{frozen_clip_text_embedder.1} parent=23 // pred_check_branch
          %275 = sbr.rel (%p273) target = $region32
        $region31: #{frozen_clip_text_embedder.1} parent=23 // pred_region
          %p276 = scmp.lt.s32.totalorder %s21, 1
          %s277 = scalar_select %p276, %s21, 1
          %s278 = smul.addr %s277, 4
          %s279 = scalar_lea.vmem %s3, %s278
        $region32: #{frozen_clip_text_embedder.1} parent=23 // pred_fallthru
          _
        // Predicated region
        $region33: #{frozen_clip_text_embedder.1} parent=23 // pred_check
          %p280 = pneg %p135
        $region34: #{frozen_clip_text_embedder.1} parent=23 // pred_check_branch
          %282 = sbr.rel (%p280) target = $region36
        $region35: #{frozen_clip_text_embedder.1} parent=23 // pred_region
          %s283 = sand.u32 %s125, 1
          %s284 = scalar_lea.sflag [#allocation3], %s283
          %s285 = sand.u32 %s125, 1
          %s286 = smul.addr %s285, 192
          %s287 = scalar_lea.vmem [#allocation2], %s286
          %s289 = ssub.s32 3072, 3072
          %290 = vsyncadd %s284, %s289
          %s291 = smul.addr %s21, 48
          %s292 = smul.addr %s291, 64
          %s293 = scalar_lea.hbm %s4, %s292
          %s294 = sshll.u32 %s287, 4
          %s295 = int_to_ptr.vmem [resolvable:$true] %s294
          %300 = dma.hbm_to_vmem [thread:$0]  %s293, 3072, %s295, %s284, 192, 192, 12
        $region36: #{frozen_clip_text_embedder.1} parent=23 // pred_fallthru
          _
        // Predicated region
        $region37: #{frozen_clip_text_embedder.1} parent=23 // pred_check
          %p301 = pneg %p161
        $region38: #{frozen_clip_text_embedder.1} parent=23 // pred_check_branch
          %303 = sbr.rel (%p301) target = $region40
        $region39: #{frozen_clip_text_embedder.1} parent=23 // pred_region
          %p304 = scmp.lt.s32.totalorder %s21, 1
          %s305 = scalar_select %p304, %s21, 1
          %s306 = smul.addr %s305, 16
          %s307 = smul.addr %s306, 4
          %s308 = scalar_lea.vmem %s5, %s307
        $region40: #{frozen_clip_text_embedder.1} parent=23 // pred_fallthru
          _
        // Predicated region
        $region41: #{frozen_clip_text_embedder.1} parent=23 // pred_check
          %p309 = pneg %p187
        $region42: #{frozen_clip_text_embedder.1} parent=23 // pred_check_branch
          %311 = sbr.rel (%p309) target = $region44
        $region43: #{frozen_clip_text_embedder.1} parent=23 // pred_region
          %s312 = sand.u32 %s21, 1
          %s313 = scalar_lea.sflag [#allocation6], %s312
          %s314 = sand.u32 %s177, 1
          %s315 = smul.addr %s314, 256
          %s316 = scalar_lea.vmem [#allocation5], %s315
          %s318 = ssub.s32 4096, 4096
          %319 = vsyncadd %s313, %s318
          %s320 = smul.addr %s21, 64
          %s321 = smul.addr %s320, 64
          %s322 = scalar_lea.hbm %s6, %s321
          %s323 = sshll.u32 %s316, 4
          %s324 = int_to_ptr.vmem [resolvable:$true] %s323
          %329 = dma.hbm_to_vmem [thread:$0]  %s322, 4096, %s324, %s313, 256, 256, 16
        $region44: #{frozen_clip_text_embedder.1} parent=23 // pred_fallthru
          _
        // Predicated region
        $region45: #{frozen_clip_text_embedder.1} parent=23 // pred_check
          %p330 = pneg %p213
        $region46: #{frozen_clip_text_embedder.1} parent=23 // pred_check_branch
          %332 = sbr.rel (%p330) target = $region48
        $region47: #{frozen_clip_text_embedder.1} parent=23 // pred_region
          %s333 = sand.u32 %s21, 1
          %s334 = scalar_lea.sflag [#allocation6], %s333
          %s335 = sand.u32 %s203, 1
          %s336 = smul.addr %s335, 256
          %s337 = scalar_lea.vmem [#allocation7], %s336
          %s339 = ssub.s32 4096, 4096
          %340 = vsyncadd %s334, %s339
          %s341 = smul.addr %s21, 64
          %s342 = smul.addr %s341, 64
          %s343 = scalar_lea.hbm %s7, %s342
          %s344 = sshll.u32 %s337, 4
          %s345 = int_to_ptr.vmem [resolvable:$true] %s344
          %350 = dma.hbm_to_vmem [thread:$0]  %s343, 4096, %s345, %s334, 64, 64, 4
        $region48: #{frozen_clip_text_embedder.1} parent=23 // pred_fallthru
          _
      $region24: #{frozen_clip_text_embedder.1} parent=5 // pred_fallthru
        _
      %p351 = scmp.le.s32.totalorder 1, %s21
      %p352 = scmp.lt.s32.totalorder %s21, 3
      %p353 = pnand %p351, %p352
      %p354 = pneg %p353
      // Predicated region
      $region49: #{frozen_clip_text_embedder.1} parent=5 // pred_check
        _
      $region50: #{frozen_clip_text_embedder.1} parent=5 // pred_check_branch
        %356 = sbr.rel (%p353) target = $region52
      $region51: #{frozen_clip_text_embedder.1} parent=5 // pred_region
        %s357 = ssub.s32 %s21, 1
        %s358 = sand.u32 %s128, 1
        %s359 = scalar_lea.sflag [#allocation3], %s358
        %s360 = sand.u32 %s128, 1
        %s361 = smul.addr %s360, 192
        %s362 = scalar_lea.vmem [#allocation2], %s361
        // Predicated region
        $region53: #{frozen_clip_text_embedder.1} parent=51 // pred_check
          %p363 = pneg %p141
        $region54: #{frozen_clip_text_embedder.1} parent=51 // pred_check_branch
          %365 = sbr.rel (%p363) target = $region56
        $region55: #{frozen_clip_text_embedder.1} parent=51 // pred_region
          %366 = dma.done %s359, 3072
        $region56: #{frozen_clip_text_embedder.1} parent=51 // pred_fallthru
          _
        %s367 = sand.u32 %s26, 1
        %s368 = scalar_lea.sflag [#allocation6], %s367
        %s369 = sand.u32 %s180, 1
        %s370 = smul.addr %s369, 256
        %s371 = scalar_lea.vmem [#allocation5], %s370
        // Predicated region
        $region57: #{frozen_clip_text_embedder.1} parent=51 // pred_check
          %p372 = pneg %p193
        $region58: #{frozen_clip_text_embedder.1} parent=51 // pred_check_branch
          %374 = sbr.rel (%p372) target = $region60
        $region59: #{frozen_clip_text_embedder.1} parent=51 // pred_region
          %375 = dma.done %s368, 4096
        $region60: #{frozen_clip_text_embedder.1} parent=51 // pred_fallthru
          _
        %s376 = sand.u32 %s26, 1
        %s377 = scalar_lea.sflag [#allocation6], %s376
        %s378 = sand.u32 %s206, 1
        %s379 = smul.addr %s378, 256
        %s380 = scalar_lea.vmem [#allocation7], %s379
        // Predicated region
        $region61: #{frozen_clip_text_embedder.1} parent=51 // pred_check
          %p381 = pneg %p219
        $region62: #{frozen_clip_text_embedder.1} parent=51 // pred_check_branch
          %383 = sbr.rel (%p381) target = $region64
        $region63: #{frozen_clip_text_embedder.1} parent=51 // pred_region
          %384 = dma.done %s377, 4096
        $region64: #{frozen_clip_text_embedder.1} parent=51 // pred_fallthru
          _
        %p385 = pneg %p42
        %p386 = pneg %p39
        %p387 = pneg %p63
        %p388 = pneg %p60
        %p389 = scmp.lt.s32.totalorder %s26, 1
        %s390 = scalar_select %p389, %s26, 1
        %s391 = smul.addr %s390, 2
        %s392 = smul.addr %s391, 8
        %s393 = scalar_lea.vmem %s2, %s392
        %p394 = pneg %p89
        %p395 = pneg %p86
        %p396 = scmp.lt.s32.totalorder %s26, 1
        %s397 = scalar_select %p396, %s26, 1
        %s398 = smul.addr %s397, 4
        %s399 = scalar_lea.vmem %s3, %s398
        %p400 = pneg %p115
        %p401 = pneg %p112
        %s402 = sand.u32 %s128, 1
        %s403 = scalar_lea.sflag [#allocation3], %s402
        %s404 = sand.u32 %s128, 1
        %s405 = smul.addr %s404, 192
        %s406 = scalar_lea.vmem [#allocation2], %s405
        %p407 = pneg %p141
        %p408 = pneg %p138
        %p409 = scmp.lt.s32.totalorder %s26, 1
        %s410 = scalar_select %p409, %s26, 1
        %s411 = smul.addr %s410, 16
        %s412 = smul.addr %s411, 4
        %s413 = scalar_lea.vmem %s5, %s412
        %p414 = pneg %p167
        %p415 = pneg %p164
        %s416 = sand.u32 %s26, 1
        %s417 = scalar_lea.sflag [#allocation6], %s416
        %s418 = sand.u32 %s180, 1
        %s419 = smul.addr %s418, 256
        %s420 = scalar_lea.vmem [#allocation5], %s419
        %p421 = pneg %p193
        %p422 = pneg %p190
        %s423 = sand.u32 %s26, 1
        %s424 = scalar_lea.sflag [#allocation6], %s423
        %s425 = sand.u32 %s206, 1
        %s426 = smul.addr %s425, 256
        %s427 = scalar_lea.vmem [#allocation7], %s426
        %p428 = pneg %p219
        %p429 = pneg %p216
        %p430 = pneg %p240
        %p431 = pneg %p237
        %p432 = scmp.lt.s32.totalorder %s26, 1
        %s433 = scalar_select %p432, %s26, 1
        %s434 = smul.addr %s433, 2
        %s435 = smul.addr %s434, 8
        %s436 = scalar_lea.vmem %s2, %s435
        %p437 = scmp.lt.s32.totalorder %s26, 1
        %s438 = scalar_select %p437, %s26, 1
        %s439 = smul.addr %s438, 4
        %s440 = scalar_lea.vmem %s3, %s439
        %p441 = scmp.lt.s32.totalorder %s26, 1
        %s442 = scalar_select %p441, %s26, 1
        %s443 = smul.addr %s442, 16
        %s444 = smul.addr %s443, 4
        %s445 = scalar_lea.vmem %s5, %s444
        %p447 = scmp.eq.s32.totalorder %s26, 0
        // Predicated region
        $region65: #{frozen_clip_text_embedder.1} parent=51 // pred_check
          %p448 = pneg %p447
        $region66: #{frozen_clip_text_embedder.1} parent=51 // pred_check_branch
          %450 = sbr.rel (%p448) target = $region68
        $region67: #{frozen_clip_text_embedder.1} parent=51 // pred_region
          %v451 = vld [vmem:[%s0] sm:$0xff]
          %v452 = vld [vmem:[%s0 + $0x8] sm:$0xff]
          %453 = vst [vmem:[#allocation8] sm:$0xff] %v451
          %454 = vst [vmem:[#allocation8 + $0x8] sm:$0xff] %v452
        $region68: #{frozen_clip_text_embedder.1} parent=51 // pred_fallthru
          _
        %v455 = vld [vmem:[#allocation8] sm:$0xff]
        %v456 = vld [vmem:[#allocation8 + $0x8] sm:$0xff]
        %v457 = vld [vmem:[%s436] sm:$0xff]
        %v458 = vld [vmem:[%s436 + $0x8] sm:$0xff]
        %459 = vadd.xlane.f32.xlu0 %v455
        %v460 = vpop.xlane.xlu0 %459
        %461 = vadd.xlane.f32.xlu0 %v456
        %v462 = vpop.xlane.xlu0 %461
        %v463 = vrcp.pop 128.0
        %v464 = vmul.f32 %v460, %v463
        %v465 = vmul.f32 %v462, %v463
        %v466 = vsub.f32 %v455, %v464
        %v467 = vsub.f32 %v456, %v465
        %v468 = vmul.f32 %v466, %v466
        %v469 = vmul.f32 %v467, %v467
        %470 = vadd.xlane.f32.xlu0 %v468
        %v471 = vpop.xlane.xlu0 %470
        %472 = vadd.xlane.f32.xlu0 %v469
        %v473 = vpop.xlane.xlu0 %472
        %v474 = vmul.f32 %v471, %v463
        %v475 = vmul.f32 %v473, %v463
        %v476 = vadd.f32 %v474, 1e-05
        %v477 = vadd.f32 %v475, 1e-05
        %v478 = vrsqrt.pop %v476
        %v479 = vrsqrt.pop %v477
        %v480 = vmul.f32 %v466, %v478
        %v481 = vmul.f32 %v467, %v479
        %v482 = vlaneseq
        %v483 = vshrl.u32 %v482, 7
        %v484 = vsub.s32 0, %v483
        %v485 = vrot.slane %v457, %v484
        %v486 = vmul.f32 %v480, %v485
        %v487 = vmul.f32 %v481, %v485
        %v488 = vlaneseq
        %v489 = vshrl.u32 %v488, 7
        %v490 = vsub.s32 1, %v489
        %v491 = vrot.slane %v457, %v490
        %v492 = vadd.f32 %v486, %v491
        %v493 = vadd.f32 %v487, %v491
        %v494 = vpack.c.bf16 %v493, %v492
        %v495 = vld [vmem:[%s362] sm:$0xff]
        %v496 = vld [vmem:[%s362 + $0x8] sm:$0xf]
        %v497 = vld [vmem:[%s362 + $0xc] sm:$0xff]
        %v498 = vld [vmem:[%s362 + $0x14] sm:$0xf]
        %v499 = vld [vmem:[%s362 + $0x18] sm:$0xff]
        %v500 = vld [vmem:[%s362 + $0x20] sm:$0xf]
        %v501 = vld [vmem:[%s362 + $0x24] sm:$0xff]
        %v502 = vld [vmem:[%s362 + $0x2c] sm:$0xf]
        %v503 = vld [vmem:[%s362 + $0x30] sm:$0xff]
        %v504 = vld [vmem:[%s362 + $0x38] sm:$0xf]
        %v505 = vld [vmem:[%s362 + $0x3c] sm:$0xff]
        %v506 = vld [vmem:[%s362 + $0x44] sm:$0xf]
        %v507 = vld [vmem:[%s362 + $0x48] sm:$0xff]
        %v508 = vld [vmem:[%s362 + $0x50] sm:$0xf]
        %v509 = vld [vmem:[%s362 + $0x54] sm:$0xff]
        %v510 = vld [vmem:[%s362 + $0x5c] sm:$0xf]
        %v511 = vld [vmem:[%s362 + $0x60] sm:$0xff]
        %v512 = vld [vmem:[%s362 + $0x68] sm:$0xf]
        %v513 = vld [vmem:[%s362 + $0x6c] sm:$0xff]
        %v514 = vld [vmem:[%s362 + $0x74] sm:$0xf]
        %v515 = vld [vmem:[%s362 + $0x78] sm:$0xff]
        %v516 = vld [vmem:[%s362 + $0x80] sm:$0xf]
        %v517 = vld [vmem:[%s362 + $0x84] sm:$0xff]
        %v518 = vld [vmem:[%s362 + $0x8c] sm:$0xf]
        %v519 = vld [vmem:[%s362 + $0x90] sm:$0xff]
        %v520 = vld [vmem:[%s362 + $0x98] sm:$0xf]
        %v521 = vld [vmem:[%s362 + $0x9c] sm:$0xff]
        %v522 = vld [vmem:[%s362 + $0xa4] sm:$0xf]
        %v523 = vld [vmem:[%s362 + $0xa8] sm:$0xff]
        %v524 = vld [vmem:[%s362 + $0xb0] sm:$0xf]
        %v525 = vld [vmem:[%s362 + $0xb4] sm:$0xff]
        %v526 = vld [vmem:[%s362 + $0xbc] sm:$0xf]
        %v559 = vunpack.c.l.b16 %v495
        %v560 = vunpack.c.h.b16 %v495
        %v561 = vunpack.c.l.b16 %v496
        %v562 = vunpack.c.l.b16 %v497
        %v563 = vunpack.c.h.b16 %v497
        %v564 = vunpack.c.l.b16 %v498
        %v565 = vunpack.c.l.b16 %v499
        %v566 = vunpack.c.h.b16 %v499
        %v567 = vunpack.c.l.b16 %v500
        %v568 = vunpack.c.l.b16 %v501
        %v569 = vunpack.c.h.b16 %v501
        %v570 = vunpack.c.l.b16 %v502
        %v571 = vunpack.c.l.b16 %v503
        %v572 = vunpack.c.h.b16 %v503
        %v573 = vunpack.c.l.b16 %v504
        %v574 = vunpack.c.l.b16 %v505
        %v575 = vunpack.c.h.b16 %v505
        %v576 = vunpack.c.l.b16 %v506
        %v577 = vunpack.c.l.b16 %v507
        %v578 = vunpack.c.h.b16 %v507
        %v579 = vunpack.c.l.b16 %v508
        %v580 = vunpack.c.l.b16 %v509
        %v581 = vunpack.c.h.b16 %v509
        %v582 = vunpack.c.l.b16 %v510
        %v583 = vunpack.c.l.b16 %v511
        %v584 = vunpack.c.h.b16 %v511
        %v585 = vunpack.c.l.b16 %v512
        %v586 = vunpack.c.l.b16 %v513
        %v587 = vunpack.c.h.b16 %v513
        %v588 = vunpack.c.l.b16 %v514
        %v589 = vunpack.c.l.b16 %v515
        %v590 = vunpack.c.h.b16 %v515
        %v591 = vunpack.c.l.b16 %v516
        %v592 = vunpack.c.l.b16 %v517
        %v593 = vunpack.c.h.b16 %v517
        %v594 = vunpack.c.l.b16 %v518
        %v595 = vunpack.c.l.b16 %v519
        %v596 = vunpack.c.h.b16 %v519
        %v597 = vunpack.c.l.b16 %v520
        %v598 = vunpack.c.l.b16 %v521
        %v599 = vunpack.c.h.b16 %v521
        %v600 = vunpack.c.l.b16 %v522
        %v601 = vunpack.c.l.b16 %v523
        %v602 = vunpack.c.h.b16 %v523
        %v603 = vunpack.c.l.b16 %v524
        %v604 = vunpack.c.l.b16 %v525
        %v605 = vunpack.c.h.b16 %v525
        %v606 = vunpack.c.l.b16 %v526
        %v607 = vpack.c.b16 %v562, %v559
        %v608 = vpack.c.b16 %v563, %v560
        %v609 = vpack.c.b16 %v564, %v561
        %v610 = vpack.c.b16 %v568, %v565
        %v611 = vpack.c.b16 %v569, %v566
        %v612 = vpack.c.b16 %v570, %v567
        %v613 = vpack.c.b16 %v574, %v571
        %v614 = vpack.c.b16 %v575, %v572
        %v615 = vpack.c.b16 %v576, %v573
        %v616 = vpack.c.b16 %v580, %v577
        %v617 = vpack.c.b16 %v581, %v578
        %v618 = vpack.c.b16 %v582, %v579
        %v619 = vpack.c.b16 %v586, %v583
        %v620 = vpack.c.b16 %v587, %v584
        %v621 = vpack.c.b16 %v588, %v585
        %v622 = vpack.c.b16 %v592, %v589
        %v623 = vpack.c.b16 %v593, %v590
        %v624 = vpack.c.b16 %v594, %v591
        %v625 = vpack.c.b16 %v598, %v595
        %v626 = vpack.c.b16 %v599, %v596
        %v627 = vpack.c.b16 %v600, %v597
        %v628 = vpack.c.b16 %v604, %v601
        %v629 = vpack.c.b16 %v605, %v602
        %v630 = vpack.c.b16 %v606, %v603
        %655 = vmatprep.subr.bf16.mxu0 %v608
        %656 = vmatpush1.bf16.msra.mxu0 %v607
        %657 = vmatprep.subr.bf16.mxu0 %v611
        %658 = vmatpush1.bf16.msra.mxu0 %v610
        %659 = vmatprep.subr.bf16.mxu0 %v614
        %660 = vmatpush1.bf16.msra.mxu0 %v613
        %661 = vmatprep.subr.bf16.mxu0 %v617
        %662 = vmatpush1.bf16.msra.mxu0 %v616
        %663 = vmatprep.subr.bf16.mxu0 %v620
        %664 = vmatpush1.bf16.msra.mxu0 %v619
        %665 = vmatprep.subr.bf16.mxu0 %v623
        %666 = vmatpush1.bf16.msra.mxu0 %v622
        %667 = vmatprep.subr.bf16.mxu0 %v626
        %668 = vmatpush1.bf16.msra.mxu0 %v625
        %669 = vmatprep.subr.bf16.mxu0 %v629
        %670 = vmatpush1.bf16.msra.mxu0 %v628
        %671 = vmatprep.subr.bf16.mxu0 0
        %672 = vmatpush1.bf16.msra.mxu0 0
        %673 = vmatprep.subr.bf16.mxu0 0
        %674 = vmatpush1.bf16.msra.mxu0 0
        %675 = vmatprep.subr.bf16.mxu0 0
        %676 = vmatpush1.bf16.msra.mxu0 0
        %677 = vmatprep.subr.bf16.mxu0 0
        %678 = vmatpush1.bf16.msra.mxu0 0
        %679 = vmatprep.subr.bf16.mxu0 0
        %680 = vmatpush1.bf16.msra.mxu0 0
        %681 = vmatprep.subr.bf16.mxu0 0
        %682 = vmatpush1.bf16.msra.mxu0 0
        %683 = vmatprep.subr.bf16.mxu0 0
        %684 = vmatpush1.bf16.msra.mxu0 0
        %685 = vmatprep.subr.bf16.mxu0 0
        %686 = vmatpush1.bf16.msra.mxu0 0
        %687 = vmatprep.mubr.bf16.mxu0 0
        %688 = vmatmul.mubr.bf16.gmra.mrb[0].mxu0 %v494
        %v689 = vpop.f32.mrb[0].mxu0
        %v690 = vadd.f32 0.0, %v689
        %v691 = vpop.f32.mrb[0].mxu0
        %v692 = vadd.f32 0.0, %v691
        %v693 = vpop.f32.mrb[0].mxu0
        %v694 = vadd.f32 0.0, %v693
        %v695 = vpop.f32.mrb[0].mxu0
        %v696 = vadd.f32 0.0, %v695
        %697 = vdwg.mxu0
        %698 = vmatprep.subr.bf16.mxu0 0
        %699 = vmatpush1.bf16.msra.mxu0 %v609
        %700 = vmatprep.subr.bf16.mxu0 0
        %701 = vmatpush1.bf16.msra.mxu0 %v612
        %702 = vmatprep.subr.bf16.mxu0 0
        %703 = vmatpush1.bf16.msra.mxu0 %v615
        %704 = vmatprep.subr.bf16.mxu0 0
        %705 = vmatpush1.bf16.msra.mxu0 %v618
        %706 = vmatprep.subr.bf16.mxu0 0
        %707 = vmatpush1.bf16.msra.mxu0 %v621
        %708 = vmatprep.subr.bf16.mxu0 0
        %709 = vmatpush1.bf16.msra.mxu0 %v624
        %710 = vmatprep.subr.bf16.mxu0 0
        %711 = vmatpush1.bf16.msra.mxu0 %v627
        %712 = vmatprep.subr.bf16.mxu0 0
        %713 = vmatpush1.bf16.msra.mxu0 %v630
        %714 = vmatprep.subr.bf16.mxu0 0
        %715 = vmatpush1.bf16.msra.mxu0 0
        %716 = vmatprep.subr.bf16.mxu0 0
        %717 = vmatpush1.bf16.msra.mxu0 0
        %718 = vmatprep.subr.bf16.mxu0 0
        %719 = vmatpush1.bf16.msra.mxu0 0
        %720 = vmatprep.subr.bf16.mxu0 0
        %721 = vmatpush1.bf16.msra.mxu0 0
        %722 = vmatprep.subr.bf16.mxu0 0
        %723 = vmatpush1.bf16.msra.mxu0 0
        %724 = vmatprep.subr.bf16.mxu0 0
        %725 = vmatpush1.bf16.msra.mxu0 0
        %726 = vmatprep.subr.bf16.mxu0 0
        %727 = vmatpush1.bf16.msra.mxu0 0
        %728 = vmatprep.subr.bf16.mxu0 0
        %729 = vmatpush1.bf16.msra.mxu0 0
        %730 = vmatprep.mubr.bf16.mxu0 0
        %731 = vmatmul.mubr.bf16.gmra.mrb[0].mxu0 %v494
        %v732 = vpop.f32.mrb[0].mxu0
        %v733 = vadd.f32 0.0, %v732
        %v734 = vpop.f32.mrb[0].mxu0
        %v735 = vpop.f32.mrb[0].mxu0
        %v736 = vadd.f32 0.0, %v735
        %v737 = vpop.f32.mrb[0].mxu0
        %738 = vdwg.mxu0
        %v739 = vlaneseq
        %v740 = vshrl.u32 %v739, 7
        %v741 = vsub.s32 6, %v740
        %v742 = vrot.slane %v457, %v741
        %v743 = vadd.f32 %v690, %v742
        %v744 = vadd.f32 %v694, %v742
        %v745 = vlaneseq
        %v746 = vshrl.u32 %v745, 7
        %v747 = vsub.s32 7, %v746
        %v748 = vrot.slane %v457, %v747
        %v749 = vadd.f32 %v692, %v748
        %v750 = vadd.f32 %v696, %v748
        %v751 = vlaneseq
        %v752 = vshrl.u32 %v751, 7
        %v753 = vsub.s32 0, %v752
        %v754 = vrot.slane %v458, %v753
        %v755 = vadd.f32 %v733, %v754
        %v756 = vadd.f32 %v736, %v754
        %v757 = vld [vmem:[%s1] sm:$0xff]
        %vm758 = vcmask 261120
        %v760 = vsel %vm758, %v743, 0
        %v763 = vsel %vm758, %v749, 0
        %765 = vmatprep.subr.mxu0 0.0
        %766 = vmatpush1.xpose.msra.mxu0 %v763
        %767 = vmatprep.subr.mxu0 0.0
        %768 = vmatpush1.xpose.msra.mxu0 0.0
        %769 = vmatprep.subr.mxu0 0.0
        %770 = vmatpush1.xpose.msra.mxu0 0.0
        %771 = vmatprep.subr.mxu0 0.0
        %772 = vmatpush1.xpose.msra.mxu0 0.0
        %773 = vmatprep.subr.mxu0 0.0
        %774 = vmatpush1.xpose.msra.mxu0 0.0
        %775 = vmatprep.subr.mxu0 0.0
        %776 = vmatpush1.xpose.msra.mxu0 0.0
        %777 = vmatprep.subr.mxu0 0.0
        %778 = vmatpush1.xpose.msra.mxu0 0.0
        %779 = vmatprep.subr.mxu0 0.0
        %780 = vmatpush1.xpose.msra.mxu0 0.0
        %781 = vmatprep.subr.mxu0 0.0
        %782 = vmatpush1.xpose.msra.mxu0 0.0
        %783 = vmatprep.subr.mxu0 0.0
        %784 = vmatpush1.xpose.msra.mxu0 0.0
        %785 = vmatprep.subr.mxu0 0.0
        %786 = vmatpush1.xpose.msra.mxu0 0.0
        %787 = vmatprep.subr.mxu0 0.0
        %788 = vmatpush1.xpose.msra.mxu0 0.0
        %789 = vmatprep.subr.mxu0 0.0
        %790 = vmatpush1.xpose.msra.mxu0 0.0
        %791 = vmatprep.subr.mxu0 0.0
        %792 = vmatpush1.xpose.msra.mxu0 0.0
        %793 = vmatprep.subr.mxu0 0.0
        %794 = vmatpush1.xpose.msra.mxu0 0.0
        %795 = vmatprep.subr.mxu0 0.0
        %796 = vmatpush1.xpose.msra.mxu0 0.0
        %797 = vmatprep.subr.mxu0 0.0
        %798 = vmatpush1.xpose.msra.mxu0 0.0
        %799 = vmatprep.subr.mxu0 0.0
        %800 = vmatpush1.xpose.msra.mxu0 0.0
        %801 = vmatprep.subr.mxu0 0.0
        %802 = vmatpush1.xpose.msra.mxu0 0.0
        %803 = vmatprep.subr.mxu0 0.0
        %804 = vmatpush1.xpose.msra.mxu0 0.0
        %805 = vmatprep.subr.mxu0 0.0
        %806 = vmatpush1.xpose.msra.mxu0 0.0
        %807 = vmatprep.subr.mxu0 0.0
        %808 = vmatpush1.xpose.msra.mxu0 0.0
        %809 = vmatprep.subr.mxu0 0.0
        %810 = vmatpush1.xpose.msra.mxu0 0.0
        %811 = vmatprep.subr.mxu0 0.0
        %812 = vmatpush1.xpose.msra.mxu0 0.0
        %813 = vmatprep.subr.mxu0 0.0
        %814 = vmatpush1.xpose.msra.mxu0 0.0
        %815 = vmatprep.subr.mxu0 0.0
        %816 = vmatpush1.xpose.msra.mxu0 0.0
        %817 = vmatprep.subr.mxu0 0.0
        %818 = vmatpush1.xpose.msra.mxu0 0.0
        %819 = vmatprep.subr.mxu0 0.0
        %820 = vmatpush1.xpose.msra.mxu0 0.0
        %821 = vmatprep.subr.mxu0 0.0
        %822 = vmatpush1.xpose.msra.mxu0 0.0
        %823 = vmatprep.subr.mxu0 0.0
        %824 = vmatpush1.xpose.msra.mxu0 0.0
        %825 = vmatprep.subr.mxu0 0.0
        %826 = vmatpush1.xpose.msra.mxu0 0.0
        %827 = vmatprep.subr.mxu0 0.0
        %828 = vmatpush1.xpose.msra.mxu0 0.0
        %829 = vmatprep.mubr.f32.mxu0 0.0
        %830 = vmatmul.mubr.f32.gmra.mrb[0].mxu0 %v760
        %v831 = vpop.f32.mrb[0].mxu0
        %v832 = vadd.f32 %v757, %v831
        %v833 = vpop.f32.mrb[0].mxu0
        %834 = vdwg.mxu0
        %v836 = vsel %vm758, %v744, 0
        %v839 = vsel %vm758, %v750, 0
        %841 = vmatprep.subr.mxu0 0.0
        %842 = vmatpush1.xpose.msra.mxu0 %v839
        %843 = vmatprep.subr.mxu0 0.0
        %844 = vmatpush1.xpose.msra.mxu0 0.0
        %845 = vmatprep.subr.mxu0 0.0
        %846 = vmatpush1.xpose.msra.mxu0 0.0
        %847 = vmatprep.subr.mxu0 0.0
        %848 = vmatpush1.xpose.msra.mxu0 0.0
        %849 = vmatprep.subr.mxu0 0.0
        %850 = vmatpush1.xpose.msra.mxu0 0.0
        %851 = vmatprep.subr.mxu0 0.0
        %852 = vmatpush1.xpose.msra.mxu0 0.0
        %853 = vmatprep.subr.mxu0 0.0
        %854 = vmatpush1.xpose.msra.mxu0 0.0
        %855 = vmatprep.subr.mxu0 0.0
        %856 = vmatpush1.xpose.msra.mxu0 0.0
        %857 = vmatprep.subr.mxu0 0.0
        %858 = vmatpush1.xpose.msra.mxu0 0.0
        %859 = vmatprep.subr.mxu0 0.0
        %860 = vmatpush1.xpose.msra.mxu0 0.0
        %861 = vmatprep.subr.mxu0 0.0
        %862 = vmatpush1.xpose.msra.mxu0 0.0
        %863 = vmatprep.subr.mxu0 0.0
        %864 = vmatpush1.xpose.msra.mxu0 0.0
        %865 = vmatprep.subr.mxu0 0.0
        %866 = vmatpush1.xpose.msra.mxu0 0.0
        %867 = vmatprep.subr.mxu0 0.0
        %868 = vmatpush1.xpose.msra.mxu0 0.0
        %869 = vmatprep.subr.mxu0 0.0
        %870 = vmatpush1.xpose.msra.mxu0 0.0
        %871 = vmatprep.subr.mxu0 0.0
        %872 = vmatpush1.xpose.msra.mxu0 0.0
        %873 = vmatprep.subr.mxu0 0.0
        %874 = vmatpush1.xpose.msra.mxu0 0.0
        %875 = vmatprep.subr.mxu0 0.0
        %876 = vmatpush1.xpose.msra.mxu0 0.0
        %877 = vmatprep.subr.mxu0 0.0
        %878 = vmatpush1.xpose.msra.mxu0 0.0
        %879 = vmatprep.subr.mxu0 0.0
        %880 = vmatpush1.xpose.msra.mxu0 0.0
        %881 = vmatprep.subr.mxu0 0.0
        %882 = vmatpush1.xpose.msra.mxu0 0.0
        %883 = vmatprep.subr.mxu0 0.0
        %884 = vmatpush1.xpose.msra.mxu0 0.0
        %885 = vmatprep.subr.mxu0 0.0
        %886 = vmatpush1.xpose.msra.mxu0 0.0
        %887 = vmatprep.subr.mxu0 0.0
        %888 = vmatpush1.xpose.msra.mxu0 0.0
        %889 = vmatprep.subr.mxu0 0.0
        %890 = vmatpush1.xpose.msra.mxu0 0.0
        %891 = vmatprep.subr.mxu0 0.0
        %892 = vmatpush1.xpose.msra.mxu0 0.0
        %893 = vmatprep.subr.mxu0 0.0
        %894 = vmatpush1.xpose.msra.mxu0 0.0
        %895 = vmatprep.subr.mxu0 0.0
        %896 = vmatpush1.xpose.msra.mxu0 0.0
        %897 = vmatprep.subr.mxu0 0.0
        %898 = vmatpush1.xpose.msra.mxu0 0.0
        %899 = vmatprep.subr.mxu0 0.0
        %900 = vmatpush1.xpose.msra.mxu0 0.0
        %901 = vmatprep.subr.mxu0 0.0
        %902 = vmatpush1.xpose.msra.mxu0 0.0
        %903 = vmatprep.subr.mxu0 0.0
        %904 = vmatpush1.xpose.msra.mxu0 0.0
        %905 = vmatprep.mubr.f32.mxu0 0.0
        %906 = vmatmul.mubr.f32.gmra.mrb[0].mxu0 %v836
        %v907 = vpop.f32.mrb[0].mxu0
        %v908 = vadd.f32 %v757, %v907
        %v909 = vpop.f32.mrb[0].mxu0
        %910 = vdwg.mxu0
        %vm911 = vcmask 64512
        %v912 = vsel %vm911, %v832, -inf
        %913 = vmax.xlane.f32.xlu0 %v912
        %v914 = vpop.xlane.xlu0 %913
        %v915 = vsel %vm911, %v908, -inf
        %916 = vmax.xlane.f32.xlu0 %v915
        %v917 = vpop.xlane.xlu0 %916
        %v918 = vsub.f32 %v832, %v914
        %v919 = vsub.f32 %v908, %v917
        %v920 = vmul.f32 %v918, 1.442695
        %v921 = vpow.pop %v920
        %v922 = vmul.f32 %v919, 1.442695
        %v923 = vpow.pop %v922
        %v924 = vsel %vm911, %v921, 0.0
        %925 = vadd.xlane.f32.xlu0 %v924
        %v926 = vpop.xlane.xlu0 %925
        %v927 = vsel %vm911, %v923, 0.0
        %928 = vadd.xlane.f32.xlu0 %v927
        %v929 = vpop.xlane.xlu0 %928
        %v930 = vrcp.pop %v926
        %v931 = vrcp.pop %v929
        %v932 = vmul.f32 %v921, %v930
        %v933 = vmul.f32 %v923, %v931
        %v935 = vsel %vm911, %v932, 0
        %937 = vmatprep.subr.mxu0 0.0
        %938 = vmatpush1.msra.mxu0 %v755
        %939 = vmatprep.subr.mxu0 0.0
        %940 = vmatpush1.msra.mxu0 0.0
        %941 = vmatprep.subr.mxu0 0.0
        %942 = vmatpush1.msra.mxu0 0.0
        %943 = vmatprep.subr.mxu0 0.0
        %944 = vmatpush1.msra.mxu0 0.0
        %945 = vmatprep.subr.mxu0 0.0
        %946 = vmatpush1.msra.mxu0 0.0
        %947 = vmatprep.subr.mxu0 0.0
        %948 = vmatpush1.msra.mxu0 0.0
        %949 = vmatprep.subr.mxu0 0.0
        %950 = vmatpush1.msra.mxu0 0.0
        %951 = vmatprep.subr.mxu0 0.0
        %952 = vmatpush1.msra.mxu0 0.0
        %953 = vmatprep.subr.mxu0 0.0
        %954 = vmatpush1.msra.mxu0 0.0
        %955 = vmatprep.subr.mxu0 0.0
        %956 = vmatpush1.msra.mxu0 0.0
        %957 = vmatprep.subr.mxu0 0.0
        %958 = vmatpush1.msra.mxu0 0.0
        %959 = vmatprep.subr.mxu0 0.0
        %960 = vmatpush1.msra.mxu0 0.0
        %961 = vmatprep.subr.mxu0 0.0
        %962 = vmatpush1.msra.mxu0 0.0
        %963 = vmatprep.subr.mxu0 0.0
        %964 = vmatpush1.msra.mxu0 0.0
        %965 = vmatprep.subr.mxu0 0.0
        %966 = vmatpush1.msra.mxu0 0.0
        %967 = vmatprep.subr.mxu0 0.0
        %968 = vmatpush1.msra.mxu0 0.0
        %969 = vmatprep.subr.mxu0 0.0
        %970 = vmatpush1.msra.mxu0 0.0
        %971 = vmatprep.subr.mxu0 0.0
        %972 = vmatpush1.msra.mxu0 0.0
        %973 = vmatprep.subr.mxu0 0.0
        %974 = vmatpush1.msra.mxu0 0.0
        %975 = vmatprep.subr.mxu0 0.0
        %976 = vmatpush1.msra.mxu0 0.0
        %977 = vmatprep.subr.mxu0 0.0
        %978 = vmatpush1.msra.mxu0 0.0
        %979 = vmatprep.subr.mxu0 0.0
        %980 = vmatpush1.msra.mxu0 0.0
        %981 = vmatprep.subr.mxu0 0.0
        %982 = vmatpush1.msra.mxu0 0.0
        %983 = vmatprep.subr.mxu0 0.0
        %984 = vmatpush1.msra.mxu0 0.0
        %985 = vmatprep.subr.mxu0 0.0
        %986 = vmatpush1.msra.mxu0 0.0
        %987 = vmatprep.subr.mxu0 0.0
        %988 = vmatpush1.msra.mxu0 0.0
        %989 = vmatprep.subr.mxu0 0.0
        %990 = vmatpush1.msra.mxu0 0.0
        %991 = vmatprep.subr.mxu0 0.0
        %992 = vmatpush1.msra.mxu0 0.0
        %993 = vmatprep.subr.mxu0 0.0
        %994 = vmatpush1.msra.mxu0 0.0
        %995 = vmatprep.subr.mxu0 0.0
        %996 = vmatpush1.msra.mxu0 0.0
        %997 = vmatprep.subr.mxu0 0.0
        %998 = vmatpush1.msra.mxu0 0.0
        %999 = vmatprep.subr.mxu0 0.0
        %1000 = vmatpush1.msra.mxu0 0.0
        %1001 = vmatprep.mubr.f32.mxu0 0.0
        %1002 = vmatmul.mubr.f32.gmra.mrb[0].mxu0 %v935
        %v1003 = vpop.f32.mrb[0].mxu0
        %v1004 = vadd.f32 0.0, %v1003
        %v1005 = vpop.f32.mrb[0].mxu0
        %1006 = vdwg.mxu0
        %v1008 = vsel %vm911, %v933, 0
        %1010 = vmatprep.subr.mxu0 0.0
        %1011 = vmatpush1.msra.mxu0 %v756
        %1012 = vmatprep.subr.mxu0 0.0
        %1013 = vmatpush1.msra.mxu0 0.0
        %1014 = vmatprep.subr.mxu0 0.0
        %1015 = vmatpush1.msra.mxu0 0.0
        %1016 = vmatprep.subr.mxu0 0.0
        %1017 = vmatpush1.msra.mxu0 0.0
        %1018 = vmatprep.subr.mxu0 0.0
        %1019 = vmatpush1.msra.mxu0 0.0
        %1020 = vmatprep.subr.mxu0 0.0
        %1021 = vmatpush1.msra.mxu0 0.0
        %1022 = vmatprep.subr.mxu0 0.0
        %1023 = vmatpush1.msra.mxu0 0.0
        %1024 = vmatprep.subr.mxu0 0.0
        %1025 = vmatpush1.msra.mxu0 0.0
        %1026 = vmatprep.subr.mxu0 0.0
        %1027 = vmatpush1.msra.mxu0 0.0
        %1028 = vmatprep.subr.mxu0 0.0
        %1029 = vmatpush1.msra.mxu0 0.0
        %1030 = vmatprep.subr.mxu0 0.0
        %1031 = vmatpush1.msra.mxu0 0.0
        %1032 = vmatprep.subr.mxu0 0.0
        %1033 = vmatpush1.msra.mxu0 0.0
        %1034 = vmatprep.subr.mxu0 0.0
        %1035 = vmatpush1.msra.mxu0 0.0
        %1036 = vmatprep.subr.mxu0 0.0
        %1037 = vmatpush1.msra.mxu0 0.0
        %1038 = vmatprep.subr.mxu0 0.0
        %1039 = vmatpush1.msra.mxu0 0.0
        %1040 = vmatprep.subr.mxu0 0.0
        %1041 = vmatpush1.msra.mxu0 0.0
        %1042 = vmatprep.subr.mxu0 0.0
        %1043 = vmatpush1.msra.mxu0 0.0
        %1044 = vmatprep.subr.mxu0 0.0
        %1045 = vmatpush1.msra.mxu0 0.0
        %1046 = vmatprep.subr.mxu0 0.0
        %1047 = vmatpush1.msra.mxu0 0.0
        %1048 = vmatprep.subr.mxu0 0.0
        %1049 = vmatpush1.msra.mxu0 0.0
        %1050 = vmatprep.subr.mxu0 0.0
        %1051 = vmatpush1.msra.mxu0 0.0
        %1052 = vmatprep.subr.mxu0 0.0
        %1053 = vmatpush1.msra.mxu0 0.0
        %1054 = vmatprep.subr.mxu0 0.0
        %1055 = vmatpush1.msra.mxu0 0.0
        %1056 = vmatprep.subr.mxu0 0.0
        %1057 = vmatpush1.msra.mxu0 0.0
        %1058 = vmatprep.subr.mxu0 0.0
        %1059 = vmatpush1.msra.mxu0 0.0
        %1060 = vmatprep.subr.mxu0 0.0
        %1061 = vmatpush1.msra.mxu0 0.0
        %1062 = vmatprep.subr.mxu0 0.0
        %1063 = vmatpush1.msra.mxu0 0.0
        %1064 = vmatprep.subr.mxu0 0.0
        %1065 = vmatpush1.msra.mxu0 0.0
        %1066 = vmatprep.subr.mxu0 0.0
        %1067 = vmatpush1.msra.mxu0 0.0
        %1068 = vmatprep.subr.mxu0 0.0
        %1069 = vmatpush1.msra.mxu0 0.0
        %1070 = vmatprep.subr.mxu0 0.0
        %1071 = vmatpush1.msra.mxu0 0.0
        %1072 = vmatprep.subr.mxu0 0.0
        %1073 = vmatpush1.msra.mxu0 0.0
        %1074 = vmatprep.mubr.f32.mxu0 0.0
        %1075 = vmatmul.mubr.f32.gmra.mrb[0].mxu0 %v1008
        %v1076 = vpop.f32.mrb[0].mxu0
        %v1077 = vadd.f32 0.0, %v1076
        %v1078 = vpop.f32.mrb[0].mxu0
        %1079 = vdwg.mxu0
        %1080 = vrot.lane.b32.xlu0 %v743, 96
        %v1081 = vpop.permute.xlu0 %1080
        %1082 = vrot.lane.b32.xlu0 %v749, 96
        %v1083 = vpop.permute.xlu0 %1082
        %v1084 = vsel %vm758, %v1081, 0
        %v1086 = vsel %vm758, %v1083, 0
        %1088 = vmatprep.subr.mxu0 0.0
        %1089 = vmatpush1.xpose.msra.mxu0 %v1086
        %1090 = vmatprep.subr.mxu0 0.0
        %1091 = vmatpush1.xpose.msra.mxu0 0.0
        %1092 = vmatprep.subr.mxu0 0.0
        %1093 = vmatpush1.xpose.msra.mxu0 0.0
        %1094 = vmatprep.subr.mxu0 0.0
        %1095 = vmatpush1.xpose.msra.mxu0 0.0
        %1096 = vmatprep.subr.mxu0 0.0
        %1097 = vmatpush1.xpose.msra.mxu0 0.0
        %1098 = vmatprep.subr.mxu0 0.0
        %1099 = vmatpush1.xpose.msra.mxu0 0.0
        %1100 = vmatprep.subr.mxu0 0.0
        %1101 = vmatpush1.xpose.msra.mxu0 0.0
        %1102 = vmatprep.subr.mxu0 0.0
        %1103 = vmatpush1.xpose.msra.mxu0 0.0
        %1104 = vmatprep.subr.mxu0 0.0
        %1105 = vmatpush1.xpose.msra.mxu0 0.0
        %1106 = vmatprep.subr.mxu0 0.0
        %1107 = vmatpush1.xpose.msra.mxu0 0.0
        %1108 = vmatprep.subr.mxu0 0.0
        %1109 = vmatpush1.xpose.msra.mxu0 0.0
        %1110 = vmatprep.subr.mxu0 0.0
        %1111 = vmatpush1.xpose.msra.mxu0 0.0
        %1112 = vmatprep.subr.mxu0 0.0
        %1113 = vmatpush1.xpose.msra.mxu0 0.0
        %1114 = vmatprep.subr.mxu0 0.0
        %1115 = vmatpush1.xpose.msra.mxu0 0.0
        %1116 = vmatprep.subr.mxu0 0.0
        %1117 = vmatpush1.xpose.msra.mxu0 0.0
        %1118 = vmatprep.subr.mxu0 0.0
        %1119 = vmatpush1.xpose.msra.mxu0 0.0
        %1120 = vmatprep.subr.mxu0 0.0
        %1121 = vmatpush1.xpose.msra.mxu0 0.0
        %1122 = vmatprep.subr.mxu0 0.0
        %1123 = vmatpush1.xpose.msra.mxu0 0.0
        %1124 = vmatprep.subr.mxu0 0.0
        %1125 = vmatpush1.xpose.msra.mxu0 0.0
        %1126 = vmatprep.subr.mxu0 0.0
        %1127 = vmatpush1.xpose.msra.mxu0 0.0
        %1128 = vmatprep.subr.mxu0 0.0
        %1129 = vmatpush1.xpose.msra.mxu0 0.0
        %1130 = vmatprep.subr.mxu0 0.0
        %1131 = vmatpush1.xpose.msra.mxu0 0.0
        %1132 = vmatprep.subr.mxu0 0.0
        %1133 = vmatpush1.xpose.msra.mxu0 0.0
        %1134 = vmatprep.subr.mxu0 0.0
        %1135 = vmatpush1.xpose.msra.mxu0 0.0
        %1136 = vmatprep.subr.mxu0 0.0
        %1137 = vmatpush1.xpose.msra.mxu0 0.0
        %1138 = vmatprep.subr.mxu0 0.0
        %1139 = vmatpush1.xpose.msra.mxu0 0.0
        %1140 = vmatprep.subr.mxu0 0.0
        %1141 = vmatpush1.xpose.msra.mxu0 0.0
        %1142 = vmatprep.subr.mxu0 0.0
        %1143 = vmatpush1.xpose.msra.mxu0 0.0
        %1144 = vmatprep.subr.mxu0 0.0
        %1145 = vmatpush1.xpose.msra.mxu0 0.0
        %1146 = vmatprep.subr.mxu0 0.0
        %1147 = vmatpush1.xpose.msra.mxu0 0.0
        %1148 = vmatprep.subr.mxu0 0.0
        %1149 = vmatpush1.xpose.msra.mxu0 0.0
        %1150 = vmatprep.subr.mxu0 0.0
        %1151 = vmatpush1.xpose.msra.mxu0 0.0
        %1152 = vmatprep.mubr.f32.mxu0 0.0
        %1153 = vmatmul.mubr.f32.gmra.mrb[0].mxu0 %v1084
        %v1154 = vpop.f32.mrb[0].mxu0
        %v1155 = vadd.f32 %v757, %v1154
        %v1156 = vpop.f32.mrb[0].mxu0
        %1157 = vdwg.mxu0
        %1158 = vrot.lane.b32.xlu0 %v744, 96
        %v1159 = vpop.permute.xlu0 %1158
        %1160 = vrot.lane.b32.xlu0 %v750, 96
        %v1161 = vpop.permute.xlu0 %1160
        %v1162 = vsel %vm758, %v1159, 0
        %v1164 = vsel %vm758, %v1161, 0
        %1166 = vmatprep.subr.mxu0 0.0
        %1167 = vmatpush1.xpose.msra.mxu0 %v1164
        %1168 = vmatprep.subr.mxu0 0.0
        %1169 = vmatpush1.xpose.msra.mxu0 0.0
        %1170 = vmatprep.subr.mxu0 0.0
        %1171 = vmatpush1.xpose.msra.mxu0 0.0
        %1172 = vmatprep.subr.mxu0 0.0
        %1173 = vmatpush1.xpose.msra.mxu0 0.0
        %1174 = vmatprep.subr.mxu0 0.0
        %1175 = vmatpush1.xpose.msra.mxu0 0.0
        %1176 = vmatprep.subr.mxu0 0.0
        %1177 = vmatpush1.xpose.msra.mxu0 0.0
        %1178 = vmatprep.subr.mxu0 0.0
        %1179 = vmatpush1.xpose.msra.mxu0 0.0
        %1180 = vmatprep.subr.mxu0 0.0
        %1181 = vmatpush1.xpose.msra.mxu0 0.0
        %1182 = vmatprep.subr.mxu0 0.0
        %1183 = vmatpush1.xpose.msra.mxu0 0.0
        %1184 = vmatprep.subr.mxu0 0.0
        %1185 = vmatpush1.xpose.msra.mxu0 0.0
        %1186 = vmatprep.subr.mxu0 0.0
        %1187 = vmatpush1.xpose.msra.mxu0 0.0
        %1188 = vmatprep.subr.mxu0 0.0
        %1189 = vmatpush1.xpose.msra.mxu0 0.0
        %1190 = vmatprep.subr.mxu0 0.0
        %1191 = vmatpush1.xpose.msra.mxu0 0.0
        %1192 = vmatprep.subr.mxu0 0.0
        %1193 = vmatpush1.xpose.msra.mxu0 0.0
        %1194 = vmatprep.subr.mxu0 0.0
        %1195 = vmatpush1.xpose.msra.mxu0 0.0
        %1196 = vmatprep.subr.mxu0 0.0
        %1197 = vmatpush1.xpose.msra.mxu0 0.0
        %1198 = vmatprep.subr.mxu0 0.0
        %1199 = vmatpush1.xpose.msra.mxu0 0.0
        %1200 = vmatprep.subr.mxu0 0.0
        %1201 = vmatpush1.xpose.msra.mxu0 0.0
        %1202 = vmatprep.subr.mxu0 0.0
        %1203 = vmatpush1.xpose.msra.mxu0 0.0
        %1204 = vmatprep.subr.mxu0 0.0
        %1205 = vmatpush1.xpose.msra.mxu0 0.0
        %1206 = vmatprep.subr.mxu0 0.0
        %1207 = vmatpush1.xpose.msra.mxu0 0.0
        %1208 = vmatprep.subr.mxu0 0.0
        %1209 = vmatpush1.xpose.msra.mxu0 0.0
        %1210 = vmatprep.subr.mxu0 0.0
        %1211 = vmatpush1.xpose.msra.mxu0 0.0
        %1212 = vmatprep.subr.mxu0 0.0
        %1213 = vmatpush1.xpose.msra.mxu0 0.0
        %1214 = vmatprep.subr.mxu0 0.0
        %1215 = vmatpush1.xpose.msra.mxu0 0.0
        %1216 = vmatprep.subr.mxu0 0.0
        %1217 = vmatpush1.xpose.msra.mxu0 0.0
        %1218 = vmatprep.subr.mxu0 0.0
        %1219 = vmatpush1.xpose.msra.mxu0 0.0
        %1220 = vmatprep.subr.mxu0 0.0
        %1221 = vmatpush1.xpose.msra.mxu0 0.0
        %1222 = vmatprep.subr.mxu0 0.0
        %1223 = vmatpush1.xpose.msra.mxu0 0.0
        %1224 = vmatprep.subr.mxu0 0.0
        %1225 = vmatpush1.xpose.msra.mxu0 0.0
        %1226 = vmatprep.subr.mxu0 0.0
        %1227 = vmatpush1.xpose.msra.mxu0 0.0
        %1228 = vmatprep.subr.mxu0 0.0
        %1229 = vmatpush1.xpose.msra.mxu0 0.0
        %1230 = vmatprep.mubr.f32.mxu0 0.0
        %1231 = vmatmul.mubr.f32.gmra.mrb[0].mxu0 %v1162
        %v1232 = vpop.f32.mrb[0].mxu0
        %v1233 = vadd.f32 %v757, %v1232
        %v1234 = vpop.f32.mrb[0].mxu0
        %1235 = vdwg.mxu0
        %v1236 = vsel %vm911, %v1155, -inf
        %1237 = vmax.xlane.f32.xlu0 %v1236
        %v1238 = vpop.xlane.xlu0 %1237
        %v1239 = vsel %vm911, %v1233, -inf
        %1240 = vmax.xlane.f32.xlu0 %v1239
        %v1241 = vpop.xlane.xlu0 %1240
        %v1242 = vsub.f32 %v1155, %v1238
        %v1243 = vsub.f32 %v1233, %v1241
        %v1244 = vmul.f32 %v1242, 1.442695
        %v1245 = vpow.pop %v1244
        %v1246 = vmul.f32 %v1243, 1.442695
        %v1247 = vpow.pop %v1246
        %v1248 = vsel %vm911, %v1245, 0.0
        %1249 = vadd.xlane.f32.xlu0 %v1248
        %v1250 = vpop.xlane.xlu0 %1249
        %v1251 = vsel %vm911, %v1247, 0.0
        %1252 = vadd.xlane.f32.xlu0 %v1251
        %v1253 = vpop.xlane.xlu0 %1252
        %v1254 = vrcp.pop %v1250
        %v1255 = vrcp.pop %v1253
        %v1256 = vmul.f32 %v1245, %v1254
        %v1257 = vmul.f32 %v1247, %v1255
        %1259 = vrot.lane.b32.xlu0 %v755, 96
        %v1260 = vpop.permute.xlu0 %1259
        %v1263 = vsel %vm911, %v1256, 0
        %1265 = vmatprep.subr.mxu0 0.0
        %1266 = vmatpush1.msra.mxu0 %v1260
        %1267 = vmatprep.subr.mxu0 0.0
        %1268 = vmatpush1.msra.mxu0 0.0
        %1269 = vmatprep.subr.mxu0 0.0
        %1270 = vmatpush1.msra.mxu0 0.0
        %1271 = vmatprep.subr.mxu0 0.0
        %1272 = vmatpush1.msra.mxu0 0.0
        %1273 = vmatprep.subr.mxu0 0.0
        %1274 = vmatpush1.msra.mxu0 0.0
        %1275 = vmatprep.subr.mxu0 0.0
        %1276 = vmatpush1.msra.mxu0 0.0
        %1277 = vmatprep.subr.mxu0 0.0
        %1278 = vmatpush1.msra.mxu0 0.0
        %1279 = vmatprep.subr.mxu0 0.0
        %1280 = vmatpush1.msra.mxu0 0.0
        %1281 = vmatprep.subr.mxu0 0.0
        %1282 = vmatpush1.msra.mxu0 0.0
        %1283 = vmatprep.subr.mxu0 0.0
        %1284 = vmatpush1.msra.mxu0 0.0
        %1285 = vmatprep.subr.mxu0 0.0
        %1286 = vmatpush1.msra.mxu0 0.0
        %1287 = vmatprep.subr.mxu0 0.0
        %1288 = vmatpush1.msra.mxu0 0.0
        %1289 = vmatprep.subr.mxu0 0.0
        %1290 = vmatpush1.msra.mxu0 0.0
        %1291 = vmatprep.subr.mxu0 0.0
        %1292 = vmatpush1.msra.mxu0 0.0
        %1293 = vmatprep.subr.mxu0 0.0
        %1294 = vmatpush1.msra.mxu0 0.0
        %1295 = vmatprep.subr.mxu0 0.0
        %1296 = vmatpush1.msra.mxu0 0.0
        %1297 = vmatprep.subr.mxu0 0.0
        %1298 = vmatpush1.msra.mxu0 0.0
        %1299 = vmatprep.subr.mxu0 0.0
        %1300 = vmatpush1.msra.mxu0 0.0
        %1301 = vmatprep.subr.mxu0 0.0
        %1302 = vmatpush1.msra.mxu0 0.0
        %1303 = vmatprep.subr.mxu0 0.0
        %1304 = vmatpush1.msra.mxu0 0.0
        %1305 = vmatprep.subr.mxu0 0.0
        %1306 = vmatpush1.msra.mxu0 0.0
        %1307 = vmatprep.subr.mxu0 0.0
        %1308 = vmatpush1.msra.mxu0 0.0
        %1309 = vmatprep.subr.mxu0 0.0
        %1310 = vmatpush1.msra.mxu0 0.0
        %1311 = vmatprep.subr.mxu0 0.0
        %1312 = vmatpush1.msra.mxu0 0.0
        %1313 = vmatprep.subr.mxu0 0.0
        %1314 = vmatpush1.msra.mxu0 0.0
        %1315 = vmatprep.subr.mxu0 0.0
        %1316 = vmatpush1.msra.mxu0 0.0
        %1317 = vmatprep.subr.mxu0 0.0
        %1318 = vmatpush1.msra.mxu0 0.0
        %1319 = vmatprep.subr.mxu0 0.0
        %1320 = vmatpush1.msra.mxu0 0.0
        %1321 = vmatprep.subr.mxu0 0.0
        %1322 = vmatpush1.msra.mxu0 0.0
        %1323 = vmatprep.subr.mxu0 0.0
        %1324 = vmatpush1.msra.mxu0 0.0
        %1325 = vmatprep.subr.mxu0 0.0
        %1326 = vmatpush1.msra.mxu0 0.0
        %1327 = vmatprep.subr.mxu0 0.0
        %1328 = vmatpush1.msra.mxu0 0.0
        %1329 = vmatprep.mubr.f32.mxu0 0.0
        %1330 = vmatmul.mubr.f32.gmra.mrb[0].mxu0 %v1263
        %v1331 = vpop.f32.mrb[0].mxu0
        %v1332 = vadd.f32 0.0, %v1331
        %v1333 = vpop.f32.mrb[0].mxu0
        %1334 = vdwg.mxu0
        %1336 = vrot.lane.b32.xlu0 %v756, 96
        %v1337 = vpop.permute.xlu0 %1336
        %v1340 = vsel %vm911, %v1257, 0
        %1342 = vmatprep.subr.mxu0 0.0
        %1343 = vmatpush1.msra.mxu0 %v1337
        %1344 = vmatprep.subr.mxu0 0.0
        %1345 = vmatpush1.msra.mxu0 0.0
        %1346 = vmatprep.subr.mxu0 0.0
        %1347 = vmatpush1.msra.mxu0 0.0
        %1348 = vmatprep.subr.mxu0 0.0
        %1349 = vmatpush1.msra.mxu0 0.0
        %1350 = vmatprep.subr.mxu0 0.0
        %1351 = vmatpush1.msra.mxu0 0.0
        %1352 = vmatprep.subr.mxu0 0.0
        %1353 = vmatpush1.msra.mxu0 0.0
        %1354 = vmatprep.subr.mxu0 0.0
        %1355 = vmatpush1.msra.mxu0 0.0
        %1356 = vmatprep.subr.mxu0 0.0
        %1357 = vmatpush1.msra.mxu0 0.0
        %1358 = vmatprep.subr.mxu0 0.0
        %1359 = vmatpush1.msra.mxu0 0.0
        %1360 = vmatprep.subr.mxu0 0.0
        %1361 = vmatpush1.msra.mxu0 0.0
        %1362 = vmatprep.subr.mxu0 0.0
        %1363 = vmatpush1.msra.mxu0 0.0
        %1364 = vmatprep.subr.mxu0 0.0
        %1365 = vmatpush1.msra.mxu0 0.0
        %1366 = vmatprep.subr.mxu0 0.0
        %1367 = vmatpush1.msra.mxu0 0.0
        %1368 = vmatprep.subr.mxu0 0.0
        %1369 = vmatpush1.msra.mxu0 0.0
        %1370 = vmatprep.subr.mxu0 0.0
        %1371 = vmatpush1.msra.mxu0 0.0
        %1372 = vmatprep.subr.mxu0 0.0
        %1373 = vmatpush1.msra.mxu0 0.0
        %1374 = vmatprep.subr.mxu0 0.0
        %1375 = vmatpush1.msra.mxu0 0.0
        %1376 = vmatprep.subr.mxu0 0.0
        %1377 = vmatpush1.msra.mxu0 0.0
        %1378 = vmatprep.subr.mxu0 0.0
        %1379 = vmatpush1.msra.mxu0 0.0
        %1380 = vmatprep.subr.mxu0 0.0
        %1381 = vmatpush1.msra.mxu0 0.0
        %1382 = vmatprep.subr.mxu0 0.0
        %1383 = vmatpush1.msra.mxu0 0.0
        %1384 = vmatprep.subr.mxu0 0.0
        %1385 = vmatpush1.msra.mxu0 0.0
        %1386 = vmatprep.subr.mxu0 0.0
        %1387 = vmatpush1.msra.mxu0 0.0
        %1388 = vmatprep.subr.mxu0 0.0
        %1389 = vmatpush1.msra.mxu0 0.0
        %1390 = vmatprep.subr.mxu0 0.0
        %1391 = vmatpush1.msra.mxu0 0.0
        %1392 = vmatprep.subr.mxu0 0.0
        %1393 = vmatpush1.msra.mxu0 0.0
        %1394 = vmatprep.subr.mxu0 0.0
        %1395 = vmatpush1.msra.mxu0 0.0
        %1396 = vmatprep.subr.mxu0 0.0
        %1397 = vmatpush1.msra.mxu0 0.0
        %1398 = vmatprep.subr.mxu0 0.0
        %1399 = vmatpush1.msra.mxu0 0.0
        %1400 = vmatprep.subr.mxu0 0.0
        %1401 = vmatpush1.msra.mxu0 0.0
        %1402 = vmatprep.subr.mxu0 0.0
        %1403 = vmatpush1.msra.mxu0 0.0
        %1404 = vmatprep.subr.mxu0 0.0
        %1405 = vmatpush1.msra.mxu0 0.0
        %1406 = vmatprep.mubr.f32.mxu0 0.0
        %1407 = vmatmul.mubr.f32.gmra.mrb[0].mxu0 %v1340
        %v1408 = vpop.f32.mrb[0].mxu0
        %v1409 = vadd.f32 0.0, %v1408
        %v1410 = vpop.f32.mrb[0].mxu0
        %1411 = vdwg.mxu0
        %1412 = vrot.lane.b32.xlu0 %v743, 64
        %v1413 = vpop.permute.xlu0 %1412
        %1414 = vrot.lane.b32.xlu0 %v749, 64
        %v1415 = vpop.permute.xlu0 %1414
        %v1416 = vsel %vm758, %v1413, 0
        %v1418 = vsel %vm758, %v1415, 0
        %1420 = vmatprep.subr.mxu0 0.0
        %1421 = vmatpush1.xpose.msra.mxu0 %v1418
        %1422 = vmatprep.subr.mxu0 0.0
        %1423 = vmatpush1.xpose.msra.mxu0 0.0
        %1424 = vmatprep.subr.mxu0 0.0
        %1425 = vmatpush1.xpose.msra.mxu0 0.0
        %1426 = vmatprep.subr.mxu0 0.0
        %1427 = vmatpush1.xpose.msra.mxu0 0.0
        %1428 = vmatprep.subr.mxu0 0.0
        %1429 = vmatpush1.xpose.msra.mxu0 0.0
        %1430 = vmatprep.subr.mxu0 0.0
        %1431 = vmatpush1.xpose.msra.mxu0 0.0
        %1432 = vmatprep.subr.mxu0 0.0
        %1433 = vmatpush1.xpose.msra.mxu0 0.0
        %1434 = vmatprep.subr.mxu0 0.0
        %1435 = vmatpush1.xpose.msra.mxu0 0.0
        %1436 = vmatprep.subr.mxu0 0.0
        %1437 = vmatpush1.xpose.msra.mxu0 0.0
        %1438 = vmatprep.subr.mxu0 0.0
        %1439 = vmatpush1.xpose.msra.mxu0 0.0
        %1440 = vmatprep.subr.mxu0 0.0
        %1441 = vmatpush1.xpose.msra.mxu0 0.0
        %1442 = vmatprep.subr.mxu0 0.0
        %1443 = vmatpush1.xpose.msra.mxu0 0.0
        %1444 = vmatprep.subr.mxu0 0.0
        %1445 = vmatpush1.xpose.msra.mxu0 0.0
        %1446 = vmatprep.subr.mxu0 0.0
        %1447 = vmatpush1.xpose.msra.mxu0 0.0
        %1448 = vmatprep.subr.mxu0 0.0
        %1449 = vmatpush1.xpose.msra.mxu0 0.0
        %1450 = vmatprep.subr.mxu0 0.0
        %1451 = vmatpush1.xpose.msra.mxu0 0.0
        %1452 = vmatprep.subr.mxu0 0.0
        %1453 = vmatpush1.xpose.msra.mxu0 0.0
        %1454 = vmatprep.subr.mxu0 0.0
        %1455 = vmatpush1.xpose.msra.mxu0 0.0
        %1456 = vmatprep.subr.mxu0 0.0
        %1457 = vmatpush1.xpose.msra.mxu0 0.0
        %1458 = vmatprep.subr.mxu0 0.0
        %1459 = vmatpush1.xpose.msra.mxu0 0.0
        %1460 = vmatprep.subr.mxu0 0.0
        %1461 = vmatpush1.xpose.msra.mxu0 0.0
        %1462 = vmatprep.subr.mxu0 0.0
        %1463 = vmatpush1.xpose.msra.mxu0 0.0
        %1464 = vmatprep.subr.mxu0 0.0
        %1465 = vmatpush1.xpose.msra.mxu0 0.0
        %1466 = vmatprep.subr.mxu0 0.0
        %1467 = vmatpush1.xpose.msra.mxu0 0.0
        %1468 = vmatprep.subr.mxu0 0.0
        %1469 = vmatpush1.xpose.msra.mxu0 0.0
        %1470 = vmatprep.subr.mxu0 0.0
        %1471 = vmatpush1.xpose.msra.mxu0 0.0
        %1472 = vmatprep.subr.mxu0 0.0
        %1473 = vmatpush1.xpose.msra.mxu0 0.0
        %1474 = vmatprep.subr.mxu0 0.0
        %1475 = vmatpush1.xpose.msra.mxu0 0.0
        %1476 = vmatprep.subr.mxu0 0.0
        %1477 = vmatpush1.xpose.msra.mxu0 0.0
        %1478 = vmatprep.subr.mxu0 0.0
        %1479 = vmatpush1.xpose.msra.mxu0 0.0
        %1480 = vmatprep.subr.mxu0 0.0
        %1481 = vmatpush1.xpose.msra.mxu0 0.0
        %1482 = vmatprep.subr.mxu0 0.0
        %1483 = vmatpush1.xpose.msra.mxu0 0.0
        %1484 = vmatprep.mubr.f32.mxu0 0.0
        %1485 = vmatmul.mubr.f32.gmra.mrb[0].mxu0 %v1416
        %v1486 = vpop.f32.mrb[0].mxu0
        %v1487 = vadd.f32 %v757, %v1486
        %v1488 = vpop.f32.mrb[0].mxu0
        %1489 = vdwg.mxu0
        %1490 = vrot.lane.b32.xlu0 %v744, 64
        %v1491 = vpop.permute.xlu0 %1490
        %1492 = vrot.lane.b32.xlu0 %v750, 64
        %v1493 = vpop.permute.xlu0 %1492
        %v1494 = vsel %vm758, %v1491, 0
        %v1496 = vsel %vm758, %v1493, 0
        %1498 = vmatprep.subr.mxu0 0.0
        %1499 = vmatpush1.xpose.msra.mxu0 %v1496
        %1500 = vmatprep.subr.mxu0 0.0
        %1501 = vmatpush1.xpose.msra.mxu0 0.0
        %1502 = vmatprep.subr.mxu0 0.0
        %1503 = vmatpush1.xpose.msra.mxu0 0.0
        %1504 = vmatprep.subr.mxu0 0.0
        %1505 = vmatpush1.xpose.msra.mxu0 0.0
        %1506 = vmatprep.subr.mxu0 0.0
        %1507 = vmatpush1.xpose.msra.mxu0 0.0
        %1508 = vmatprep.subr.mxu0 0.0
        %1509 = vmatpush1.xpose.msra.mxu0 0.0
        %1510 = vmatprep.subr.mxu0 0.0
        %1511 = vmatpush1.xpose.msra.mxu0 0.0
        %1512 = vmatprep.subr.mxu0 0.0
        %1513 = vmatpush1.xpose.msra.mxu0 0.0
        %1514 = vmatprep.subr.mxu0 0.0
        %1515 = vmatpush1.xpose.msra.mxu0 0.0
        %1516 = vmatprep.subr.mxu0 0.0
        %1517 = vmatpush1.xpose.msra.mxu0 0.0
        %1518 = vmatprep.subr.mxu0 0.0
        %1519 = vmatpush1.xpose.msra.mxu0 0.0
        %1520 = vmatprep.subr.mxu0 0.0
        %1521 = vmatpush1.xpose.msra.mxu0 0.0
        %1522 = vmatprep.subr.mxu0 0.0
        %1523 = vmatpush1.xpose.msra.mxu0 0.0
        %1524 = vmatprep.subr.mxu0 0.0
        %1525 = vmatpush1.xpose.msra.mxu0 0.0
        %1526 = vmatprep.subr.mxu0 0.0
        %1527 = vmatpush1.xpose.msra.mxu0 0.0
        %1528 = vmatprep.subr.mxu0 0.0
        %1529 = vmatpush1.xpose.msra.mxu0 0.0
        %1530 = vmatprep.subr.mxu0 0.0
        %1531 = vmatpush1.xpose.msra.mxu0 0.0
        %1532 = vmatprep.subr.mxu0 0.0
        %1533 = vmatpush1.xpose.msra.mxu0 0.0
        %1534 = vmatprep.subr.mxu0 0.0
        %1535 = vmatpush1.xpose.msra.mxu0 0.0
        %1536 = vmatprep.subr.mxu0 0.0
        %1537 = vmatpush1.xpose.msra.mxu0 0.0
        %1538 = vmatprep.subr.mxu0 0.0
        %1539 = vmatpush1.xpose.msra.mxu0 0.0
        %1540 = vmatprep.subr.mxu0 0.0
        %1541 = vmatpush1.xpose.msra.mxu0 0.0
        %1542 = vmatprep.subr.mxu0 0.0
        %1543 = vmatpush1.xpose.msra.mxu0 0.0
        %1544 = vmatprep.subr.mxu0 0.0
        %1545 = vmatpush1.xpose.msra.mxu0 0.0
        %1546 = vmatprep.subr.mxu0 0.0
        %1547 = vmatpush1.xpose.msra.mxu0 0.0
        %1548 = vmatprep.subr.mxu0 0.0
        %1549 = vmatpush1.xpose.msra.mxu0 0.0
        %1550 = vmatprep.subr.mxu0 0.0
        %1551 = vmatpush1.xpose.msra.mxu0 0.0
        %1552 = vmatprep.subr.mxu0 0.0
        %1553 = vmatpush1.xpose.msra.mxu0 0.0
        %1554 = vmatprep.subr.mxu0 0.0
        %1555 = vmatpush1.xpose.msra.mxu0 0.0
        %1556 = vmatprep.subr.mxu0 0.0
        %1557 = vmatpush1.xpose.msra.mxu0 0.0
        %1558 = vmatprep.subr.mxu0 0.0
        %1559 = vmatpush1.xpose.msra.mxu0 0.0
        %1560 = vmatprep.subr.mxu0 0.0
        %1561 = vmatpush1.xpose.msra.mxu0 0.0
        %1562 = vmatprep.mubr.f32.mxu0 0.0
        %1563 = vmatmul.mubr.f32.gmra.mrb[0].mxu0 %v1494
        %v1564 = vpop.f32.mrb[0].mxu0
        %v1565 = vadd.f32 %v757, %v1564
        %v1566 = vpop.f32.mrb[0].mxu0
        %1567 = vdwg.mxu0
        %v1568 = vsel %vm911, %v1487, -inf
        %1569 = vmax.xlane.f32.xlu0 %v1568
        %v1570 = vpop.xlane.xlu0 %1569
        %v1571 = vsel %vm911, %v1565, -inf
        %1572 = vmax.xlane.f32.xlu0 %v1571
        %v1573 = vpop.xlane.xlu0 %1572
        %v1574 = vsub.f32 %v1487, %v1570
        %v1575 = vsub.f32 %v1565, %v1573
        %v1576 = vmul.f32 %v1574, 1.442695
        %v1577 = vpow.pop %v1576
        %v1578 = vmul.f32 %v1575, 1.442695
        %v1579 = vpow.pop %v1578
        %v1580 = vsel %vm911, %v1577, 0.0
        %1581 = vadd.xlane.f32.xlu0 %v1580
        %v1582 = vpop.xlane.xlu0 %1581
        %v1583 = vsel %vm911, %v1579, 0.0
        %1584 = vadd.xlane.f32.xlu0 %v1583
        %v1585 = vpop.xlane.xlu0 %1584
        %v1586 = vrcp.pop %v1582
        %v1587 = vrcp.pop %v1585
        %v1588 = vmul.f32 %v1577, %v1586
        %v1589 = vmul.f32 %v1579, %v1587
        %1590 = vrot.lane.b32.xlu0 %v755, 64
        %v1591 = vpop.permute.xlu0 %1590
        %v1594 = vsel %vm911, %v1588, 0
        %1596 = vmatprep.subr.mxu0 0.0
        %1597 = vmatpush1.msra.mxu0 %v1591
        %1598 = vmatprep.subr.mxu0 0.0
        %1599 = vmatpush1.msra.mxu0 0.0
        %1600 = vmatprep.subr.mxu0 0.0
        %1601 = vmatpush1.msra.mxu0 0.0
        %1602 = vmatprep.subr.mxu0 0.0
        %1603 = vmatpush1.msra.mxu0 0.0
        %1604 = vmatprep.subr.mxu0 0.0
        %1605 = vmatpush1.msra.mxu0 0.0
        %1606 = vmatprep.subr.mxu0 0.0
        %1607 = vmatpush1.msra.mxu0 0.0
        %1608 = vmatprep.subr.mxu0 0.0
        %1609 = vmatpush1.msra.mxu0 0.0
        %1610 = vmatprep.subr.mxu0 0.0
        %1611 = vmatpush1.msra.mxu0 0.0
        %1612 = vmatprep.subr.mxu0 0.0
        %1613 = vmatpush1.msra.mxu0 0.0
        %1614 = vmatprep.subr.mxu0 0.0
        %1615 = vmatpush1.msra.mxu0 0.0
        %1616 = vmatprep.subr.mxu0 0.0
        %1617 = vmatpush1.msra.mxu0 0.0
        %1618 = vmatprep.subr.mxu0 0.0
        %1619 = vmatpush1.msra.mxu0 0.0
        %1620 = vmatprep.subr.mxu0 0.0
        %1621 = vmatpush1.msra.mxu0 0.0
        %1622 = vmatprep.subr.mxu0 0.0
        %1623 = vmatpush1.msra.mxu0 0.0
        %1624 = vmatprep.subr.mxu0 0.0
        %1625 = vmatpush1.msra.mxu0 0.0
        %1626 = vmatprep.subr.mxu0 0.0
        %1627 = vmatpush1.msra.mxu0 0.0
        %1628 = vmatprep.subr.mxu0 0.0
        %1629 = vmatpush1.msra.mxu0 0.0
        %1630 = vmatprep.subr.mxu0 0.0
        %1631 = vmatpush1.msra.mxu0 0.0
        %1632 = vmatprep.subr.mxu0 0.0
        %1633 = vmatpush1.msra.mxu0 0.0
        %1634 = vmatprep.subr.mxu0 0.0
        %1635 = vmatpush1.msra.mxu0 0.0
        %1636 = vmatprep.subr.mxu0 0.0
        %1637 = vmatpush1.msra.mxu0 0.0
        %1638 = vmatprep.subr.mxu0 0.0
        %1639 = vmatpush1.msra.mxu0 0.0
        %1640 = vmatprep.subr.mxu0 0.0
        %1641 = vmatpush1.msra.mxu0 0.0
        %1642 = vmatprep.subr.mxu0 0.0
        %1643 = vmatpush1.msra.mxu0 0.0
        %1644 = vmatprep.subr.mxu0 0.0
        %1645 = vmatpush1.msra.mxu0 0.0
        %1646 = vmatprep.subr.mxu0 0.0
        %1647 = vmatpush1.msra.mxu0 0.0
        %1648 = vmatprep.subr.mxu0 0.0
        %1649 = vmatpush1.msra.mxu0 0.0
        %1650 = vmatprep.subr.mxu0 0.0
        %1651 = vmatpush1.msra.mxu0 0.0
        %1652 = vmatprep.subr.mxu0 0.0
        %1653 = vmatpush1.msra.mxu0 0.0
        %1654 = vmatprep.subr.mxu0 0.0
        %1655 = vmatpush1.msra.mxu0 0.0
        %1656 = vmatprep.subr.mxu0 0.0
        %1657 = vmatpush1.msra.mxu0 0.0
        %1658 = vmatprep.subr.mxu0 0.0
        %1659 = vmatpush1.msra.mxu0 0.0
        %1660 = vmatprep.mubr.f32.mxu0 0.0
        %1661 = vmatmul.mubr.f32.gmra.mrb[0].mxu0 %v1594
        %v1662 = vpop.f32.mrb[0].mxu0
        %v1663 = vadd.f32 0.0, %v1662
        %v1664 = vpop.f32.mrb[0].mxu0
        %1665 = vdwg.mxu0
        %1666 = vrot.lane.b32.xlu0 %v756, 64
        %v1667 = vpop.permute.xlu0 %1666
        %v1670 = vsel %vm911, %v1589, 0
        %1672 = vmatprep.subr.mxu0 0.0
        %1673 = vmatpush1.msra.mxu0 %v1667
        %1674 = vmatprep.subr.mxu0 0.0
        %1675 = vmatpush1.msra.mxu0 0.0
        %1676 = vmatprep.subr.mxu0 0.0
        %1677 = vmatpush1.msra.mxu0 0.0
        %1678 = vmatprep.subr.mxu0 0.0
        %1679 = vmatpush1.msra.mxu0 0.0
        %1680 = vmatprep.subr.mxu0 0.0
        %1681 = vmatpush1.msra.mxu0 0.0
        %1682 = vmatprep.subr.mxu0 0.0
        %1683 = vmatpush1.msra.mxu0 0.0
        %1684 = vmatprep.subr.mxu0 0.0
        %1685 = vmatpush1.msra.mxu0 0.0
        %1686 = vmatprep.subr.mxu0 0.0
        %1687 = vmatpush1.msra.mxu0 0.0
        %1688 = vmatprep.subr.mxu0 0.0
        %1689 = vmatpush1.msra.mxu0 0.0
        %1690 = vmatprep.subr.mxu0 0.0
        %1691 = vmatpush1.msra.mxu0 0.0
        %1692 = vmatprep.subr.mxu0 0.0
        %1693 = vmatpush1.msra.mxu0 0.0
        %1694 = vmatprep.subr.mxu0 0.0
        %1695 = vmatpush1.msra.mxu0 0.0
        %1696 = vmatprep.subr.mxu0 0.0
        %1697 = vmatpush1.msra.mxu0 0.0
        %1698 = vmatprep.subr.mxu0 0.0
        %1699 = vmatpush1.msra.mxu0 0.0
        %1700 = vmatprep.subr.mxu0 0.0
        %1701 = vmatpush1.msra.mxu0 0.0
        %1702 = vmatprep.subr.mxu0 0.0
        %1703 = vmatpush1.msra.mxu0 0.0
        %1704 = vmatprep.subr.mxu0 0.0
        %1705 = vmatpush1.msra.mxu0 0.0
        %1706 = vmatprep.subr.mxu0 0.0
        %1707 = vmatpush1.msra.mxu0 0.0
        %1708 = vmatprep.subr.mxu0 0.0
        %1709 = vmatpush1.msra.mxu0 0.0
        %1710 = vmatprep.subr.mxu0 0.0
        %1711 = vmatpush1.msra.mxu0 0.0
        %1712 = vmatprep.subr.mxu0 0.0
        %1713 = vmatpush1.msra.mxu0 0.0
        %1714 = vmatprep.subr.mxu0 0.0
        %1715 = vmatpush1.msra.mxu0 0.0
        %1716 = vmatprep.subr.mxu0 0.0
        %1717 = vmatpush1.msra.mxu0 0.0
        %1718 = vmatprep.subr.mxu0 0.0
        %1719 = vmatpush1.msra.mxu0 0.0
        %1720 = vmatprep.subr.mxu0 0.0
        %1721 = vmatpush1.msra.mxu0 0.0
        %1722 = vmatprep.subr.mxu0 0.0
        %1723 = vmatpush1.msra.mxu0 0.0
        %1724 = vmatprep.subr.mxu0 0.0
        %1725 = vmatpush1.msra.mxu0 0.0
        %1726 = vmatprep.subr.mxu0 0.0
        %1727 = vmatpush1.msra.mxu0 0.0
        %1728 = vmatprep.subr.mxu0 0.0
        %1729 = vmatpush1.msra.mxu0 0.0
        %1730 = vmatprep.subr.mxu0 0.0
        %1731 = vmatpush1.msra.mxu0 0.0
        %1732 = vmatprep.subr.mxu0 0.0
        %1733 = vmatpush1.msra.mxu0 0.0
        %1734 = vmatprep.subr.mxu0 0.0
        %1735 = vmatpush1.msra.mxu0 0.0
        %1736 = vmatprep.mubr.f32.mxu0 0.0
        %1737 = vmatmul.mubr.f32.gmra.mrb[0].mxu0 %v1670
        %v1738 = vpop.f32.mrb[0].mxu0
        %v1739 = vadd.f32 0.0, %v1738
        %v1740 = vpop.f32.mrb[0].mxu0
        %1741 = vdwg.mxu0
        %1742 = vrot.lane.b32.xlu0 %v743, 32
        %v1743 = vpop.permute.xlu0 %1742
        %1744 = vrot.lane.b32.xlu0 %v749, 32
        %v1745 = vpop.permute.xlu0 %1744
        %v1746 = vsel %vm758, %v1743, 0
        %v1748 = vsel %vm758, %v1745, 0
        %1750 = vmatprep.subr.mxu0 0.0
        %1751 = vmatpush1.xpose.msra.mxu0 %v1748
        %1752 = vmatprep.subr.mxu0 0.0
        %1753 = vmatpush1.xpose.msra.mxu0 0.0
        %1754 = vmatprep.subr.mxu0 0.0
        %1755 = vmatpush1.xpose.msra.mxu0 0.0
        %1756 = vmatprep.subr.mxu0 0.0
        %1757 = vmatpush1.xpose.msra.mxu0 0.0
        %1758 = vmatprep.subr.mxu0 0.0
        %1759 = vmatpush1.xpose.msra.mxu0 0.0
        %1760 = vmatprep.subr.mxu0 0.0
        %1761 = vmatpush1.xpose.msra.mxu0 0.0
        %1762 = vmatprep.subr.mxu0 0.0
        %1763 = vmatpush1.xpose.msra.mxu0 0.0
        %1764 = vmatprep.subr.mxu0 0.0
        %1765 = vmatpush1.xpose.msra.mxu0 0.0
        %1766 = vmatprep.subr.mxu0 0.0
        %1767 = vmatpush1.xpose.msra.mxu0 0.0
        %1768 = vmatprep.subr.mxu0 0.0
        %1769 = vmatpush1.xpose.msra.mxu0 0.0
        %1770 = vmatprep.subr.mxu0 0.0
        %1771 = vmatpush1.xpose.msra.mxu0 0.0
        %1772 = vmatprep.subr.mxu0 0.0
        %1773 = vmatpush1.xpose.msra.mxu0 0.0
        %1774 = vmatprep.subr.mxu0 0.0
        %1775 = vmatpush1.xpose.msra.mxu0 0.0
        %1776 = vmatprep.subr.mxu0 0.0
        %1777 = vmatpush1.xpose.msra.mxu0 0.0
        %1778 = vmatprep.subr.mxu0 0.0
        %1779 = vmatpush1.xpose.msra.mxu0 0.0
        %1780 = vmatprep.subr.mxu0 0.0
        %1781 = vmatpush1.xpose.msra.mxu0 0.0
        %1782 = vmatprep.subr.mxu0 0.0
        %1783 = vmatpush1.xpose.msra.mxu0 0.0
        %1784 = vmatprep.subr.mxu0 0.0
        %1785 = vmatpush1.xpose.msra.mxu0 0.0
        %1786 = vmatprep.subr.mxu0 0.0
        %1787 = vmatpush1.xpose.msra.mxu0 0.0
        %1788 = vmatprep.subr.mxu0 0.0
        %1789 = vmatpush1.xpose.msra.mxu0 0.0
        %1790 = vmatprep.subr.mxu0 0.0
        %1791 = vmatpush1.xpose.msra.mxu0 0.0
        %1792 = vmatprep.subr.mxu0 0.0
        %1793 = vmatpush1.xpose.msra.mxu0 0.0
        %1794 = vmatprep.subr.mxu0 0.0
        %1795 = vmatpush1.xpose.msra.mxu0 0.0
        %1796 = vmatprep.subr.mxu0 0.0
        %1797 = vmatpush1.xpose.msra.mxu0 0.0
        %1798 = vmatprep.subr.mxu0 0.0
        %1799 = vmatpush1.xpose.msra.mxu0 0.0
        %1800 = vmatprep.subr.mxu0 0.0
        %1801 = vmatpush1.xpose.msra.mxu0 0.0
        %1802 = vmatprep.subr.mxu0 0.0
        %1803 = vmatpush1.xpose.msra.mxu0 0.0
        %1804 = vmatprep.subr.mxu0 0.0
        %1805 = vmatpush1.xpose.msra.mxu0 0.0
        %1806 = vmatprep.subr.mxu0 0.0
        %1807 = vmatpush1.xpose.msra.mxu0 0.0
        %1808 = vmatprep.subr.mxu0 0.0
        %1809 = vmatpush1.xpose.msra.mxu0 0.0
        %1810 = vmatprep.subr.mxu0 0.0
        %1811 = vmatpush1.xpose.msra.mxu0 0.0
        %1812 = vmatprep.subr.mxu0 0.0
        %1813 = vmatpush1.xpose.msra.mxu0 0.0
        %1814 = vmatprep.mubr.f32.mxu0 0.0
        %1815 = vmatmul.mubr.f32.gmra.mrb[0].mxu0 %v1746
        %v1816 = vpop.f32.mrb[0].mxu0
        %v1817 = vadd.f32 %v757, %v1816
        %v1818 = vpop.f32.mrb[0].mxu0
        %1819 = vdwg.mxu0
        %1820 = vrot.lane.b32.xlu0 %v744, 32
        %v1821 = vpop.permute.xlu0 %1820
        %1822 = vrot.lane.b32.xlu0 %v750, 32
        %v1823 = vpop.permute.xlu0 %1822
        %v1824 = vsel %vm758, %v1821, 0
        %v1826 = vsel %vm758, %v1823, 0
        %1828 = vmatprep.subr.mxu0 0.0
        %1829 = vmatpush1.xpose.msra.mxu0 %v1826
        %1830 = vmatprep.subr.mxu0 0.0
        %1831 = vmatpush1.xpose.msra.mxu0 0.0
        %1832 = vmatprep.subr.mxu0 0.0
        %1833 = vmatpush1.xpose.msra.mxu0 0.0
        %1834 = vmatprep.subr.mxu0 0.0
        %1835 = vmatpush1.xpose.msra.mxu0 0.0
        %1836 = vmatprep.subr.mxu0 0.0
        %1837 = vmatpush1.xpose.msra.mxu0 0.0
        %1838 = vmatprep.subr.mxu0 0.0
        %1839 = vmatpush1.xpose.msra.mxu0 0.0
        %1840 = vmatprep.subr.mxu0 0.0
        %1841 = vmatpush1.xpose.msra.mxu0 0.0
        %1842 = vmatprep.subr.mxu0 0.0
        %1843 = vmatpush1.xpose.msra.mxu0 0.0
        %1844 = vmatprep.subr.mxu0 0.0
        %1845 = vmatpush1.xpose.msra.mxu0 0.0
        %1846 = vmatprep.subr.mxu0 0.0
        %1847 = vmatpush1.xpose.msra.mxu0 0.0
        %1848 = vmatprep.subr.mxu0 0.0
        %1849 = vmatpush1.xpose.msra.mxu0 0.0
        %1850 = vmatprep.subr.mxu0 0.0
        %1851 = vmatpush1.xpose.msra.mxu0 0.0
        %1852 = vmatprep.subr.mxu0 0.0
        %1853 = vmatpush1.xpose.msra.mxu0 0.0
        %1854 = vmatprep.subr.mxu0 0.0
        %1855 = vmatpush1.xpose.msra.mxu0 0.0
        %1856 = vmatprep.subr.mxu0 0.0
        %1857 = vmatpush1.xpose.msra.mxu0 0.0
        %1858 = vmatprep.subr.mxu0 0.0
        %1859 = vmatpush1.xpose.msra.mxu0 0.0
        %1860 = vmatprep.subr.mxu0 0.0
        %1861 = vmatpush1.xpose.msra.mxu0 0.0
        %1862 = vmatprep.subr.mxu0 0.0
        %1863 = vmatpush1.xpose.msra.mxu0 0.0
        %1864 = vmatprep.subr.mxu0 0.0
        %1865 = vmatpush1.xpose.msra.mxu0 0.0
        %1866 = vmatprep.subr.mxu0 0.0
        %1867 = vmatpush1.xpose.msra.mxu0 0.0
        %1868 = vmatprep.subr.mxu0 0.0
        %1869 = vmatpush1.xpose.msra.mxu0 0.0
        %1870 = vmatprep.subr.mxu0 0.0
        %1871 = vmatpush1.xpose.msra.mxu0 0.0
        %1872 = vmatprep.subr.mxu0 0.0
        %1873 = vmatpush1.xpose.msra.mxu0 0.0
        %1874 = vmatprep.subr.mxu0 0.0
        %1875 = vmatpush1.xpose.msra.mxu0 0.0
        %1876 = vmatprep.subr.mxu0 0.0
        %1877 = vmatpush1.xpose.msra.mxu0 0.0
        %1878 = vmatprep.subr.mxu0 0.0
        %1879 = vmatpush1.xpose.msra.mxu0 0.0
        %1880 = vmatprep.subr.mxu0 0.0
        %1881 = vmatpush1.xpose.msra.mxu0 0.0
        %1882 = vmatprep.subr.mxu0 0.0
        %1883 = vmatpush1.xpose.msra.mxu0 0.0
        %1884 = vmatprep.subr.mxu0 0.0
        %1885 = vmatpush1.xpose.msra.mxu0 0.0
        %1886 = vmatprep.subr.mxu0 0.0
        %1887 = vmatpush1.xpose.msra.mxu0 0.0
        %1888 = vmatprep.subr.mxu0 0.0
        %1889 = vmatpush1.xpose.msra.mxu0 0.0
        %1890 = vmatprep.subr.mxu0 0.0
        %1891 = vmatpush1.xpose.msra.mxu0 0.0
        %1892 = vmatprep.mubr.f32.mxu0 0.0
        %1893 = vmatmul.mubr.f32.gmra.mrb[0].mxu0 %v1824
        %v1894 = vpop.f32.mrb[0].mxu0
        %v1895 = vadd.f32 %v757, %v1894
        %v1896 = vpop.f32.mrb[0].mxu0
        %1897 = vdwg.mxu0
        %v1898 = vsel %vm911, %v1817, -inf
        %1899 = vmax.xlane.f32.xlu0 %v1898
        %v1900 = vpop.xlane.xlu0 %1899
        %v1901 = vsel %vm911, %v1895, -inf
        %1902 = vmax.xlane.f32.xlu0 %v1901
        %v1903 = vpop.xlane.xlu0 %1902
        %v1904 = vsub.f32 %v1817, %v1900
        %v1905 = vsub.f32 %v1895, %v1903
        %v1906 = vmul.f32 %v1904, 1.442695
        %v1907 = vpow.pop %v1906
        %v1908 = vmul.f32 %v1905, 1.442695
        %v1909 = vpow.pop %v1908
        %v1910 = vsel %vm911, %v1907, 0.0
        %1911 = vadd.xlane.f32.xlu0 %v1910
        %v1912 = vpop.xlane.xlu0 %1911
        %v1913 = vsel %vm911, %v1909, 0.0
        %1914 = vadd.xlane.f32.xlu0 %v1913
        %v1915 = vpop.xlane.xlu0 %1914
        %v1916 = vrcp.pop %v1912
        %v1917 = vrcp.pop %v1915
        %v1918 = vmul.f32 %v1907, %v1916
        %v1919 = vmul.f32 %v1909, %v1917
        %1920 = vrot.lane.b32.xlu0 %v755, 32
        %v1921 = vpop.permute.xlu0 %1920
        %v1924 = vsel %vm911, %v1918, 0
        %1926 = vmatprep.subr.mxu0 0.0
        %1927 = vmatpush1.msra.mxu0 %v1921
        %1928 = vmatprep.subr.mxu0 0.0
        %1929 = vmatpush1.msra.mxu0 0.0
        %1930 = vmatprep.subr.mxu0 0.0
        %1931 = vmatpush1.msra.mxu0 0.0
        %1932 = vmatprep.subr.mxu0 0.0
        %1933 = vmatpush1.msra.mxu0 0.0
        %1934 = vmatprep.subr.mxu0 0.0
        %1935 = vmatpush1.msra.mxu0 0.0
        %1936 = vmatprep.subr.mxu0 0.0
        %1937 = vmatpush1.msra.mxu0 0.0
        %1938 = vmatprep.subr.mxu0 0.0
        %1939 = vmatpush1.msra.mxu0 0.0
        %1940 = vmatprep.subr.mxu0 0.0
        %1941 = vmatpush1.msra.mxu0 0.0
        %1942 = vmatprep.subr.mxu0 0.0
        %1943 = vmatpush1.msra.mxu0 0.0
        %1944 = vmatprep.subr.mxu0 0.0
        %1945 = vmatpush1.msra.mxu0 0.0
        %1946 = vmatprep.subr.mxu0 0.0
        %1947 = vmatpush1.msra.mxu0 0.0
        %1948 = vmatprep.subr.mxu0 0.0
        %1949 = vmatpush1.msra.mxu0 0.0
        %1950 = vmatprep.subr.mxu0 0.0
        %1951 = vmatpush1.msra.mxu0 0.0
        %1952 = vmatprep.subr.mxu0 0.0
        %1953 = vmatpush1.msra.mxu0 0.0
        %1954 = vmatprep.subr.mxu0 0.0
        %1955 = vmatpush1.msra.mxu0 0.0
        %1956 = vmatprep.subr.mxu0 0.0
        %1957 = vmatpush1.msra.mxu0 0.0
        %1958 = vmatprep.subr.mxu0 0.0
        %1959 = vmatpush1.msra.mxu0 0.0
        %1960 = vmatprep.subr.mxu0 0.0
        %1961 = vmatpush1.msra.mxu0 0.0
        %1962 = vmatprep.subr.mxu0 0.0
        %1963 = vmatpush1.msra.mxu0 0.0
        %1964 = vmatprep.subr.mxu0 0.0
        %1965 = vmatpush1.msra.mxu0 0.0
        %1966 = vmatprep.subr.mxu0 0.0
        %1967 = vmatpush1.msra.mxu0 0.0
        %1968 = vmatprep.subr.mxu0 0.0
        %1969 = vmatpush1.msra.mxu0 0.0
        %1970 = vmatprep.subr.mxu0 0.0
        %1971 = vmatpush1.msra.mxu0 0.0
        %1972 = vmatprep.subr.mxu0 0.0
        %1973 = vmatpush1.msra.mxu0 0.0
        %1974 = vmatprep.subr.mxu0 0.0
        %1975 = vmatpush1.msra.mxu0 0.0
        %1976 = vmatprep.subr.mxu0 0.0
        %1977 = vmatpush1.msra.mxu0 0.0
        %1978 = vmatprep.subr.mxu0 0.0
        %1979 = vmatpush1.msra.mxu0 0.0
        %1980 = vmatprep.subr.mxu0 0.0
        %1981 = vmatpush1.msra.mxu0 0.0
        %1982 = vmatprep.subr.mxu0 0.0
        %1983 = vmatpush1.msra.mxu0 0.0
        %1984 = vmatprep.subr.mxu0 0.0
        %1985 = vmatpush1.msra.mxu0 0.0
        %1986 = vmatprep.subr.mxu0 0.0
        %1987 = vmatpush1.msra.mxu0 0.0
        %1988 = vmatprep.subr.mxu0 0.0
        %1989 = vmatpush1.msra.mxu0 0.0
        %1990 = vmatprep.mubr.f32.mxu0 0.0
        %1991 = vmatmul.mubr.f32.gmra.mrb[0].mxu0 %v1924
        %v1992 = vpop.f32.mrb[0].mxu0
        %v1993 = vadd.f32 0.0, %v1992
        %v1994 = vpop.f32.mrb[0].mxu0
        %1995 = vdwg.mxu0
        %1996 = vrot.lane.b32.xlu0 %v756, 32
        %v1997 = vpop.permute.xlu0 %1996
        %v2000 = vsel %vm911, %v1919, 0
        %2002 = vmatprep.subr.mxu0 0.0
        %2003 = vmatpush1.msra.mxu0 %v1997
        %2004 = vmatprep.subr.mxu0 0.0
        %2005 = vmatpush1.msra.mxu0 0.0
        %2006 = vmatprep.subr.mxu0 0.0
        %2007 = vmatpush1.msra.mxu0 0.0
        %2008 = vmatprep.subr.mxu0 0.0
        %2009 = vmatpush1.msra.mxu0 0.0
        %2010 = vmatprep.subr.mxu0 0.0
        %2011 = vmatpush1.msra.mxu0 0.0
        %2012 = vmatprep.subr.mxu0 0.0
        %2013 = vmatpush1.msra.mxu0 0.0
        %2014 = vmatprep.subr.mxu0 0.0
        %2015 = vmatpush1.msra.mxu0 0.0
        %2016 = vmatprep.subr.mxu0 0.0
        %2017 = vmatpush1.msra.mxu0 0.0
        %2018 = vmatprep.subr.mxu0 0.0
        %2019 = vmatpush1.msra.mxu0 0.0
        %2020 = vmatprep.subr.mxu0 0.0
        %2021 = vmatpush1.msra.mxu0 0.0
        %2022 = vmatprep.subr.mxu0 0.0
        %2023 = vmatpush1.msra.mxu0 0.0
        %2024 = vmatprep.subr.mxu0 0.0
        %2025 = vmatpush1.msra.mxu0 0.0
        %2026 = vmatprep.subr.mxu0 0.0
        %2027 = vmatpush1.msra.mxu0 0.0
        %2028 = vmatprep.subr.mxu0 0.0
        %2029 = vmatpush1.msra.mxu0 0.0
        %2030 = vmatprep.subr.mxu0 0.0
        %2031 = vmatpush1.msra.mxu0 0.0
        %2032 = vmatprep.subr.mxu0 0.0
        %2033 = vmatpush1.msra.mxu0 0.0
        %2034 = vmatprep.subr.mxu0 0.0
        %2035 = vmatpush1.msra.mxu0 0.0
        %2036 = vmatprep.subr.mxu0 0.0
        %2037 = vmatpush1.msra.mxu0 0.0
        %2038 = vmatprep.subr.mxu0 0.0
        %2039 = vmatpush1.msra.mxu0 0.0
        %2040 = vmatprep.subr.mxu0 0.0
        %2041 = vmatpush1.msra.mxu0 0.0
        %2042 = vmatprep.subr.mxu0 0.0
        %2043 = vmatpush1.msra.mxu0 0.0
        %2044 = vmatprep.subr.mxu0 0.0
        %2045 = vmatpush1.msra.mxu0 0.0
        %2046 = vmatprep.subr.mxu0 0.0
        %2047 = vmatpush1.msra.mxu0 0.0
        %2048 = vmatprep.subr.mxu0 0.0
        %2049 = vmatpush1.msra.mxu0 0.0
        %2050 = vmatprep.subr.mxu0 0.0
        %2051 = vmatpush1.msra.mxu0 0.0
        %2052 = vmatprep.subr.mxu0 0.0
        %2053 = vmatpush1.msra.mxu0 0.0
        %2054 = vmatprep.subr.mxu0 0.0
        %2055 = vmatpush1.msra.mxu0 0.0
        %2056 = vmatprep.subr.mxu0 0.0
        %2057 = vmatpush1.msra.mxu0 0.0
        %2058 = vmatprep.subr.mxu0 0.0
        %2059 = vmatpush1.msra.mxu0 0.0
        %2060 = vmatprep.subr.mxu0 0.0
        %2061 = vmatpush1.msra.mxu0 0.0
        %2062 = vmatprep.subr.mxu0 0.0
        %2063 = vmatpush1.msra.mxu0 0.0
        %2064 = vmatprep.subr.mxu0 0.0
        %2065 = vmatpush1.msra.mxu0 0.0
        %2066 = vmatprep.mubr.f32.mxu0 0.0
        %2067 = vmatmul.mubr.f32.gmra.mrb[0].mxu0 %v2000
        %v2068 = vpop.f32.mrb[0].mxu0
        %v2069 = vadd.f32 0.0, %v2068
        %v2070 = vpop.f32.mrb[0].mxu0
        %2071 = vdwg.mxu0
        %2074 = vrot.lane.b32.xlu0 %v1332, 32
        %v2075 = vpop.permute.xlu0 %2074
        %2076 = vrot.lane.b32.xlu0 %v1409, 32
        %v2077 = vpop.permute.xlu0 %2076
        %2082 = vrot.lane.b32.xlu0 %v1663, 64
        %v2083 = vpop.permute.xlu0 %2082
        %2084 = vrot.lane.b32.xlu0 %v1739, 64
        %v2085 = vpop.permute.xlu0 %2084
        %2090 = vrot.lane.b32.xlu0 %v1993, 96
        %v2091 = vpop.permute.xlu0 %2090
        %2092 = vrot.lane.b32.xlu0 %v2069, 96
        %v2093 = vpop.permute.xlu0 %2092
        %v2096 = vsel %vm758, %v1004, %v2075
        %v2097 = vsel %vm758, %v1077, %v2077
        %vm2098 = vcmask 523264
        %v2099 = vsel %vm2098, %v2096, %v2083
        %v2100 = vsel %vm2098, %v2097, %v2085
        %vm2101 = vcmask 785408
        %v2102 = vsel %vm2101, %v2099, %v2091
        %v2103 = vsel %vm2101, %v2100, %v2093
        %v2104 = vpack.c.bf16 %v2103, %v2102
        %v2105 = vld [vmem:[%s445] sm:$0xf]
        %v2106 = vld [vmem:[%s445 + $0x4] sm:$0xf]
        %v2107 = vld [vmem:[%s445 + $0x8] sm:$0xf]
        %v2108 = vld [vmem:[%s445 + $0xc] sm:$0xf]
        %v2109 = vld [vmem:[%s445 + $0x10] sm:$0xf]
        %v2110 = vld [vmem:[%s445 + $0x14] sm:$0xf]
        %v2111 = vld [vmem:[%s445 + $0x18] sm:$0xf]
        %v2112 = vld [vmem:[%s445 + $0x1c] sm:$0xf]
        %v2113 = vld [vmem:[%s445 + $0x20] sm:$0xf]
        %v2114 = vld [vmem:[%s445 + $0x24] sm:$0xf]
        %v2115 = vld [vmem:[%s445 + $0x28] sm:$0xf]
        %v2116 = vld [vmem:[%s445 + $0x2c] sm:$0xf]
        %v2117 = vld [vmem:[%s445 + $0x30] sm:$0xf]
        %v2118 = vld [vmem:[%s445 + $0x34] sm:$0xf]
        %v2119 = vld [vmem:[%s445 + $0x38] sm:$0xf]
        %v2120 = vld [vmem:[%s445 + $0x3c] sm:$0xf]
        %v2121 = vlaneseq
        %v2122 = vshrl.u32 %v2121, 7
        %v2123 = vsub.s32 4, %v2122
        %v2124 = vrot.slane %v457, %v2123
        %v2141 = vunpack.c.l.b16 %v2105
        %v2142 = vunpack.c.l.b16 %v2106
        %v2143 = vunpack.c.l.b16 %v2107
        %v2144 = vunpack.c.l.b16 %v2108
        %v2145 = vunpack.c.l.b16 %v2109
        %v2146 = vunpack.c.l.b16 %v2110
        %v2147 = vunpack.c.l.b16 %v2111
        %v2148 = vunpack.c.l.b16 %v2112
        %v2149 = vunpack.c.l.b16 %v2113
        %v2150 = vunpack.c.l.b16 %v2114
        %v2151 = vunpack.c.l.b16 %v2115
        %v2152 = vunpack.c.l.b16 %v2116
        %v2153 = vunpack.c.l.b16 %v2117
        %v2154 = vunpack.c.l.b16 %v2118
        %v2155 = vunpack.c.l.b16 %v2119
        %v2156 = vunpack.c.l.b16 %v2120
        %v2157 = vpack.c.b16 %v2142, %v2141
        %v2158 = vpack.c.b16 %v2144, %v2143
        %v2159 = vpack.c.b16 %v2146, %v2145
        %v2160 = vpack.c.b16 %v2148, %v2147
        %v2161 = vpack.c.b16 %v2150, %v2149
        %v2162 = vpack.c.b16 %v2152, %v2151
        %v2163 = vpack.c.b16 %v2154, %v2153
        %v2164 = vpack.c.b16 %v2156, %v2155
        %2173 = vmatprep.subr.bf16.mxu0 0
        %2174 = vmatpush1.bf16.msra.mxu0 %v2157
        %2175 = vmatprep.subr.bf16.mxu0 0
        %2176 = vmatpush1.bf16.msra.mxu0 %v2158
        %2177 = vmatprep.subr.bf16.mxu0 0
        %2178 = vmatpush1.bf16.msra.mxu0 %v2159
        %2179 = vmatprep.subr.bf16.mxu0 0
        %2180 = vmatpush1.bf16.msra.mxu0 %v2160
        %2181 = vmatprep.subr.bf16.mxu0 0
        %2182 = vmatpush1.bf16.msra.mxu0 %v2161
        %2183 = vmatprep.subr.bf16.mxu0 0
        %2184 = vmatpush1.bf16.msra.mxu0 %v2162
        %2185 = vmatprep.subr.bf16.mxu0 0
        %2186 = vmatpush1.bf16.msra.mxu0 %v2163
        %2187 = vmatprep.subr.bf16.mxu0 0
        %2188 = vmatpush1.bf16.msra.mxu0 %v2164
        %2189 = vmatprep.subr.bf16.mxu0 0
        %2190 = vmatpush1.bf16.msra.mxu0 0
        %2191 = vmatprep.subr.bf16.mxu0 0
        %2192 = vmatpush1.bf16.msra.mxu0 0
        %2193 = vmatprep.subr.bf16.mxu0 0
        %2194 = vmatpush1.bf16.msra.mxu0 0
        %2195 = vmatprep.subr.bf16.mxu0 0
        %2196 = vmatpush1.bf16.msra.mxu0 0
        %2197 = vmatprep.subr.bf16.mxu0 0
        %2198 = vmatpush1.bf16.msra.mxu0 0
        %2199 = vmatprep.subr.bf16.mxu0 0
        %2200 = vmatpush1.bf16.msra.mxu0 0
        %2201 = vmatprep.subr.bf16.mxu0 0
        %2202 = vmatpush1.bf16.msra.mxu0 0
        %2203 = vmatprep.subr.bf16.mxu0 0
        %2204 = vmatpush1.bf16.msra.mxu0 0
        %2205 = vmatprep.mubr.bf16.mxu0 0
        %2206 = vmatmul.mubr.bf16.gmra.mrb[0].mxu0 %v2104
        %v2207 = vpop.f32.mrb[0].mxu0
        %v2208 = vadd.f32 %v2124, %v2207
        %v2209 = vpop.f32.mrb[0].mxu0
        %v2210 = vpop.f32.mrb[0].mxu0
        %v2211 = vadd.f32 %v2124, %v2210
        %v2212 = vpop.f32.mrb[0].mxu0
        %2213 = vdwg.mxu0
        %v2214 = vadd.f32 %v455, %v2208
        %v2215 = vadd.f32 %v456, %v2211
        %2216 = vadd.xlane.f32.xlu0 %v2214
        %v2217 = vpop.xlane.xlu0 %2216
        %2218 = vadd.xlane.f32.xlu0 %v2215
        %v2219 = vpop.xlane.xlu0 %2218
        %v2220 = vmul.f32 %v2217, %v463
        %v2221 = vmul.f32 %v2219, %v463
        %v2222 = vsub.f32 %v2214, %v2220
        %v2223 = vsub.f32 %v2215, %v2221
        %v2224 = vmul.f32 %v2222, %v2222
        %v2225 = vmul.f32 %v2223, %v2223
        %2226 = vadd.xlane.f32.xlu0 %v2224
        %v2227 = vpop.xlane.xlu0 %2226
        %2228 = vadd.xlane.f32.xlu0 %v2225
        %v2229 = vpop.xlane.xlu0 %2228
        %v2230 = vmul.f32 %v2227, %v463
        %v2231 = vmul.f32 %v2229, %v463
        %v2232 = vadd.f32 %v2230, 1e-05
        %v2233 = vadd.f32 %v2231, 1e-05
        %v2234 = vrsqrt.pop %v2232
        %v2235 = vrsqrt.pop %v2233
        %v2236 = vmul.f32 %v2222, %v2234
        %v2237 = vmul.f32 %v2223, %v2235
        %v2238 = vlaneseq
        %v2239 = vshrl.u32 %v2238, 7
        %v2240 = vsub.s32 2, %v2239
        %v2241 = vrot.slane %v457, %v2240
        %v2242 = vmul.f32 %v2236, %v2241
        %v2243 = vmul.f32 %v2237, %v2241
        %v2244 = vlaneseq
        %v2245 = vshrl.u32 %v2244, 7
        %v2246 = vsub.s32 3, %v2245
        %v2247 = vrot.slane %v457, %v2246
        %v2248 = vadd.f32 %v2242, %v2247
        %v2249 = vadd.f32 %v2243, %v2247
        %v2250 = vpack.c.bf16 %v2249, %v2248
        %v2251 = vld [vmem:[%s371] sm:$0xff]
        %v2252 = vld [vmem:[%s371 + $0x8] sm:$0xff]
        %v2253 = vld [vmem:[%s371 + $0x10] sm:$0xff]
        %v2254 = vld [vmem:[%s371 + $0x18] sm:$0xff]
        %v2255 = vld [vmem:[%s371 + $0x20] sm:$0xff]
        %v2256 = vld [vmem:[%s371 + $0x28] sm:$0xff]
        %v2257 = vld [vmem:[%s371 + $0x30] sm:$0xff]
        %v2258 = vld [vmem:[%s371 + $0x38] sm:$0xff]
        %v2259 = vld [vmem:[%s371 + $0x40] sm:$0xff]
        %v2260 = vld [vmem:[%s371 + $0x48] sm:$0xff]
        %v2261 = vld [vmem:[%s371 + $0x50] sm:$0xff]
        %v2262 = vld [vmem:[%s371 + $0x58] sm:$0xff]
        %v2263 = vld [vmem:[%s371 + $0x60] sm:$0xff]
        %v2264 = vld [vmem:[%s371 + $0x68] sm:$0xff]
        %v2265 = vld [vmem:[%s371 + $0x70] sm:$0xff]
        %v2266 = vld [vmem:[%s371 + $0x78] sm:$0xff]
        %v2267 = vld [vmem:[%s371 + $0x80] sm:$0xff]
        %v2268 = vld [vmem:[%s371 + $0x88] sm:$0xff]
        %v2269 = vld [vmem:[%s371 + $0x90] sm:$0xff]
        %v2270 = vld [vmem:[%s371 + $0x98] sm:$0xff]
        %v2271 = vld [vmem:[%s371 + $0xa0] sm:$0xff]
        %v2272 = vld [vmem:[%s371 + $0xa8] sm:$0xff]
        %v2273 = vld [vmem:[%s371 + $0xb0] sm:$0xff]
        %v2274 = vld [vmem:[%s371 + $0xb8] sm:$0xff]
        %v2275 = vld [vmem:[%s371 + $0xc0] sm:$0xff]
        %v2276 = vld [vmem:[%s371 + $0xc8] sm:$0xff]
        %v2277 = vld [vmem:[%s371 + $0xd0] sm:$0xff]
        %v2278 = vld [vmem:[%s371 + $0xd8] sm:$0xff]
        %v2279 = vld [vmem:[%s371 + $0xe0] sm:$0xff]
        %v2280 = vld [vmem:[%s371 + $0xe8] sm:$0xff]
        %v2281 = vld [vmem:[%s371 + $0xf0] sm:$0xff]
        %v2282 = vld [vmem:[%s371 + $0xf8] sm:$0xff]
        %v2283 = vld [vmem:[%s440] sm:$0xf]
        %v2285 = vlaneseq
        %v2286 = vshrl.u32 %v2285, 7
        %v2287 = vsub.s32 0, %v2286
        %v2288 = vrot.slane %v2283, %v2287
        %v2289 = vlaneseq
        %v2290 = vshrl.u32 %v2289, 7
        %v2291 = vsub.s32 1, %v2290
        %v2292 = vrot.slane %v2283, %v2291
        %v2293 = vlaneseq
        %v2294 = vshrl.u32 %v2293, 7
        %v2295 = vsub.s32 2, %v2294
        %v2296 = vrot.slane %v2283, %v2295
        %v2297 = vlaneseq
        %v2298 = vshrl.u32 %v2297, 7
        %v2299 = vsub.s32 3, %v2298
        %v2300 = vrot.slane %v2283, %v2299
        %v2337 = vunpack.c.l.b16 %v2251
        %v2338 = vunpack.c.h.b16 %v2251
        %v2339 = vunpack.c.l.b16 %v2252
        %v2340 = vunpack.c.h.b16 %v2252
        %v2341 = vunpack.c.l.b16 %v2253
        %v2342 = vunpack.c.h.b16 %v2253
        %v2343 = vunpack.c.l.b16 %v2254
        %v2344 = vunpack.c.h.b16 %v2254
        %v2345 = vunpack.c.l.b16 %v2255
        %v2346 = vunpack.c.h.b16 %v2255
        %v2347 = vunpack.c.l.b16 %v2256
        %v2348 = vunpack.c.h.b16 %v2256
        %v2349 = vunpack.c.l.b16 %v2257
        %v2350 = vunpack.c.h.b16 %v2257
        %v2351 = vunpack.c.l.b16 %v2258
        %v2352 = vunpack.c.h.b16 %v2258
        %v2353 = vunpack.c.l.b16 %v2259
        %v2354 = vunpack.c.h.b16 %v2259
        %v2355 = vunpack.c.l.b16 %v2260
        %v2356 = vunpack.c.h.b16 %v2260
        %v2357 = vunpack.c.l.b16 %v2261
        %v2358 = vunpack.c.h.b16 %v2261
        %v2359 = vunpack.c.l.b16 %v2262
        %v2360 = vunpack.c.h.b16 %v2262
        %v2361 = vunpack.c.l.b16 %v2263
        %v2362 = vunpack.c.h.b16 %v2263
        %v2363 = vunpack.c.l.b16 %v2264
        %v2364 = vunpack.c.h.b16 %v2264
        %v2365 = vunpack.c.l.b16 %v2265
        %v2366 = vunpack.c.h.b16 %v2265
        %v2367 = vunpack.c.l.b16 %v2266
        %v2368 = vunpack.c.h.b16 %v2266
        %v2369 = vunpack.c.l.b16 %v2267
        %v2370 = vunpack.c.h.b16 %v2267
        %v2371 = vunpack.c.l.b16 %v2268
        %v2372 = vunpack.c.h.b16 %v2268
        %v2373 = vunpack.c.l.b16 %v2269
        %v2374 = vunpack.c.h.b16 %v2269
        %v2375 = vunpack.c.l.b16 %v2270
        %v2376 = vunpack.c.h.b16 %v2270
        %v2377 = vunpack.c.l.b16 %v2271
        %v2378 = vunpack.c.h.b16 %v2271
        %v2379 = vunpack.c.l.b16 %v2272
        %v2380 = vunpack.c.h.b16 %v2272
        %v2381 = vunpack.c.l.b16 %v2273
        %v2382 = vunpack.c.h.b16 %v2273
        %v2383 = vunpack.c.l.b16 %v2274
        %v2384 = vunpack.c.h.b16 %v2274
        %v2385 = vunpack.c.l.b16 %v2275
        %v2386 = vunpack.c.h.b16 %v2275
        %v2387 = vunpack.c.l.b16 %v2276
        %v2388 = vunpack.c.h.b16 %v2276
        %v2389 = vunpack.c.l.b16 %v2277
        %v2390 = vunpack.c.h.b16 %v2277
        %v2391 = vunpack.c.l.b16 %v2278
        %v2392 = vunpack.c.h.b16 %v2278
        %v2393 = vunpack.c.l.b16 %v2279
        %v2394 = vunpack.c.h.b16 %v2279
        %v2395 = vunpack.c.l.b16 %v2280
        %v2396 = vunpack.c.h.b16 %v2280
        %v2397 = vunpack.c.l.b16 %v2281
        %v2398 = vunpack.c.h.b16 %v2281
        %v2399 = vunpack.c.l.b16 %v2282
        %v2400 = vunpack.c.h.b16 %v2282
        %v2401 = vpack.c.b16 %v2341, %v2337
        %v2402 = vpack.c.b16 %v2342, %v2338
        %v2403 = vpack.c.b16 %v2343, %v2339
        %v2404 = vpack.c.b16 %v2344, %v2340
        %v2405 = vpack.c.b16 %v2349, %v2345
        %v2406 = vpack.c.b16 %v2350, %v2346
        %v2407 = vpack.c.b16 %v2351, %v2347
        %v2408 = vpack.c.b16 %v2352, %v2348
        %v2409 = vpack.c.b16 %v2357, %v2353
        %v2410 = vpack.c.b16 %v2358, %v2354
        %v2411 = vpack.c.b16 %v2359, %v2355
        %v2412 = vpack.c.b16 %v2360, %v2356
        %v2413 = vpack.c.b16 %v2365, %v2361
        %v2414 = vpack.c.b16 %v2366, %v2362
        %v2415 = vpack.c.b16 %v2367, %v2363
        %v2416 = vpack.c.b16 %v2368, %v2364
        %v2417 = vpack.c.b16 %v2373, %v2369
        %v2418 = vpack.c.b16 %v2374, %v2370
        %v2419 = vpack.c.b16 %v2375, %v2371
        %v2420 = vpack.c.b16 %v2376, %v2372
        %v2421 = vpack.c.b16 %v2381, %v2377
        %v2422 = vpack.c.b16 %v2382, %v2378
        %v2423 = vpack.c.b16 %v2383, %v2379
        %v2424 = vpack.c.b16 %v2384, %v2380
        %v2425 = vpack.c.b16 %v2389, %v2385
        %v2426 = vpack.c.b16 %v2390, %v2386
        %v2427 = vpack.c.b16 %v2391, %v2387
        %v2428 = vpack.c.b16 %v2392, %v2388
        %v2429 = vpack.c.b16 %v2397, %v2393
        %v2430 = vpack.c.b16 %v2398, %v2394
        %v2431 = vpack.c.b16 %v2399, %v2395
        %v2432 = vpack.c.b16 %v2400, %v2396
        %2465 = vmatprep.subr.bf16.mxu0 %v2402
        %2466 = vmatpush1.bf16.msra.mxu0 %v2401
        %2467 = vmatprep.subr.bf16.mxu0 %v2406
        %2468 = vmatpush1.bf16.msra.mxu0 %v2405
        %2469 = vmatprep.subr.bf16.mxu0 %v2410
        %2470 = vmatpush1.bf16.msra.mxu0 %v2409
        %2471 = vmatprep.subr.bf16.mxu0 %v2414
        %2472 = vmatpush1.bf16.msra.mxu0 %v2413
        %2473 = vmatprep.subr.bf16.mxu0 %v2418
        %2474 = vmatpush1.bf16.msra.mxu0 %v2417
        %2475 = vmatprep.subr.bf16.mxu0 %v2422
        %2476 = vmatpush1.bf16.msra.mxu0 %v2421
        %2477 = vmatprep.subr.bf16.mxu0 %v2426
        %2478 = vmatpush1.bf16.msra.mxu0 %v2425
        %2479 = vmatprep.subr.bf16.mxu0 %v2430
        %2480 = vmatpush1.bf16.msra.mxu0 %v2429
        %2481 = vmatprep.subr.bf16.mxu0 0
        %2482 = vmatpush1.bf16.msra.mxu0 0
        %2483 = vmatprep.subr.bf16.mxu0 0
        %2484 = vmatpush1.bf16.msra.mxu0 0
        %2485 = vmatprep.subr.bf16.mxu0 0
        %2486 = vmatpush1.bf16.msra.mxu0 0
        %2487 = vmatprep.subr.bf16.mxu0 0
        %2488 = vmatpush1.bf16.msra.mxu0 0
        %2489 = vmatprep.subr.bf16.mxu0 0
        %2490 = vmatpush1.bf16.msra.mxu0 0
        %2491 = vmatprep.subr.bf16.mxu0 0
        %2492 = vmatpush1.bf16.msra.mxu0 0
        %2493 = vmatprep.subr.bf16.mxu0 0
        %2494 = vmatpush1.bf16.msra.mxu0 0
        %2495 = vmatprep.subr.bf16.mxu0 0
        %2496 = vmatpush1.bf16.msra.mxu0 0
        %2497 = vmatprep.mubr.bf16.mxu0 0
        %2498 = vmatmul.mubr.bf16.gmra.mrb[0].mxu0 %v2250
        %v2499 = vpop.f32.mrb[0].mxu0
        %v2500 = vadd.f32 %v2288, %v2499
        %v2501 = vpop.f32.mrb[0].mxu0
        %v2502 = vadd.f32 %v2292, %v2501
        %v2503 = vpop.f32.mrb[0].mxu0
        %v2504 = vadd.f32 %v2288, %v2503
        %v2505 = vpop.f32.mrb[0].mxu0
        %v2506 = vadd.f32 %v2292, %v2505
        %2507 = vdwg.mxu0
        %2508 = vmatprep.subr.bf16.mxu0 %v2404
        %2509 = vmatpush1.bf16.msra.mxu0 %v2403
        %2510 = vmatprep.subr.bf16.mxu0 %v2408
        %2511 = vmatpush1.bf16.msra.mxu0 %v2407
        %2512 = vmatprep.subr.bf16.mxu0 %v2412
        %2513 = vmatpush1.bf16.msra.mxu0 %v2411
        %2514 = vmatprep.subr.bf16.mxu0 %v2416
        %2515 = vmatpush1.bf16.msra.mxu0 %v2415
        %2516 = vmatprep.subr.bf16.mxu0 %v2420
        %2517 = vmatpush1.bf16.msra.mxu0 %v2419
        %2518 = vmatprep.subr.bf16.mxu0 %v2424
        %2519 = vmatpush1.bf16.msra.mxu0 %v2423
        %2520 = vmatprep.subr.bf16.mxu0 %v2428
        %2521 = vmatpush1.bf16.msra.mxu0 %v2427
        %2522 = vmatprep.subr.bf16.mxu0 %v2432
        %2523 = vmatpush1.bf16.msra.mxu0 %v2431
        %2524 = vmatprep.subr.bf16.mxu0 0
        %2525 = vmatpush1.bf16.msra.mxu0 0
        %2526 = vmatprep.subr.bf16.mxu0 0
        %2527 = vmatpush1.bf16.msra.mxu0 0
        %2528 = vmatprep.subr.bf16.mxu0 0
        %2529 = vmatpush1.bf16.msra.mxu0 0
        %2530 = vmatprep.subr.bf16.mxu0 0
        %2531 = vmatpush1.bf16.msra.mxu0 0
        %2532 = vmatprep.subr.bf16.mxu0 0
        %2533 = vmatpush1.bf16.msra.mxu0 0
        %2534 = vmatprep.subr.bf16.mxu0 0
        %2535 = vmatpush1.bf16.msra.mxu0 0
        %2536 = vmatprep.subr.bf16.mxu0 0
        %2537 = vmatpush1.bf16.msra.mxu0 0
        %2538 = vmatprep.subr.bf16.mxu0 0
        %2539 = vmatpush1.bf16.msra.mxu0 0
        %2540 = vmatprep.mubr.bf16.mxu0 0
        %2541 = vmatmul.mubr.bf16.gmra.mrb[0].mxu0 %v2250
        %v2542 = vpop.f32.mrb[0].mxu0
        %v2543 = vadd.f32 %v2296, %v2542
        %v2544 = vpop.f32.mrb[0].mxu0
        %v2545 = vadd.f32 %v2300, %v2544
        %v2546 = vpop.f32.mrb[0].mxu0
        %v2547 = vadd.f32 %v2296, %v2546
        %v2548 = vpop.f32.mrb[0].mxu0
        %v2549 = vadd.f32 %v2300, %v2548
        %2550 = vdwg.mxu0
        %v2551 = vmul.f32 %v2500, 1.702
        %v2552 = vmul.f32 %v2502, 1.702
        %v2553 = vmul.f32 %v2543, 1.702
        %v2554 = vmul.f32 %v2545, 1.702
        %v2555 = vmul.f32 %v2504, 1.702
        %v2556 = vmul.f32 %v2506, 1.702
        %v2557 = vmul.f32 %v2547, 1.702
        %v2558 = vmul.f32 %v2549, 1.702
        %v2559 = vxor.u32 %v2551, 2147483648
        %v2560 = vxor.u32 %v2552, 2147483648
        %v2561 = vxor.u32 %v2553, 2147483648
        %v2562 = vxor.u32 %v2554, 2147483648
        %v2563 = vxor.u32 %v2555, 2147483648
        %v2564 = vxor.u32 %v2556, 2147483648
        %v2565 = vxor.u32 %v2557, 2147483648
        %v2566 = vxor.u32 %v2558, 2147483648
        %v2567 = vmul.f32 %v2559, 1.442695
        %v2568 = vpow.pop %v2567
        %v2569 = vmul.f32 %v2560, 1.442695
        %v2570 = vpow.pop %v2569
        %v2571 = vmul.f32 %v2561, 1.442695
        %v2572 = vpow.pop %v2571
        %v2573 = vmul.f32 %v2562, 1.442695
        %v2574 = vpow.pop %v2573
        %v2575 = vmul.f32 %v2563, 1.442695
        %v2576 = vpow.pop %v2575
        %v2577 = vmul.f32 %v2564, 1.442695
        %v2578 = vpow.pop %v2577
        %v2579 = vmul.f32 %v2565, 1.442695
        %v2580 = vpow.pop %v2579
        %v2581 = vmul.f32 %v2566, 1.442695
        %v2582 = vpow.pop %v2581
        %v2583 = vadd.f32 %v2568, 1.0
        %v2584 = vadd.f32 %v2570, 1.0
        %v2585 = vadd.f32 %v2572, 1.0
        %v2586 = vadd.f32 %v2574, 1.0
        %v2587 = vadd.f32 %v2576, 1.0
        %v2588 = vadd.f32 %v2578, 1.0
        %v2589 = vadd.f32 %v2580, 1.0
        %v2590 = vadd.f32 %v2582, 1.0
        %v2591 = vrcp.pop %v2583
        %v2592 = vmul.f32 1.0, %v2591
        %v2593 = vrcp.pop %v2584
        %v2594 = vmul.f32 1.0, %v2593
        %v2595 = vrcp.pop %v2585
        %v2596 = vmul.f32 1.0, %v2595
        %v2597 = vrcp.pop %v2586
        %v2598 = vmul.f32 1.0, %v2597
        %v2599 = vrcp.pop %v2587
        %v2600 = vmul.f32 1.0, %v2599
        %v2601 = vrcp.pop %v2588
        %v2602 = vmul.f32 1.0, %v2601
        %v2603 = vrcp.pop %v2589
        %v2604 = vmul.f32 1.0, %v2603
        %v2605 = vrcp.pop %v2590
        %v2606 = vmul.f32 1.0, %v2605
        %v2607 = vmul.f32 %v2500, %v2592
        %v2608 = vmul.f32 %v2502, %v2594
        %v2609 = vmul.f32 %v2543, %v2596
        %v2610 = vmul.f32 %v2545, %v2598
        %v2611 = vmul.f32 %v2504, %v2600
        %v2612 = vmul.f32 %v2506, %v2602
        %v2613 = vmul.f32 %v2547, %v2604
        %v2614 = vmul.f32 %v2549, %v2606
        %v2615 = vpack.c.bf16 %v2611, %v2607
        %v2616 = vpack.c.bf16 %v2612, %v2608
        %v2617 = vpack.c.bf16 %v2613, %v2609
        %v2618 = vpack.c.bf16 %v2614, %v2610
        %v2619 = vld [vmem:[%s380] sm:$0xf]
        %v2620 = vld [vmem:[%s380 + $0x4] sm:$0xf]
        %v2621 = vld [vmem:[%s380 + $0x8] sm:$0xf]
        %v2622 = vld [vmem:[%s380 + $0xc] sm:$0xf]
        %v2623 = vld [vmem:[%s380 + $0x10] sm:$0xf]
        %v2624 = vld [vmem:[%s380 + $0x14] sm:$0xf]
        %v2625 = vld [vmem:[%s380 + $0x18] sm:$0xf]
        %v2626 = vld [vmem:[%s380 + $0x1c] sm:$0xf]
        %v2627 = vld [vmem:[%s380 + $0x20] sm:$0xf]
        %v2628 = vld [vmem:[%s380 + $0x24] sm:$0xf]
        %v2629 = vld [vmem:[%s380 + $0x28] sm:$0xf]
        %v2630 = vld [vmem:[%s380 + $0x2c] sm:$0xf]
        %v2631 = vld [vmem:[%s380 + $0x30] sm:$0xf]
        %v2632 = vld [vmem:[%s380 + $0x34] sm:$0xf]
        %v2633 = vld [vmem:[%s380 + $0x38] sm:$0xf]
        %v2634 = vld [vmem:[%s380 + $0x3c] sm:$0xf]
        %v2635 = vld [vmem:[%s380 + $0x40] sm:$0xf]
        %v2636 = vld [vmem:[%s380 + $0x44] sm:$0xf]
        %v2637 = vld [vmem:[%s380 + $0x48] sm:$0xf]
        %v2638 = vld [vmem:[%s380 + $0x4c] sm:$0xf]
        %v2639 = vld [vmem:[%s380 + $0x50] sm:$0xf]
        %v2640 = vld [vmem:[%s380 + $0x54] sm:$0xf]
        %v2641 = vld [vmem:[%s380 + $0x58] sm:$0xf]
        %v2642 = vld [vmem:[%s380 + $0x5c] sm:$0xf]
        %v2643 = vld [vmem:[%s380 + $0x60] sm:$0xf]
        %v2644 = vld [vmem:[%s380 + $0x64] sm:$0xf]
        %v2645 = vld [vmem:[%s380 + $0x68] sm:$0xf]
        %v2646 = vld [vmem:[%s380 + $0x6c] sm:$0xf]
        %v2647 = vld [vmem:[%s380 + $0x70] sm:$0xf]
        %v2648 = vld [vmem:[%s380 + $0x74] sm:$0xf]
        %v2649 = vld [vmem:[%s380 + $0x78] sm:$0xf]
        %v2650 = vld [vmem:[%s380 + $0x7c] sm:$0xf]
        %v2651 = vld [vmem:[%s380 + $0x80] sm:$0xf]
        %v2652 = vld [vmem:[%s380 + $0x84] sm:$0xf]
        %v2653 = vld [vmem:[%s380 + $0x88] sm:$0xf]
        %v2654 = vld [vmem:[%s380 + $0x8c] sm:$0xf]
        %v2655 = vld [vmem:[%s380 + $0x90] sm:$0xf]
        %v2656 = vld [vmem:[%s380 + $0x94] sm:$0xf]
        %v2657 = vld [vmem:[%s380 + $0x98] sm:$0xf]
        %v2658 = vld [vmem:[%s380 + $0x9c] sm:$0xf]
        %v2659 = vld [vmem:[%s380 + $0xa0] sm:$0xf]
        %v2660 = vld [vmem:[%s380 + $0xa4] sm:$0xf]
        %v2661 = vld [vmem:[%s380 + $0xa8] sm:$0xf]
        %v2662 = vld [vmem:[%s380 + $0xac] sm:$0xf]
        %v2663 = vld [vmem:[%s380 + $0xb0] sm:$0xf]
        %v2664 = vld [vmem:[%s380 + $0xb4] sm:$0xf]
        %v2665 = vld [vmem:[%s380 + $0xb8] sm:$0xf]
        %v2666 = vld [vmem:[%s380 + $0xbc] sm:$0xf]
        %v2667 = vld [vmem:[%s380 + $0xc0] sm:$0xf]
        %v2668 = vld [vmem:[%s380 + $0xc4] sm:$0xf]
        %v2669 = vld [vmem:[%s380 + $0xc8] sm:$0xf]
        %v2670 = vld [vmem:[%s380 + $0xcc] sm:$0xf]
        %v2671 = vld [vmem:[%s380 + $0xd0] sm:$0xf]
        %v2672 = vld [vmem:[%s380 + $0xd4] sm:$0xf]
        %v2673 = vld [vmem:[%s380 + $0xd8] sm:$0xf]
        %v2674 = vld [vmem:[%s380 + $0xdc] sm:$0xf]
        %v2675 = vld [vmem:[%s380 + $0xe0] sm:$0xf]
        %v2676 = vld [vmem:[%s380 + $0xe4] sm:$0xf]
        %v2677 = vld [vmem:[%s380 + $0xe8] sm:$0xf]
        %v2678 = vld [vmem:[%s380 + $0xec] sm:$0xf]
        %v2679 = vld [vmem:[%s380 + $0xf0] sm:$0xf]
        %v2680 = vld [vmem:[%s380 + $0xf4] sm:$0xf]
        %v2681 = vld [vmem:[%s380 + $0xf8] sm:$0xf]
        %v2682 = vld [vmem:[%s380 + $0xfc] sm:$0xf]
        %v2683 = vlaneseq
        %v2684 = vshrl.u32 %v2683, 7
        %v2685 = vsub.s32 5, %v2684
        %v2686 = vrot.slane %v457, %v2685
        %v2751 = vunpack.c.l.b16 %v2619
        %v2752 = vunpack.c.l.b16 %v2620
        %v2753 = vunpack.c.l.b16 %v2621
        %v2754 = vunpack.c.l.b16 %v2622
        %v2755 = vunpack.c.l.b16 %v2623
        %v2756 = vunpack.c.l.b16 %v2624
        %v2757 = vunpack.c.l.b16 %v2625
        %v2758 = vunpack.c.l.b16 %v2626
        %v2759 = vunpack.c.l.b16 %v2627
        %v2760 = vunpack.c.l.b16 %v2628
        %v2761 = vunpack.c.l.b16 %v2629
        %v2762 = vunpack.c.l.b16 %v2630
        %v2763 = vunpack.c.l.b16 %v2631
        %v2764 = vunpack.c.l.b16 %v2632
        %v2765 = vunpack.c.l.b16 %v2633
        %v2766 = vunpack.c.l.b16 %v2634
        %v2767 = vunpack.c.l.b16 %v2635
        %v2768 = vunpack.c.l.b16 %v2636
        %v2769 = vunpack.c.l.b16 %v2637
        %v2770 = vunpack.c.l.b16 %v2638
        %v2771 = vunpack.c.l.b16 %v2639
        %v2772 = vunpack.c.l.b16 %v2640
        %v2773 = vunpack.c.l.b16 %v2641
        %v2774 = vunpack.c.l.b16 %v2642
        %v2775 = vunpack.c.l.b16 %v2643
        %v2776 = vunpack.c.l.b16 %v2644
        %v2777 = vunpack.c.l.b16 %v2645
        %v2778 = vunpack.c.l.b16 %v2646
        %v2779 = vunpack.c.l.b16 %v2647
        %v2780 = vunpack.c.l.b16 %v2648
        %v2781 = vunpack.c.l.b16 %v2649
        %v2782 = vunpack.c.l.b16 %v2650
        %v2783 = vunpack.c.l.b16 %v2651
        %v2784 = vunpack.c.l.b16 %v2652
        %v2785 = vunpack.c.l.b16 %v2653
        %v2786 = vunpack.c.l.b16 %v2654
        %v2787 = vunpack.c.l.b16 %v2655
        %v2788 = vunpack.c.l.b16 %v2656
        %v2789 = vunpack.c.l.b16 %v2657
        %v2790 = vunpack.c.l.b16 %v2658
        %v2791 = vunpack.c.l.b16 %v2659
        %v2792 = vunpack.c.l.b16 %v2660
        %v2793 = vunpack.c.l.b16 %v2661
        %v2794 = vunpack.c.l.b16 %v2662
        %v2795 = vunpack.c.l.b16 %v2663
        %v2796 = vunpack.c.l.b16 %v2664
        %v2797 = vunpack.c.l.b16 %v2665
        %v2798 = vunpack.c.l.b16 %v2666
        %v2799 = vunpack.c.l.b16 %v2667
        %v2800 = vunpack.c.l.b16 %v2668
        %v2801 = vunpack.c.l.b16 %v2669
        %v2802 = vunpack.c.l.b16 %v2670
        %v2803 = vunpack.c.l.b16 %v2671
        %v2804 = vunpack.c.l.b16 %v2672
        %v2805 = vunpack.c.l.b16 %v2673
        %v2806 = vunpack.c.l.b16 %v2674
        %v2807 = vunpack.c.l.b16 %v2675
        %v2808 = vunpack.c.l.b16 %v2676
        %v2809 = vunpack.c.l.b16 %v2677
        %v2810 = vunpack.c.l.b16 %v2678
        %v2811 = vunpack.c.l.b16 %v2679
        %v2812 = vunpack.c.l.b16 %v2680
        %v2813 = vunpack.c.l.b16 %v2681
        %v2814 = vunpack.c.l.b16 %v2682
        %v2815 = vpack.c.b16 %v2752, %v2751
        %v2816 = vpack.c.b16 %v2754, %v2753
        %v2817 = vpack.c.b16 %v2756, %v2755
        %v2818 = vpack.c.b16 %v2758, %v2757
        %v2819 = vpack.c.b16 %v2760, %v2759
        %v2820 = vpack.c.b16 %v2762, %v2761
        %v2821 = vpack.c.b16 %v2764, %v2763
        %v2822 = vpack.c.b16 %v2766, %v2765
        %v2823 = vpack.c.b16 %v2768, %v2767
        %v2824 = vpack.c.b16 %v2770, %v2769
        %v2825 = vpack.c.b16 %v2772, %v2771
        %v2826 = vpack.c.b16 %v2774, %v2773
        %v2827 = vpack.c.b16 %v2776, %v2775
        %v2828 = vpack.c.b16 %v2778, %v2777
        %v2829 = vpack.c.b16 %v2780, %v2779
        %v2830 = vpack.c.b16 %v2782, %v2781
        %v2831 = vpack.c.b16 %v2784, %v2783
        %v2832 = vpack.c.b16 %v2786, %v2785
        %v2833 = vpack.c.b16 %v2788, %v2787
        %v2834 = vpack.c.b16 %v2790, %v2789
        %v2835 = vpack.c.b16 %v2792, %v2791
        %v2836 = vpack.c.b16 %v2794, %v2793
        %v2837 = vpack.c.b16 %v2796, %v2795
        %v2838 = vpack.c.b16 %v2798, %v2797
        %v2839 = vpack.c.b16 %v2800, %v2799
        %v2840 = vpack.c.b16 %v2802, %v2801
        %v2841 = vpack.c.b16 %v2804, %v2803
        %v2842 = vpack.c.b16 %v2806, %v2805
        %v2843 = vpack.c.b16 %v2808, %v2807
        %v2844 = vpack.c.b16 %v2810, %v2809
        %v2845 = vpack.c.b16 %v2812, %v2811
        %v2846 = vpack.c.b16 %v2814, %v2813
        %2879 = vmatprep.subr.bf16.mxu0 0
        %2880 = vmatpush1.bf16.msra.mxu0 %v2815
        %2881 = vmatprep.subr.bf16.mxu0 0
        %2882 = vmatpush1.bf16.msra.mxu0 %v2816
        %2883 = vmatprep.subr.bf16.mxu0 0
        %2884 = vmatpush1.bf16.msra.mxu0 %v2817
        %2885 = vmatprep.subr.bf16.mxu0 0
        %2886 = vmatpush1.bf16.msra.mxu0 %v2818
        %2887 = vmatprep.subr.bf16.mxu0 0
        %2888 = vmatpush1.bf16.msra.mxu0 %v2819
        %2889 = vmatprep.subr.bf16.mxu0 0
        %2890 = vmatpush1.bf16.msra.mxu0 %v2820
        %2891 = vmatprep.subr.bf16.mxu0 0
        %2892 = vmatpush1.bf16.msra.mxu0 %v2821
        %2893 = vmatprep.subr.bf16.mxu0 0
        %2894 = vmatpush1.bf16.msra.mxu0 %v2822
        %2895 = vmatprep.subr.bf16.mxu0 0
        %2896 = vmatpush1.bf16.msra.mxu0 %v2823
        %2897 = vmatprep.subr.bf16.mxu0 0
        %2898 = vmatpush1.bf16.msra.mxu0 %v2824
        %2899 = vmatprep.subr.bf16.mxu0 0
        %2900 = vmatpush1.bf16.msra.mxu0 %v2825
        %2901 = vmatprep.subr.bf16.mxu0 0
        %2902 = vmatpush1.bf16.msra.mxu0 %v2826
        %2903 = vmatprep.subr.bf16.mxu0 0
        %2904 = vmatpush1.bf16.msra.mxu0 %v2827
        %2905 = vmatprep.subr.bf16.mxu0 0
        %2906 = vmatpush1.bf16.msra.mxu0 %v2828
        %2907 = vmatprep.subr.bf16.mxu0 0
        %2908 = vmatpush1.bf16.msra.mxu0 %v2829
        %2909 = vmatprep.subr.bf16.mxu0 0
        %2910 = vmatpush1.bf16.msra.mxu0 %v2830
        %2911 = vmatprep.mubr.bf16.mxu0 %v2616
        %2912 = vmatmul.mubr.bf16.gmra.mrb[0].mxu0 %v2615
        %v2913 = vpop.f32.mrb[0].mxu0
        %v2914 = vadd.f32 %v2686, %v2913
        %v2915 = vpop.f32.mrb[0].mxu0
        %v2916 = vpop.f32.mrb[0].mxu0
        %v2917 = vadd.f32 %v2686, %v2916
        %v2918 = vpop.f32.mrb[0].mxu0
        %2919 = vdwg.mxu0
        %2920 = vmatprep.subr.bf16.mxu0 0
        %2921 = vmatpush1.bf16.msra.mxu0 %v2831
        %2922 = vmatprep.subr.bf16.mxu0 0
        %2923 = vmatpush1.bf16.msra.mxu0 %v2832
        %2924 = vmatprep.subr.bf16.mxu0 0
        %2925 = vmatpush1.bf16.msra.mxu0 %v2833
        %2926 = vmatprep.subr.bf16.mxu0 0
        %2927 = vmatpush1.bf16.msra.mxu0 %v2834
        %2928 = vmatprep.subr.bf16.mxu0 0
        %2929 = vmatpush1.bf16.msra.mxu0 %v2835
        %2930 = vmatprep.subr.bf16.mxu0 0
        %2931 = vmatpush1.bf16.msra.mxu0 %v2836
        %2932 = vmatprep.subr.bf16.mxu0 0
        %2933 = vmatpush1.bf16.msra.mxu0 %v2837
        %2934 = vmatprep.subr.bf16.mxu0 0
        %2935 = vmatpush1.bf16.msra.mxu0 %v2838
        %2936 = vmatprep.subr.bf16.mxu0 0
        %2937 = vmatpush1.bf16.msra.mxu0 %v2839
        %2938 = vmatprep.subr.bf16.mxu0 0
        %2939 = vmatpush1.bf16.msra.mxu0 %v2840
        %2940 = vmatprep.subr.bf16.mxu0 0
        %2941 = vmatpush1.bf16.msra.mxu0 %v2841
        %2942 = vmatprep.subr.bf16.mxu0 0
        %2943 = vmatpush1.bf16.msra.mxu0 %v2842
        %2944 = vmatprep.subr.bf16.mxu0 0
        %2945 = vmatpush1.bf16.msra.mxu0 %v2843
        %2946 = vmatprep.subr.bf16.mxu0 0
        %2947 = vmatpush1.bf16.msra.mxu0 %v2844
        %2948 = vmatprep.subr.bf16.mxu0 0
        %2949 = vmatpush1.bf16.msra.mxu0 %v2845
        %2950 = vmatprep.subr.bf16.mxu0 0
        %2951 = vmatpush1.bf16.msra.mxu0 %v2846
        %2952 = vmatprep.mubr.bf16.mxu0 %v2618
        %2953 = vmatmul.mubr.bf16.gmra.mrb[0].mxu0 %v2617
        %v2954 = vpop.f32.mrb[0].mxu0
        %v2955 = vadd.f32 %v2914, %v2954
        %v2956 = vpop.f32.mrb[0].mxu0
        %v2957 = vpop.f32.mrb[0].mxu0
        %v2958 = vadd.f32 %v2917, %v2957
        %v2959 = vpop.f32.mrb[0].mxu0
        %2960 = vdwg.mxu0
        %v2961 = vadd.f32 %v2214, %v2955
        %v2962 = vadd.f32 %v2215, %v2958
        %p2963 = scmp.lt.s32.totalorder %s26, 1
        // Predicated region
        $region69: #{frozen_clip_text_embedder.1} parent=51 // pred_check
          %p2964 = pneg %p2963
        $region70: #{frozen_clip_text_embedder.1} parent=51 // pred_check_branch
          %2966 = sbr.rel (%p2964) target = $region72
        $region71: #{frozen_clip_text_embedder.1} parent=51 // pred_region
          %2967 = vst [vmem:[#allocation8] sm:$0xff] %v2961
          %2968 = vst [vmem:[#allocation8 + $0x8] sm:$0xff] %v2962
        $region72: #{frozen_clip_text_embedder.1} parent=51 // pred_fallthru
          _
        %p2969 = scmp.eq.s32.totalorder %s26, 1
        // Predicated region
        $region73: #{frozen_clip_text_embedder.1} parent=51 // pred_check
          %p2970 = pneg %p2969
        $region74: #{frozen_clip_text_embedder.1} parent=51 // pred_check_branch
          %2972 = sbr.rel (%p2970) target = $region76
        $region75: #{frozen_clip_text_embedder.1} parent=51 // pred_region
          %2973 = vadd.xlane.f32.xlu0 %v2961
          %v2974 = vpop.xlane.xlu0 %2973
          %2975 = vadd.xlane.f32.xlu0 %v2962
          %v2976 = vpop.xlane.xlu0 %2975
          %v2977 = vmul.f32 %v2974, %v463
          %v2978 = vmul.f32 %v2976, %v463
          %v2979 = vsub.f32 %v2961, %v2977
          %v2980 = vsub.f32 %v2962, %v2978
          %v2981 = vmul.f32 %v2979, %v2979
          %v2982 = vmul.f32 %v2980, %v2980
          %2983 = vadd.xlane.f32.xlu0 %v2981
          %v2984 = vpop.xlane.xlu0 %2983
          %2985 = vadd.xlane.f32.xlu0 %v2982
          %v2986 = vpop.xlane.xlu0 %2985
          %v2987 = vmul.f32 %v2984, %v463
          %v2988 = vmul.f32 %v2986, %v463
          %v2989 = vadd.f32 %v2987, 1e-05
          %v2990 = vadd.f32 %v2988, 1e-05
          %v2991 = vrsqrt.pop %v2989
          %v2992 = vrsqrt.pop %v2990
          %v2993 = vmul.f32 %v2979, %v2991
          %v2994 = vmul.f32 %v2980, %v2992
          %v2995 = vlaneseq
          %v2996 = vshrl.u32 %v2995, 7
          %v2997 = vsub.s32 1, %v2996
          %v2998 = vrot.slane %v458, %v2997
          %v2999 = vmul.f32 %v2993, %v2998
          %v3000 = vmul.f32 %v2994, %v2998
          %v3001 = vlaneseq
          %v3002 = vshrl.u32 %v3001, 7
          %v3003 = vsub.s32 2, %v3002
          %v3004 = vrot.slane %v458, %v3003
          %v3005 = vadd.f32 %v2999, %v3004
          %v3006 = vadd.f32 %v3000, %v3004
          %3007 = vst [vmem:[#allocation8] sm:$0xff] %v3005
          %3008 = vst [vmem:[#allocation8 + $0x8] sm:$0xff] %v3006
        $region76: #{frozen_clip_text_embedder.1} parent=51 // pred_fallthru
          _
        // Predicated region
        $region77: #{frozen_clip_text_embedder.1} parent=51 // pred_check
          %p3009 = pneg %p237
        $region78: #{frozen_clip_text_embedder.1} parent=51 // pred_check_branch
          %3011 = sbr.rel (%p3009) target = $region80
        $region79: #{frozen_clip_text_embedder.1} parent=51 // pred_region
          %s3013 = ssub.s32 256, 256
          %3014 = vsyncadd [#allocation4], %s3013
          %s3015 = sshll.u32 [#allocation8], 4
          %s3016 = int_to_ptr.vmem [resolvable:$true] %s3015
          %3021 = dma.vmem_to_hbm [thread:$0]  %s3016, 256, %s8, [#allocation4], 128, 128, 8
        $region80: #{frozen_clip_text_embedder.1} parent=51 // pred_fallthru
          _
        // Predicated region
        $region81: #{frozen_clip_text_embedder.1} parent=51 // pred_check
          %p3022 = pneg %p237
        $region82: #{frozen_clip_text_embedder.1} parent=51 // pred_check_branch
          %3024 = sbr.rel (%p3022) target = $region84
        $region83: #{frozen_clip_text_embedder.1} parent=51 // pred_region
          %3025 = dma.done [#allocation4], 256
        $region84: #{frozen_clip_text_embedder.1} parent=51 // pred_fallthru
          _
      $region52: #{frozen_clip_text_embedder.1} parent=5 // pred_fallthru
        _
      %p3026 = scmp.le.s32.totalorder 2, %s21
      // Predicated region
      $region85: #{frozen_clip_text_embedder.1} parent=5 // pred_check
        %p3027 = pneg %p3026
      $region86: #{frozen_clip_text_embedder.1} parent=5 // pred_check_branch
        %3029 = sbr.rel (%p3027) target = $region88
      $region87: #{frozen_clip_text_embedder.1} parent=5 // pred_region
        %s3030 = ssub.s32 %s21, 2
      $region88: #{frozen_clip_text_embedder.1} parent=5 // pred_fallthru
        _
    $region6: #{frozen_clip_text_embedder.1} parent=1 // loop_footer
      %s25 = sadd.s32 1, %s21
    $region7: #{frozen_clip_text_embedder.1} parent=1 // loop_footer_branch
      %20 = sbr.rel target = $region3
    $region8: #{frozen_clip_text_embedder.1} parent=1 // loop_exit
      _
    %3031 = vsyncpa [#allocation3], 1
    %s3032 = scalar_lea.sflag [#allocation3], 1
    %3033 = vsyncpa %s3032, 1
    %3034 = vsyncpa [#allocation6], 1
    %s3035 = scalar_lea.sflag [#allocation6], 1
    %3036 = vsyncpa %s3035, 1
    %3037 = vsyncpa [#allocation4], 1
    %s3038 = scalar_lea.sflag [#allocation4], 1
    %3039 = vsyncpa %s3038, 1

</llo_original>
